<compile_context>
chip_gen: v6e
topology: v6e:2x2x1
jax: 0.10.0
libtpu: 0.0.40
codegen_flags: <defaults>
</compile_context>

<pallas_src>
import functools

import jax
import jax.numpy as jnp
from jax import lax
from jax.experimental import pallas as pl
from jax.experimental.pallas import tpu as pltpu

# Scoped-VMEM budget: <= ~48 MiB so full-layer bf16 weights (~14 MiB for real CLIP-L,
# double-buffered) fit on v7x's 64 MiB while staying generous on v5e/v6e (128 MiB).
_VMEM_LIMIT = 48 * 1024 * 1024


def _pick_row_tile(m):
    """Row tile: multiple of 8 that divides m and yields >= 2 grid steps, else full m."""
    for t in (512, 256, 128, 64, 32, 16, 8):
        if m % t == 0 and m // t >= 2:
            return t
    return m


# ----------------------------- Pallas kernels ------------------------------

def _clip_layer_kernel(h_ref, wqkv_ref, bqkv_ref, wo_ref, bo_ref,
                       wfc1_ref, bfc1_ref, wfc2_ref, bfc2_ref, o_ref,
                       *, n_heads, head_dim):
    """One full CLIP encoder layer for one batch element ([T, D] rows).

    LN gamma/beta and the attention scale are pre-folded into wqkv/bqkv and
    wfc1/bfc1, so LN here is only (x - mu) * rsqrt(var).
    """
    t = h_ref.shape[1]
    d = n_heads * head_dim
    h = h_ref[0].astype(jnp.float32)                       # [T, D] residual, f32 in VMEM

    # ---- LN1 (folded) + fused QKV projection ----
    mu = jnp.mean(h, axis=-1, keepdims=True)
    xc = h - mu
    var = jnp.mean(xc * xc, axis=-1, keepdims=True)
    xn = (xc * lax.rsqrt(var + 1e-5)).astype(jnp.bfloat16)
    qkv = jnp.dot(xn, wqkv_ref[...],
                  preferred_element_type=jnp.float32) + bqkv_ref[...]   # [T, 3D] f32
    qkv16 = qkv.astype(jnp.bfloat16)                       # single cast, sliced per head

    # ---- multi-head causal attention with the out-projection folded in ----
    row = lax.broadcasted_iota(jnp.int32, (t, t), 0)
    col = lax.broadcasted_iota(jnp.int32, (t, t), 1)
    causal = col <= row                                    # one mask, reused by all heads

    acc = bo_ref[...] + h                                  # out-proj bias + residual, f32
    for hh in range(n_heads):                              # static unroll, static slices
        q = qkv16[:, hh * head_dim:(hh + 1) * head_dim]
        k = qkv16[:, d + hh * head_dim: d + (hh + 1) * head_dim]
        v = qkv16[:, 2 * d + hh * head_dim: 2 * d + (hh + 1) * head_dim]
        # contract on last axes -> no materialized transpose of K
        s = lax.dot_general(q, k, (((1,), (1,)), ((), ())),
                            preferred_element_type=jnp.float32)         # [T, T]
        s = jnp.where(causal, s, jnp.float32(-1e30))
        m = jnp.max(s, axis=-1, keepdims=True)
        p = jnp.exp(s - m)
        l = jnp.sum(p, axis=-1, keepdims=True)
        o = jnp.dot(p.astype(jnp.bfloat16), v,
                    preferred_element_type=jnp.float32) / l             # exact divide
        # fused out-projection: concat_h(o_h) @ Wo == sum_h o_h @ Wo[h*hd:(h+1)*hd, :]
        acc = acc + jnp.dot(o.astype(jnp.bfloat16),
                            wo_ref[hh * head_dim:(hh + 1) * head_dim, :],
                            preferred_element_type=jnp.float32)

    h1 = acc                                               # post-attention residual, f32

    # ---- LN2 (folded) + fc1 + quick_gelu + fc2 + residual ----
    mu2 = jnp.mean(h1, axis=-1, keepdims=True)
    xc2 = h1 - mu2
    var2 = jnp.mean(xc2 * xc2, axis=-1, keepdims=True)
    xn2 = (xc2 * lax.rsqrt(var2 + 1e-5)).astype(jnp.bfloat16)
    a = jnp.dot(xn2, wfc1_ref[...],
                preferred_element_type=jnp.float32) + bfc1_ref[...]     # [T, D_mlp] f32
    a = a * jax.nn.sigmoid(1.702 * a)                      # CLIP quick_gelu, f32
    h2 = h1 + jnp.dot(a.astype(jnp.bfloat16), wfc2_ref[...],
                      preferred_element_type=jnp.float32) + bfc2_ref[...]

    o_ref[0] = h2.astype(o_ref.dtype)                      # residual stream stored bf16


def _layernorm_kernel(x_ref, g_ref, b_ref, o_ref):
    x = x_ref[...].astype(jnp.float32)
    mu = jnp.mean(x, axis=-1, keepdims=True)
    xc = x - mu
    var = jnp.mean(xc * xc, axis=-1, keepdims=True)
    o_ref[...] = xc * lax.rsqrt(var + 1e-5) * g_ref[...] + b_ref[...]


def _matmul_nobias_kernel(x_ref, w_ref, o_ref):
    o_ref[...] = jnp.dot(x_ref[...].astype(jnp.bfloat16), w_ref[...],
                         preferred_element_type=jnp.float32)


# ------------------------------ kernel wrappers -----------------------------

def clip_layer(h, p, *, n_heads):
    """h: [B, T, D] bf16 residual stream -> [B, T, D] bf16 after one encoder layer."""
    b, t, d = h.shape
    hd = d // n_heads
    d_mlp = p["w_fc1"].shape[1]
    kernel = functools.partial(_clip_layer_kernel, n_heads=n_heads, head_dim=hd)
    return pl.pallas_call(
        kernel,
        grid=(b,),
        in_specs=[
            pl.BlockSpec((1, t, d), lambda i: (i, 0, 0)),        # h (per-batch block)
            pl.BlockSpec((d, 3 * d), lambda i: (0, 0)),          # w_qkv (resident)
            pl.BlockSpec((1, 3 * d), lambda i: (0, 0)),          # b_qkv
            pl.BlockSpec((d, d), lambda i: (0, 0)),              # wo
            pl.BlockSpec((1, d), lambda i: (0, 0)),              # bo
            pl.BlockSpec((d, d_mlp), lambda i: (0, 0)),          # w_fc1
            pl.BlockSpec((1, d_mlp), lambda i: (0, 0)),          # b_fc1
            pl.BlockSpec((d_mlp, d), lambda i: (0, 0)),          # w_fc2
            pl.BlockSpec((1, d), lambda i: (0, 0)),              # b_fc2
        ],
        out_specs=pl.BlockSpec((1, t, d), lambda i: (i, 0, 0)),
        out_shape=jax.ShapeDtypeStruct((b, t, d), jnp.bfloat16),
        compiler_params=pltpu.CompilerParams(
            dimension_semantics=("parallel",),
            vmem_limit_bytes=_VMEM_LIMIT),
    )(h, p["w_qkv"], p["b_qkv"], p["wo"], p["bo"],
      p["w_fc1"], p["b_fc1"], p["w_fc2"], p["b_fc2"])


def final_layer_norm(x, g, b):
    """x: [M, D] bf16 -> f32 LayerNorm output (last_hidden_state)."""
    m, d = x.shape
    tm = _pick_row_tile(m)
    return pl.pallas_call(
        _layernorm_kernel,
        grid=(m // tm,),
        in_specs=[pl.BlockSpec((tm, d), lambda i: (i, 0)),
                  pl.BlockSpec((1, d), lambda i: (0, 0)),
                  pl.BlockSpec((1, d), lambda i: (0, 0))],
        out_specs=pl.BlockSpec((tm, d), lambda i: (i, 0)),
        out_shape=jax.ShapeDtypeStruct((m, d), jnp.float32),
        compiler_params=pltpu.CompilerParams(
            dimension_semantics=("parallel",),
            vmem_limit_bytes=_VMEM_LIMIT),
    )(x, g, b)


def matmul_nobias(x, w):
    """Small bias-free projection (pooled [B, D] @ [D, proj]) with explicit VMEM specs."""
    m, k = x.shape
    n = w.shape[1]
    return pl.pallas_call(
        _matmul_nobias_kernel,
        grid=(1,),
        in_specs=[pl.BlockSpec((m, k), lambda i: (0, 0)),
                  pl.BlockSpec((k, n), lambda i: (0, 0))],
        out_specs=pl.BlockSpec((m, n), lambda i: (0, 0)),
        out_shape=jax.ShapeDtypeStruct((m, n), jnp.float32),
        compiler_params=pltpu.CompilerParams(vmem_limit_bytes=_VMEM_LIMIT),
    )(x, w)


# ------------------------------ parameters ----------------------------------

def init_params(key, vocab, max_len, d, n_layers, d_mlp, d_proj):
    """Raw (HF-layout-equivalent) parameters in f32."""
    keys = iter(jax.random.split(key, 3 + 16 * n_layers))

    def nrm(shape, scale=0.02):
        return scale * jax.random.normal(next(keys), shape, jnp.float32)

    layers = []
    for _ in range(n_layers):
        layers.append({
            "ln1_g": 1.0 + nrm((d,)), "ln1_b": nrm((d,)),
            "wq": nrm((d, d)), "bq": nrm((d,)),
            "wk": nrm((d, d)), "bk": nrm((d,)),
            "wv": nrm((d, d)), "bv": nrm((d,)),
            "wo": nrm((d, d)), "bo": nrm((d,)),
            "ln2_g": 1.0 + nrm((d,)), "ln2_b": nrm((d,)),
            "w_fc1": nrm((d, d_mlp)), "b_fc1": nrm((d_mlp,)),
            "w_fc2": nrm((d_mlp, d)), "b_fc2": nrm((d,)),
        })
    return {
        "tok_emb": nrm((vocab, d)),
        "pos_emb": nrm((max_len, d)),
        "final_ln_g": jnp.ones((d,), jnp.float32),
        "final_ln_b": jnp.zeros((d,), jnp.float32),
        "text_proj": nrm((d, d_proj)),          # Linear(d, proj, bias=False)
        "layers": layers,
    }


def _fold_ln(g, b, w, bias):
    """LN(x) @ w + bias == ((x-mu)*rsqrt(var)) @ (g[:,None]*w) + (b @ w + bias)."""
    w32 = w.astype(jnp.float32)
    w_fold = (g[:, None] * w32).astype(jnp.bfloat16)
    b_fold = (b @ w32 + bias).astype(jnp.float32)
    return w_fold, b_fold


def prepare_params(raw, *, n_heads):
    """Fold LN gamma/beta + attention scale into weights; cast weights to bf16."""
    d = raw["tok_emb"].shape[1]
    hd = d // n_heads
    scale = float(hd) ** -0.5
    layers = []
    for r in raw["layers"]:
        # fold the 1/sqrt(head_dim) scale into the Q projection (pure algebra)
        wq, bq = r["wq"] * scale, r["bq"] * scale
        w_qkv = jnp.concatenate([wq, r["wk"], r["wv"]], axis=1)     # [D, 3D]
        b_qkv = jnp.concatenate([bq, r["bk"], r["bv"]], axis=0)     # [3D]
        w_qkv, b_qkv = _fold_ln(r["ln1_g"], r["ln1_b"], w_qkv, b_qkv)
        w_fc1, b_fc1 = _fold_ln(r["ln2_g"], r["ln2_b"], r["w_fc1"], r["b_fc1"])
        layers.append({
            "w_qkv": w_qkv, "b_qkv": b_qkv.reshape(1, -1),
            "wo": r["wo"].astype(jnp.bfloat16), "bo": r["bo"].reshape(1, -1),
            "w_fc1": w_fc1, "b_fc1": b_fc1.reshape(1, -1),
            "w_fc2": r["w_fc2"].astype(jnp.bfloat16), "b_fc2": r["b_fc2"].reshape(1, -1),
        })
    return {
        "tok_emb": raw["tok_emb"],
        "pos_emb": raw["pos_emb"],
        "final_ln_g": raw["final_ln_g"].reshape(1, -1),
        "final_ln_b": raw["final_ln_b"].reshape(1, -1),
        "text_proj": raw["text_proj"].astype(jnp.bfloat16),
        "layers": layers,
    }


# ------------------------------ forward pass ---------------------------------

def clip_text_forward(params, tokens, *, n_heads):
    """CLIPTextModelWithProjection forward (pre-LN transformer, causal mask)."""
    b, t = tokens.shape
    d = params["tok_emb"].shape[1]

    # embedding lookups (gather) stay in plain JAX glue
    h = jnp.take(params["tok_emb"], tokens, axis=0) + params["pos_emb"][:t][None]
    h = h.astype(jnp.bfloat16)                              # residual stream lives in bf16

    for lyr in params["layers"]:
        h = clip_layer(h, lyr, n_heads=n_heads)             # one pallas_call per layer

    last_hidden = final_layer_norm(h.reshape(b * t, d),
                                   params["final_ln_g"],
                                   params["final_ln_b"]).reshape(b, t, d)

    # pooled output = hidden state at the EOS token position (CLIP: argmax of ids)
    # TODO(synk): matches HF CLIP only when eos_token_id is the max id in the vocab.
    eos_idx = jnp.argmax(tokens, axis=-1)
    pooled = last_hidden[jnp.arange(b), eos_idx]            # [B, D] f32

    # text_embeds = pooled @ text_projection (no bias)
    text_embeds = matmul_nobias(pooled, params["text_proj"])

    return {"last_hidden_state": last_hidden, "text_embeds": text_embeds}


# ----------------------------------- main ------------------------------------

if __name__ == "__main__":
    B, T = 2, 8                 # batch, sequence length (<= max_length)
    D, H, N_LAYERS = 128, 4, 2  # hidden size, heads, transformer layers
    D_MLP, D_PROJ = 4 * D, 128  # intermediate size, projection dim
    VOCAB, MAX_LEN = 1000, 77

    key = jax.random.PRNGKey(0)
    pkey, tkey = jax.random.split(key)
    raw_params = init_params(pkey, VOCAB, MAX_LEN, D, N_LAYERS, D_MLP, D_PROJ)
    params = prepare_params(raw_params, n_heads=H)
    tokens = jax.random.randint(tkey, (B, T), 1, VOCAB, dtype=jnp.int32)

    fwd = jax.jit(functools.partial(clip_text_forward, n_heads=H))
    out = fwd(params, tokens)
    jax.block_until_ready(out)

    assert out["last_hidden_state"].shape == (B, T, D)
    assert out["last_hidden_state"].dtype == jnp.float32
    assert out["text_embeds"].shape == (B, D_PROJ)
    assert out["text_embeds"].dtype == jnp.float32
    print("KERNEL_OK")
</pallas_src>

<mosaic_0001>
module attributes {stable_mosaic.version = 11 : i64} {
  func.func @_layernorm_kernel(%arg0: i32, %arg1: memref<8x128xbf16, #tpu.memory_space<vmem>>, %arg2: memref<1x128xf32, #tpu.memory_space<vmem>>, %arg3: memref<1x128xf32, #tpu.memory_space<vmem>>, %arg4: memref<8x128xf32, #tpu.memory_space<vmem>>) attributes {dimension_semantics = [#tpu.dimension_semantics<parallel>], iteration_bounds = array<i64: 2>, scalar_prefetch = 0 : i64, scratch_operands = 0 : i64, tpu.core_type = #tpu.core_type<tc>, window_params = [{transform_indices = @transform_0, window_bounds = array<i64: 8, 128>}, {pipeline_mode = #tpu.pipeline_mode<synchronous>, transform_indices = @transform_1, window_bounds = array<i64: 1, 128>}, {pipeline_mode = #tpu.pipeline_mode<synchronous>, transform_indices = @transform_2, window_bounds = array<i64: 1, 128>}, {transform_indices = @transform_3, window_bounds = array<i64: 8, 128>}]} {
    %c0 = arith.constant 0 : index
    %c0_0 = arith.constant 0 : index
    %0 = vector.load %arg1[%c0, %c0_0] : memref<8x128xbf16, #tpu.memory_space<vmem>>, vector<8x128xbf16>
    %1 = arith.extf %0 : vector<8x128xbf16> to vector<8x128xf32>
    %cst = arith.constant dense<0.000000e+00> : vector<8xf32>
    %2 = vector.multi_reduction <add>, %1, %cst [1] : vector<8x128xf32> to vector<8xf32>
    %3 = vector.shape_cast %2 : vector<8xf32> to vector<8x1xf32>
    %cst_1 = arith.constant 1.280000e+02 : f32
    %4 = vector.broadcast %cst_1 : f32 to vector<8x1xf32>
    %5 = arith.divf %3, %4 : vector<8x1xf32>
    %6 = vector.broadcast %5 : vector<8x1xf32> to vector<8x128xf32>
    %7 = arith.subf %1, %6 : vector<8x128xf32>
    %8 = arith.mulf %7, %7 : vector<8x128xf32>
    %cst_2 = arith.constant dense<0.000000e+00> : vector<8xf32>
    %9 = vector.multi_reduction <add>, %8, %cst_2 [1] : vector<8x128xf32> to vector<8xf32>
    %10 = vector.shape_cast %9 : vector<8xf32> to vector<8x1xf32>
    %cst_3 = arith.constant 1.280000e+02 : f32
    %11 = vector.broadcast %cst_3 : f32 to vector<8x1xf32>
    %12 = arith.divf %10, %11 : vector<8x1xf32>
    %cst_4 = arith.constant 9.99999974E-6 : f32
    %13 = vector.broadcast %cst_4 : f32 to vector<8x1xf32>
    %14 = arith.addf %12, %13 : vector<8x1xf32>
    %15 = math.rsqrt %14 : vector<8x1xf32>
    %16 = vector.broadcast %15 : vector<8x1xf32> to vector<8x128xf32>
    %17 = arith.mulf %7, %16 : vector<8x128xf32>
    %c0_5 = arith.constant 0 : index
    %c0_6 = arith.constant 0 : index
    %18 = vector.load %arg2[%c0_5, %c0_6] : memref<1x128xf32, #tpu.memory_space<vmem>>, vector<1x128xf32>
    %19 = vector.broadcast %18 : vector<1x128xf32> to vector<8x128xf32>
    %20 = arith.mulf %17, %19 : vector<8x128xf32>
    %c0_7 = arith.constant 0 : index
    %c0_8 = arith.constant 0 : index
    %21 = vector.load %arg3[%c0_7, %c0_8] : memref<1x128xf32, #tpu.memory_space<vmem>>, vector<1x128xf32>
    %22 = vector.broadcast %21 : vector<1x128xf32> to vector<8x128xf32>
    %23 = arith.addf %20, %22 : vector<8x128xf32>
    %c0_9 = arith.constant 0 : index
    %c0_10 = arith.constant 0 : index
    %24 = vector.load %arg4[%c0_9, %c0_10] : memref<8x128xf32, #tpu.memory_space<vmem>>, vector<8x128xf32>
    tpu.vector_store %arg4[%c0_9, %c0_10], %23 {strides = array<i32>} : memref<8x128xf32, #tpu.memory_space<vmem>>, vector<8x128xf32>,
    return
  }
  func.func @transform_0(%arg0: i32) -> (i32, i32) {
    %c0_i32 = arith.constant 0 : i32
    %c0_i32_0 = arith.constant 0 : i32
    return %arg0, %c0_i32 : i32, i32
  }
  func.func @transform_1(%arg0: i32) -> (i32, i32) {
    %c0_i32 = arith.constant 0 : i32
    %c0_i32_0 = arith.constant 0 : i32
    %c0_i32_1 = arith.constant 0 : i32
    return %c0_i32, %c0_i32_0 : i32, i32
  }
  func.func @transform_2(%arg0: i32) -> (i32, i32) {
    %c0_i32 = arith.constant 0 : i32
    %c0_i32_0 = arith.constant 0 : i32
    %c0_i32_1 = arith.constant 0 : i32
    return %c0_i32, %c0_i32_0 : i32, i32
  }
  func.func @transform_3(%arg0: i32) -> (i32, i32) {
    %c0_i32 = arith.constant 0 : i32
    %c0_i32_0 = arith.constant 0 : i32
    return %arg0, %c0_i32 : i32, i32
  }
}

module attributes {stable_mosaic.version = 11 : i64} {
  func.func @_clip_layer_kernel(%arg0: i32, %arg1: memref<1x8x128xbf16, #tpu.memory_space<vmem>>, %arg2: memref<128x384xbf16, #tpu.memory_space<vmem>>, %arg3: memref<1x384xf32, #tpu.memory_space<vmem>>, %arg4: memref<128x128xbf16, #tpu.memory_space<vmem>>, %arg5: memref<1x128xf32, #tpu.memory_space<vmem>>, %arg6: memref<128x512xbf16, #tpu.memory_space<vmem>>, %arg7: memref<1x512xf32, #tpu.memory_space<vmem>>, %arg8: memref<512x128xbf16, #tpu.memory_space<vmem>>, %arg9: memref<1x128xf32, #tpu.memory_space<vmem>>, %arg10: memref<1x8x128xbf16, #tpu.memory_space<vmem>>) attributes {dimension_semantics = [#tpu.dimension_semantics<parallel>], iteration_bounds = array<i64: 2>, scalar_prefetch = 0 : i64, scratch_operands = 0 : i64, tpu.core_type = #tpu.core_type<tc>, window_params = [{transform_indices = @transform_0, window_bounds = array<i64: 1, 8, 128>}, {pipeline_mode = #tpu.pipeline_mode<synchronous>, transform_indices = @transform_1, window_bounds = array<i64: 128, 384>}, {pipeline_mode = #tpu.pipeline_mode<synchronous>, transform_indices = @transform_2, window_bounds = array<i64: 1, 384>}, {pipeline_mode = #tpu.pipeline_mode<synchronous>, transform_indices = @transform_3, window_bounds = array<i64: 128, 128>}, {pipeline_mode = #tpu.pipeline_mode<synchronous>, transform_indices = @transform_4, window_bounds = array<i64: 1, 128>}, {pipeline_mode = #tpu.pipeline_mode<synchronous>, transform_indices = @transform_5, window_bounds = array<i64: 128, 512>}, {pipeline_mode = #tpu.pipeline_mode<synchronous>, transform_indices = @transform_6, window_bounds = array<i64: 1, 512>}, {pipeline_mode = #tpu.pipeline_mode<synchronous>, transform_indices = @transform_7, window_bounds = array<i64: 512, 128>}, {pipeline_mode = #tpu.pipeline_mode<synchronous>, transform_indices = @transform_8, window_bounds = array<i64: 1, 128>}, {transform_indices = @transform_9, window_bounds = array<i64: 1, 8, 128>}]} {
    %c0 = arith.constant 0 : index
    %c0_0 = arith.constant 0 : index
    %c0_1 = arith.constant 0 : index
    %0 = vector.load %arg1[%c0, %c0_0, %c0_1] : memref<1x8x128xbf16, #tpu.memory_space<vmem>>, vector<1x8x128xbf16>
    %1 = vector.shape_cast %0 : vector<1x8x128xbf16> to vector<8x128xbf16>
    %2 = arith.extf %1 : vector<8x128xbf16> to vector<8x128xf32>
    %cst = arith.constant dense<0.000000e+00> : vector<8xf32>
    %3 = vector.multi_reduction <add>, %2, %cst [1] : vector<8x128xf32> to vector<8xf32>
    %4 = vector.shape_cast %3 : vector<8xf32> to vector<8x1xf32>
    %cst_2 = arith.constant 1.280000e+02 : f32
    %5 = vector.broadcast %cst_2 : f32 to vector<8x1xf32>
    %6 = arith.divf %4, %5 : vector<8x1xf32>
    %7 = vector.broadcast %6 : vector<8x1xf32> to vector<8x128xf32>
    %8 = arith.subf %2, %7 : vector<8x128xf32>
    %9 = arith.mulf %8, %8 : vector<8x128xf32>
    %cst_3 = arith.constant dense<0.000000e+00> : vector<8xf32>
    %10 = vector.multi_reduction <add>, %9, %cst_3 [1] : vector<8x128xf32> to vector<8xf32>
    %11 = vector.shape_cast %10 : vector<8xf32> to vector<8x1xf32>
    %cst_4 = arith.constant 1.280000e+02 : f32
    %12 = vector.broadcast %cst_4 : f32 to vector<8x1xf32>
    %13 = arith.divf %11, %12 : vector<8x1xf32>
    %cst_5 = arith.constant 9.99999974E-6 : f32
    %14 = vector.broadcast %cst_5 : f32 to vector<8x1xf32>
    %15 = arith.addf %13, %14 : vector<8x1xf32>
    %16 = math.rsqrt %15 : vector<8x1xf32>
    %17 = vector.broadcast %16 : vector<8x1xf32> to vector<8x128xf32>
    %18 = arith.mulf %8, %17 : vector<8x128xf32>
    %19 = arith.truncf %18 : vector<8x128xf32> to vector<8x128xbf16>
    %c0_6 = arith.constant 0 : index
    %c0_7 = arith.constant 0 : index
    %20 = vector.load %arg2[%c0_6, %c0_7] : memref<128x384xbf16, #tpu.memory_space<vmem>>, vector<128x384xbf16>
    %cst_8 = arith.constant dense<0.000000e+00> : vector<8x384xf32>
    %21 = tpu.matmul %19, %20, %cst_8 {dimension_numbers = #tpu.dot_dimension_numbers<[1], [0], [0], [1], [0, 0, 1, 1], [], []>} : vector<8x128xbf16>, vector<128x384xbf16>, vector<8x384xf32> -> vector<8x384xf32>
    %c0_9 = arith.constant 0 : index
    %c0_10 = arith.constant 0 : index
    %22 = vector.load %arg3[%c0_9, %c0_10] : memref<1x384xf32, #tpu.memory_space<vmem>>, vector<1x384xf32>
    %23 = vector.broadcast %22 : vector<1x384xf32> to vector<8x384xf32>
    %24 = arith.addf %21, %23 : vector<8x384xf32>
    %25 = arith.truncf %24 : vector<8x384xf32> to vector<8x384xbf16>
    %26 = tpu.iota {dimensions = array<i32: 0>} : vector<8x8xi32>
    %27 = tpu.iota {dimensions = array<i32: 1>} : vector<8x8xi32>
    %28 = arith.cmpi sle, %27, %26 : vector<8x8xi32>
    %c0_11 = arith.constant 0 : index
    %c0_12 = arith.constant 0 : index
    %29 = vector.load %arg5[%c0_11, %c0_12] : memref<1x128xf32, #tpu.memory_space<vmem>>, vector<1x128xf32>
    %30 = vector.broadcast %29 : vector<1x128xf32> to vector<8x128xf32>
    %31 = arith.addf %30, %2 : vector<8x128xf32>
    %32 = vector.extract_strided_slice %25 {offsets = [0, 0], sizes = [8, 32], strides = [1, 1]} : vector<8x384xbf16> to vector<8x32xbf16>
    %33 = vector.extract_strided_slice %25 {offsets = [0, 128], sizes = [8, 32], strides = [1, 1]} : vector<8x384xbf16> to vector<8x32xbf16>
    %34 = vector.extract_strided_slice %25 {offsets = [0, 256], sizes = [8, 32], strides = [1, 1]} : vector<8x384xbf16> to vector<8x32xbf16>
    %cst_13 = arith.constant dense<0.000000e+00> : vector<8x8xf32>
    %35 = tpu.matmul %32, %33, %cst_13 {dimension_numbers = #tpu.dot_dimension_numbers<[1], [1], [0], [0], [0, 0, 1, 0], [], []>} : vector<8x32xbf16>, vector<8x32xbf16>, vector<8x8xf32> -> vector<8x8xf32>
    %cst_14 = arith.constant -1.000000e+30 : f32
    %36 = vector.broadcast %cst_14 : f32 to vector<8x8xf32>
    %37 = arith.select %28, %35, %36 : vector<8x8xi1>, vector<8x8xf32>
    %cst_15 = arith.constant dense<0xFF800000> : vector<8xf32>
    %38 = vector.multi_reduction <maximumf>, %37, %cst_15 [1] : vector<8x8xf32> to vector<8xf32>
    %39 = vector.shape_cast %38 : vector<8xf32> to vector<8x1xf32>
    %40 = vector.broadcast %39 : vector<8x1xf32> to vector<8x8xf32>
    %41 = arith.subf %37, %40 : vector<8x8xf32>
    %42 = math.exp %41 : vector<8x8xf32>
    %cst_16 = arith.constant dense<0.000000e+00> : vector<8xf32>
    %43 = vector.multi_reduction <add>, %42, %cst_16 [1] : vector<8x8xf32> to vector<8xf32>
    %44 = vector.shape_cast %43 : vector<8xf32> to vector<8x1xf32>
    %45 = arith.truncf %42 : vector<8x8xf32> to vector<8x8xbf16>
    %cst_17 = arith.constant dense<0.000000e+00> : vector<8x32xf32>
    %46 = tpu.matmul %45, %34, %cst_17 {dimension_numbers = #tpu.dot_dimension_numbers<[1], [0], [0], [1], [0, 0, 1, 1], [], []>} : vector<8x8xbf16>, vector<8x32xbf16>, vector<8x32xf32> -> vector<8x32xf32>
    %47 = vector.broadcast %44 : vector<8x1xf32> to vector<8x32xf32>
    %48 = arith.divf %46, %47 : vector<8x32xf32>
    %49 = arith.truncf %48 : vector<8x32xf32> to vector<8x32xbf16>
    %c0_18 = arith.constant 0 : index
    %c0_19 = arith.constant 0 : index
    %50 = vector.load %arg4[%c0_18, %c0_19] : memref<128x128xbf16, #tpu.memory_space<vmem>>, vector<32x128xbf16>
    %cst_20 = arith.constant dense<0.000000e+00> : vector<8x128xf32>
    %51 = tpu.matmul %49, %50, %cst_20 {dimension_numbers = #tpu.dot_dimension_numbers<[1], [0], [0], [1], [0, 0, 1, 1], [], []>} : vector<8x32xbf16>, vector<32x128xbf16>, vector<8x128xf32> -> vector<8x128xf32>
    %52 = arith.addf %31, %51 : vector<8x128xf32>
    %53 = vector.extract_strided_slice %25 {offsets = [0, 32], sizes = [8, 32], strides = [1, 1]} : vector<8x384xbf16> to vector<8x32xbf16>
    %54 = vector.extract_strided_slice %25 {offsets = [0, 160], sizes = [8, 32], strides = [1, 1]} : vector<8x384xbf16> to vector<8x32xbf16>
    %55 = vector.extract_strided_slice %25 {offsets = [0, 288], sizes = [8, 32], strides = [1, 1]} : vector<8x384xbf16> to vector<8x32xbf16>
    %cst_21 = arith.constant dense<0.000000e+00> : vector<8x8xf32>
    %56 = tpu.matmul %53, %54, %cst_21 {dimension_numbers = #tpu.dot_dimension_numbers<[1], [1], [0], [0], [0, 0, 1, 0], [], []>} : vector<8x32xbf16>, vector<8x32xbf16>, vector<8x8xf32> -> vector<8x8xf32>
    %cst_22 = arith.constant -1.000000e+30 : f32
    %57 = vector.broadcast %cst_22 : f32 to vector<8x8xf32>
    %58 = arith.select %28, %56, %57 : vector<8x8xi1>, vector<8x8xf32>
    %cst_23 = arith.constant dense<0xFF800000> : vector<8xf32>
    %59 = vector.multi_reduction <maximumf>, %58, %cst_23 [1] : vector<8x8xf32> to vector<8xf32>
    %60 = vector.shape_cast %59 : vector<8xf32> to vector<8x1xf32>
    %61 = vector.broadcast %60 : vector<8x1xf32> to vector<8x8xf32>
    %62 = arith.subf %58, %61 : vector<8x8xf32>
    %63 = math.exp %62 : vector<8x8xf32>
    %cst_24 = arith.constant dense<0.000000e+00> : vector<8xf32>
    %64 = vector.multi_reduction <add>, %63, %cst_24 [1] : vector<8x8xf32> to vector<8xf32>
    %65 = vector.shape_cast %64 : vector<8xf32> to vector<8x1xf32>
    %66 = arith.truncf %63 : vector<8x8xf32> to vector<8x8xbf16>
    %cst_25 = arith.constant dense<0.000000e+00> : vector<8x32xf32>
    %67 = tpu.matmul %66, %55, %cst_25 {dimension_numbers = #tpu.dot_dimension_numbers<[1], [0], [0], [1], [0, 0, 1, 1], [], []>} : vector<8x8xbf16>, vector<8x32xbf16>, vector<8x32xf32> -> vector<8x32xf32>
    %68 = vector.broadcast %65 : vector<8x1xf32> to vector<8x32xf32>
    %69 = arith.divf %67, %68 : vector<8x32xf32>
    %70 = arith.truncf %69 : vector<8x32xf32> to vector<8x32xbf16>
    %c32 = arith.constant 32 : index
    %c0_26 = arith.constant 0 : index
    %71 = vector.load %arg4[%c32, %c0_26] : memref<128x128xbf16, #tpu.memory_space<vmem>>, vector<32x128xbf16>
    %cst_27 = arith.constant dense<0.000000e+00> : vector<8x128xf32>
    %72 = tpu.matmul %70, %71, %cst_27 {dimension_numbers = #tpu.dot_dimension_numbers<[1], [0], [0], [1], [0, 0, 1, 1], [], []>} : vector<8x32xbf16>, vector<32x128xbf16>, vector<8x128xf32> -> vector<8x128xf32>
    %73 = arith.addf %52, %72 : vector<8x128xf32>
    %74 = vector.extract_strided_slice %25 {offsets = [0, 64], sizes = [8, 32], strides = [1, 1]} : vector<8x384xbf16> to vector<8x32xbf16>
    %75 = vector.extract_strided_slice %25 {offsets = [0, 192], sizes = [8, 32], strides = [1, 1]} : vector<8x384xbf16> to vector<8x32xbf16>
    %76 = vector.extract_strided_slice %25 {offsets = [0, 320], sizes = [8, 32], strides = [1, 1]} : vector<8x384xbf16> to vector<8x32xbf16>
    %cst_28 = arith.constant dense<0.000000e+00> : vector<8x8xf32>
    %77 = tpu.matmul %74, %75, %cst_28 {dimension_numbers = #tpu.dot_dimension_numbers<[1], [1], [0], [0], [0, 0, 1, 0], [], []>} : vector<8x32xbf16>, vector<8x32xbf16>, vector<8x8xf32> -> vector<8x8xf32>
    %cst_29 = arith.constant -1.000000e+30 : f32
    %78 = vector.broadcast %cst_29 : f32 to vector<8x8xf32>
    %79 = arith.select %28, %77, %78 : vector<8x8xi1>, vector<8x8xf32>
    %cst_30 = arith.constant dense<0xFF800000> : vector<8xf32>
    %80 = vector.multi_reduction <maximumf>, %79, %cst_30 [1] : vector<8x8xf32> to vector<8xf32>
    %81 = vector.shape_cast %80 : vector<8xf32> to vector<8x1xf32>
    %82 = vector.broadcast %81 : vector<8x1xf32> to vector<8x8xf32>
    %83 = arith.subf %79, %82 : vector<8x8xf32>
    %84 = math.exp %83 : vector<8x8xf32>
    %cst_31 = arith.constant dense<0.000000e+00> : vector<8xf32>
    %85 = vector.multi_reduction <add>, %84, %cst_31 [1] : vector<8x8xf32> to vector<8xf32>
    %86 = vector.shape_cast %85 : vector<8xf32> to vector<8x1xf32>
    %87 = arith.truncf %84 : vector<8x8xf32> to vector<8x8xbf16>
    %cst_32 = arith.constant dense<0.000000e+00> : vector<8x32xf32>
    %88 = tpu.matmul %87, %76, %cst_32 {dimension_numbers = #tpu.dot_dimension_numbers<[1], [0], [0], [1], [0, 0, 1, 1], [], []>} : vector<8x8xbf16>, vector<8x32xbf16>, vector<8x32xf32> -> vector<8x32xf32>
    %89 = vector.broadcast %86 : vector<8x1xf32> to vector<8x32xf32>
    %90 = arith.divf %88, %89 : vector<8x32xf32>
    %91 = arith.truncf %90 : vector<8x32xf32> to vector<8x32xbf16>
    %c64 = arith.constant 64 : index
    %c0_33 = arith.constant 0 : index
    %92 = vector.load %arg4[%c64, %c0_33] : memref<128x128xbf16, #tpu.memory_space<vmem>>, vector<32x128xbf16>
    %cst_34 = arith.constant dense<0.000000e+00> : vector<8x128xf32>
    %93 = tpu.matmul %91, %92, %cst_34 {dimension_numbers = #tpu.dot_dimension_numbers<[1], [0], [0], [1], [0, 0, 1, 1], [], []>} : vector<8x32xbf16>, vector<32x128xbf16>, vector<8x128xf32> -> vector<8x128xf32>
    %94 = arith.addf %73, %93 : vector<8x128xf32>
    %95 = vector.extract_strided_slice %25 {offsets = [0, 96], sizes = [8, 32], strides = [1, 1]} : vector<8x384xbf16> to vector<8x32xbf16>
    %96 = vector.extract_strided_slice %25 {offsets = [0, 224], sizes = [8, 32], strides = [1, 1]} : vector<8x384xbf16> to vector<8x32xbf16>
    %97 = vector.extract_strided_slice %25 {offsets = [0, 352], sizes = [8, 32], strides = [1, 1]} : vector<8x384xbf16> to vector<8x32xbf16>
    %cst_35 = arith.constant dense<0.000000e+00> : vector<8x8xf32>
    %98 = tpu.matmul %95, %96, %cst_35 {dimension_numbers = #tpu.dot_dimension_numbers<[1], [1], [0], [0], [0, 0, 1, 0], [], []>} : vector<8x32xbf16>, vector<8x32xbf16>, vector<8x8xf32> -> vector<8x8xf32>
    %cst_36 = arith.constant -1.000000e+30 : f32
    %99 = vector.broadcast %cst_36 : f32 to vector<8x8xf32>
    %100 = arith.select %28, %98, %99 : vector<8x8xi1>, vector<8x8xf32>
    %cst_37 = arith.constant dense<0xFF800000> : vector<8xf32>
    %101 = vector.multi_reduction <maximumf>, %100, %cst_37 [1] : vector<8x8xf32> to vector<8xf32>
    %102 = vector.shape_cast %101 : vector<8xf32> to vector<8x1xf32>
    %103 = vector.broadcast %102 : vector<8x1xf32> to vector<8x8xf32>
    %104 = arith.subf %100, %103 : vector<8x8xf32>
    %105 = math.exp %104 : vector<8x8xf32>
    %cst_38 = arith.constant dense<0.000000e+00> : vector<8xf32>
    %106 = vector.multi_reduction <add>, %105, %cst_38 [1] : vector<8x8xf32> to vector<8xf32>
    %107 = vector.shape_cast %106 : vector<8xf32> to vector<8x1xf32>
    %108 = arith.truncf %105 : vector<8x8xf32> to vector<8x8xbf16>
    %cst_39 = arith.constant dense<0.000000e+00> : vector<8x32xf32>
    %109 = tpu.matmul %108, %97, %cst_39 {dimension_numbers = #tpu.dot_dimension_numbers<[1], [0], [0], [1], [0, 0, 1, 1], [], []>} : vector<8x8xbf16>, vector<8x32xbf16>, vector<8x32xf32> -> vector<8x32xf32>
    %110 = vector.broadcast %107 : vector<8x1xf32> to vector<8x32xf32>
    %111 = arith.divf %109, %110 : vector<8x32xf32>
    %112 = arith.truncf %111 : vector<8x32xf32> to vector<8x32xbf16>
    %c96 = arith.constant 96 : index
    %c0_40 = arith.constant 0 : index
    %113 = vector.load %arg4[%c96, %c0_40] : memref<128x128xbf16, #tpu.memory_space<vmem>>, vector<32x128xbf16>
    %cst_41 = arith.constant dense<0.000000e+00> : vector<8x128xf32>
    %114 = tpu.matmul %112, %113, %cst_41 {dimension_numbers = #tpu.dot_dimension_numbers<[1], [0], [0], [1], [0, 0, 1, 1], [], []>} : vector<8x32xbf16>, vector<32x128xbf16>, vector<8x128xf32> -> vector<8x128xf32>
    %115 = arith.addf %94, %114 : vector<8x128xf32>
    %cst_42 = arith.constant dense<0.000000e+00> : vector<8xf32>
    %116 = vector.multi_reduction <add>, %115, %cst_42 [1] : vector<8x128xf32> to vector<8xf32>
    %117 = vector.shape_cast %116 : vector<8xf32> to vector<8x1xf32>
    %cst_43 = arith.constant 1.280000e+02 : f32
    %118 = vector.broadcast %cst_43 : f32 to vector<8x1xf32>
    %119 = arith.divf %117, %118 : vector<8x1xf32>
    %120 = vector.broadcast %119 : vector<8x1xf32> to vector<8x128xf32>
    %121 = arith.subf %115, %120 : vector<8x128xf32>
    %122 = arith.mulf %121, %121 : vector<8x128xf32>
    %cst_44 = arith.constant dense<0.000000e+00> : vector<8xf32>
    %123 = vector.multi_reduction <add>, %122, %cst_44 [1] : vector<8x128xf32> to vector<8xf32>
    %124 = vector.shape_cast %123 : vector<8xf32> to vector<8x1xf32>
    %cst_45 = arith.constant 1.280000e+02 : f32
    %125 = vector.broadcast %cst_45 : f32 to vector<8x1xf32>
    %126 = arith.divf %124, %125 : vector<8x1xf32>
    %cst_46 = arith.constant 9.99999974E-6 : f32
    %127 = vector.broadcast %cst_46 : f32 to vector<8x1xf32>
    %128 = arith.addf %126, %127 : vector<8x1xf32>
    %129 = math.rsqrt %128 : vector<8x1xf32>
    %130 = vector.broadcast %129 : vector<8x1xf32> to vector<8x128xf32>
    %131 = arith.mulf %121, %130 : vector<8x128xf32>
    %132 = arith.truncf %131 : vector<8x128xf32> to vector<8x128xbf16>
    %c0_47 = arith.constant 0 : index
    %c0_48 = arith.constant 0 : index
    %133 = vector.load %arg6[%c0_47, %c0_48] : memref<128x512xbf16, #tpu.memory_space<vmem>>, vector<128x512xbf16>
    %cst_49 = arith.constant dense<0.000000e+00> : vector<8x512xf32>
    %134 = tpu.matmul %132, %133, %cst_49 {dimension_numbers = #tpu.dot_dimension_numbers<[1], [0], [0], [1], [0, 0, 1, 1], [], []>} : vector<8x128xbf16>, vector<128x512xbf16>, vector<8x512xf32> -> vector<8x512xf32>
    %c0_50 = arith.constant 0 : index
    %c0_51 = arith.constant 0 : index
    %135 = vector.load %arg7[%c0_50, %c0_51] : memref<1x512xf32, #tpu.memory_space<vmem>>, vector<1x512xf32>
    %136 = vector.broadcast %135 : vector<1x512xf32> to vector<8x512xf32>
    %137 = arith.addf %134, %136 : vector<8x512xf32>
    %cst_52 = arith.constant 1.702000e+00 : f32
    %138 = vector.broadcast %cst_52 : f32 to vector<8x512xf32>
    %139 = arith.mulf %138, %137 : vector<8x512xf32>
    %140 = arith.negf %139 : vector<8x512xf32>
    %141 = math.exp %140 : vector<8x512xf32>
    %cst_53 = arith.constant 1.000000e+00 : f32
    %142 = vector.broadcast %cst_53 : f32 to vector<8x512xf32>
    %143 = arith.addf %142, %141 : vector<8x512xf32>
    %144 = arith.divf %142, %143 : vector<8x512xf32>
    %145 = arith.mulf %137, %144 : vector<8x512xf32>
    %146 = arith.truncf %145 : vector<8x512xf32> to vector<8x512xbf16>
    %c0_54 = arith.constant 0 : index
    %c0_55 = arith.constant 0 : index
    %147 = vector.load %arg8[%c0_54, %c0_55] : memref<512x128xbf16, #tpu.memory_space<vmem>>, vector<512x128xbf16>
    %cst_56 = arith.constant dense<0.000000e+00> : vector<8x128xf32>
    %148 = tpu.matmul %146, %147, %cst_56 {dimension_numbers = #tpu.dot_dimension_numbers<[1], [0], [0], [1], [0, 0, 1, 1], [], []>} : vector<8x512xbf16>, vector<512x128xbf16>, vector<8x128xf32> -> vector<8x128xf32>
    %149 = arith.addf %115, %148 : vector<8x128xf32>
    %c0_57 = arith.constant 0 : index
    %c0_58 = arith.constant 0 : index
    %150 = vector.load %arg9[%c0_57, %c0_58] : memref<1x128xf32, #tpu.memory_space<vmem>>, vector<1x128xf32>
    %151 = vector.broadcast %150 : vector<1x128xf32> to vector<8x128xf32>
    %152 = arith.addf %149, %151 : vector<8x128xf32>
    %153 = arith.truncf %152 : vector<8x128xf32> to vector<8x128xbf16>
    %c0_59 = arith.constant 0 : index
    %c0_60 = arith.constant 0 : index
    %c0_61 = arith.constant 0 : index
    %154 = vector.load %arg10[%c0_59, %c0_60, %c0_61] : memref<1x8x128xbf16, #tpu.memory_space<vmem>>, vector<1x8x128xbf16>
    %155 = vector.shape_cast %154 : vector<1x8x128xbf16> to vector<8x128xbf16>
    %156 = vector.shape_cast %153 : vector<8x128xbf16> to vector<1x8x128xbf16>
    tpu.vector_store %arg10[%c0_59, %c0_60, %c0_61], %156 {strides = array<i32>} : memref<1x8x128xbf16, #tpu.memory_space<vmem>>, vector<1x8x128xbf16>,
    return
  }
  func.func @transform_0(%arg0: i32) -> (i32, i32, i32) {
    %c0_i32 = arith.constant 0 : i32
    %c0_i32_0 = arith.constant 0 : i32
    %c0_i32_1 = arith.constant 0 : i32
    return %arg0, %c0_i32, %c0_i32_0 : i32, i32, i32
  }
  func.func @transform_1(%arg0: i32) -> (i32, i32) {
    %c0_i32 = arith.constant 0 : i32
    %c0_i32_0 = arith.constant 0 : i32
    %c0_i32_1 = arith.constant 0 : i32
    return %c0_i32, %c0_i32_0 : i32, i32
  }
  func.func @transform_2(%arg0: i32) -> (i32, i32) {
    %c0_i32 = arith.constant 0 : i32
    %c0_i32_0 = arith.constant 0 : i32
    %c0_i32_1 = arith.constant 0 : i32
    return %c0_i32, %c0_i32_0 : i32, i32
  }
  func.func @transform_3(%arg0: i32) -> (i32, i32) {
    %c0_i32 = arith.constant 0 : i32
    %c0_i32_0 = arith.constant 0 : i32
    %c0_i32_1 = arith.constant 0 : i32
    return %c0_i32, %c0_i32_0 : i32, i32
  }
  func.func @transform_4(%arg0: i32) -> (i32, i32) {
    %c0_i32 = arith.constant 0 : i32
    %c0_i32_0 = arith.constant 0 : i32
    %c0_i32_1 = arith.constant 0 : i32
    return %c0_i32, %c0_i32_0 : i32, i32
  }
  func.func @transform_5(%arg0: i32) -> (i32, i32) {
    %c0_i32 = arith.constant 0 : i32
    %c0_i32_0 = arith.constant 0 : i32
    %c0_i32_1 = arith.constant 0 : i32
    return %c0_i32, %c0_i32_0 : i32, i32
  }
  func.func @transform_6(%arg0: i32) -> (i32, i32) {
    %c0_i32 = arith.constant 0 : i32
    %c0_i32_0 = arith.constant 0 : i32
    %c0_i32_1 = arith.constant 0 : i32
    return %c0_i32, %c0_i32_0 : i32, i32
  }
  func.func @transform_7(%arg0: i32) -> (i32, i32) {
    %c0_i32 = arith.constant 0 : i32
    %c0_i32_0 = arith.constant 0 : i32
    %c0_i32_1 = arith.constant 0 : i32
    return %c0_i32, %c0_i32_0 : i32, i32
  }
  func.func @transform_8(%arg0: i32) -> (i32, i32) {
    %c0_i32 = arith.constant 0 : i32
    %c0_i32_0 = arith.constant 0 : i32
    %c0_i32_1 = arith.constant 0 : i32
    return %c0_i32, %c0_i32_0 : i32, i32
  }
  func.func @transform_9(%arg0: i32) -> (i32, i32, i32) {
    %c0_i32 = arith.constant 0 : i32
    %c0_i32_0 = arith.constant 0 : i32
    %c0_i32_1 = arith.constant 0 : i32
    return %arg0, %c0_i32, %c0_i32_0 : i32, i32, i32
  }
}

module attributes {stable_mosaic.version = 11 : i64} {
  func.func @_clip_layer_kernel(%arg0: i32, %arg1: memref<1x8x128xbf16, #tpu.memory_space<vmem>>, %arg2: memref<128x384xbf16, #tpu.memory_space<vmem>>, %arg3: memref<1x384xf32, #tpu.memory_space<vmem>>, %arg4: memref<128x128xbf16, #tpu.memory_space<vmem>>, %arg5: memref<1x128xf32, #tpu.memory_space<vmem>>, %arg6: memref<128x512xbf16, #tpu.memory_space<vmem>>, %arg7: memref<1x512xf32, #tpu.memory_space<vmem>>, %arg8: memref<512x128xbf16, #tpu.memory_space<vmem>>, %arg9: memref<1x128xf32, #tpu.memory_space<vmem>>, %arg10: memref<1x8x128xbf16, #tpu.memory_space<vmem>>) attributes {dimension_semantics = [#tpu.dimension_semantics<parallel>], iteration_bounds = array<i64: 2>, scalar_prefetch = 0 : i64, scratch_operands = 0 : i64, tpu.core_type = #tpu.core_type<tc>, window_params = [{transform_indices = @transform_0, window_bounds = array<i64: 1, 8, 128>}, {pipeline_mode = #tpu.pipeline_mode<synchronous>, transform_indices = @transform_1, window_bounds = array<i64: 128, 384>}, {pipeline_mode = #tpu.pipeline_mode<synchronous>, transform_indices = @transform_2, window_bounds = array<i64: 1, 384>}, {pipeline_mode = #tpu.pipeline_mode<synchronous>, transform_indices = @transform_3, window_bounds = array<i64: 128, 128>}, {pipeline_mode = #tpu.pipeline_mode<synchronous>, transform_indices = @transform_4, window_bounds = array<i64: 1, 128>}, {pipeline_mode = #tpu.pipeline_mode<synchronous>, transform_indices = @transform_5, window_bounds = array<i64: 128, 512>}, {pipeline_mode = #tpu.pipeline_mode<synchronous>, transform_indices = @transform_6, window_bounds = array<i64: 1, 512>}, {pipeline_mode = #tpu.pipeline_mode<synchronous>, transform_indices = @transform_7, window_bounds = array<i64: 512, 128>}, {pipeline_mode = #tpu.pipeline_mode<synchronous>, transform_indices = @transform_8, window_bounds = array<i64: 1, 128>}, {transform_indices = @transform_9, window_bounds = array<i64: 1, 8, 128>}]} {
    %c0 = arith.constant 0 : index
    %c0_0 = arith.constant 0 : index
    %c0_1 = arith.constant 0 : index
    %0 = vector.load %arg1[%c0, %c0_0, %c0_1] : memref<1x8x128xbf16, #tpu.memory_space<vmem>>, vector<1x8x128xbf16>
    %1 = vector.shape_cast %0 : vector<1x8x128xbf16> to vector<8x128xbf16>
    %2 = arith.extf %1 : vector<8x128xbf16> to vector<8x128xf32>
    %cst = arith.constant dense<0.000000e+00> : vector<8xf32>
    %3 = vector.multi_reduction <add>, %2, %cst [1] : vector<8x128xf32> to vector<8xf32>
    %4 = vector.shape_cast %3 : vector<8xf32> to vector<8x1xf32>
    %cst_2 = arith.constant 1.280000e+02 : f32
    %5 = vector.broadcast %cst_2 : f32 to vector<8x1xf32>
    %6 = arith.divf %4, %5 : vector<8x1xf32>
    %7 = vector.broadcast %6 : vector<8x1xf32> to vector<8x128xf32>
    %8 = arith.subf %2, %7 : vector<8x128xf32>
    %9 = arith.mulf %8, %8 : vector<8x128xf32>
    %cst_3 = arith.constant dense<0.000000e+00> : vector<8xf32>
    %10 = vector.multi_reduction <add>, %9, %cst_3 [1] : vector<8x128xf32> to vector<8xf32>
    %11 = vector.shape_cast %10 : vector<8xf32> to vector<8x1xf32>
    %cst_4 = arith.constant 1.280000e+02 : f32
    %12 = vector.broadcast %cst_4 : f32 to vector<8x1xf32>
    %13 = arith.divf %11, %12 : vector<8x1xf32>
    %cst_5 = arith.constant 9.99999974E-6 : f32
    %14 = vector.broadcast %cst_5 : f32 to vector<8x1xf32>
    %15 = arith.addf %13, %14 : vector<8x1xf32>
    %16 = math.rsqrt %15 : vector<8x1xf32>
    %17 = vector.broadcast %16 : vector<8x1xf32> to vector<8x128xf32>
    %18 = arith.mulf %8, %17 : vector<8x128xf32>
    %19 = arith.truncf %18 : vector<8x128xf32> to vector<8x128xbf16>
    %c0_6 = arith.constant 0 : index
    %c0_7 = arith.constant 0 : index
    %20 = vector.load %arg2[%c0_6, %c0_7] : memref<128x384xbf16, #tpu.memory_space<vmem>>, vector<128x384xbf16>
    %cst_8 = arith.constant dense<0.000000e+00> : vector<8x384xf32>
    %21 = tpu.matmul %19, %20, %cst_8 {dimension_numbers = #tpu.dot_dimension_numbers<[1], [0], [0], [1], [0, 0, 1, 1], [], []>} : vector<8x128xbf16>, vector<128x384xbf16>, vector<8x384xf32> -> vector<8x384xf32>
    %c0_9 = arith.constant 0 : index
    %c0_10 = arith.constant 0 : index
    %22 = vector.load %arg3[%c0_9, %c0_10] : memref<1x384xf32, #tpu.memory_space<vmem>>, vector<1x384xf32>
    %23 = vector.broadcast %22 : vector<1x384xf32> to vector<8x384xf32>
    %24 = arith.addf %21, %23 : vector<8x384xf32>
    %25 = arith.truncf %24 : vector<8x384xf32> to vector<8x384xbf16>
    %26 = tpu.iota {dimensions = array<i32: 0>} : vector<8x8xi32>
    %27 = tpu.iota {dimensions = array<i32: 1>} : vector<8x8xi32>
    %28 = arith.cmpi sle, %27, %26 : vector<8x8xi32>
    %c0_11 = arith.constant 0 : index
    %c0_12 = arith.constant 0 : index
    %29 = vector.load %arg5[%c0_11, %c0_12] : memref<1x128xf32, #tpu.memory_space<vmem>>, vector<1x128xf32>
    %30 = vector.broadcast %29 : vector<1x128xf32> to vector<8x128xf32>
    %31 = arith.addf %30, %2 : vector<8x128xf32>
    %32 = vector.extract_strided_slice %25 {offsets = [0, 0], sizes = [8, 32], strides = [1, 1]} : vector<8x384xbf16> to vector<8x32xbf16>
    %33 = vector.extract_strided_slice %25 {offsets = [0, 128], sizes = [8, 32], strides = [1, 1]} : vector<8x384xbf16> to vector<8x32xbf16>
    %34 = vector.extract_strided_slice %25 {offsets = [0, 256], sizes = [8, 32], strides = [1, 1]} : vector<8x384xbf16> to vector<8x32xbf16>
    %cst_13 = arith.constant dense<0.000000e+00> : vector<8x8xf32>
    %35 = tpu.matmul %32, %33, %cst_13 {dimension_numbers = #tpu.dot_dimension_numbers<[1], [1], [0], [0], [0, 0, 1, 0], [], []>} : vector<8x32xbf16>, vector<8x32xbf16>, vector<8x8xf32> -> vector<8x8xf32>
    %cst_14 = arith.constant -1.000000e+30 : f32
    %36 = vector.broadcast %cst_14 : f32 to vector<8x8xf32>
    %37 = arith.select %28, %35, %36 : vector<8x8xi1>, vector<8x8xf32>
    %cst_15 = arith.constant dense<0xFF800000> : vector<8xf32>
    %38 = vector.multi_reduction <maximumf>, %37, %cst_15 [1] : vector<8x8xf32> to vector<8xf32>
    %39 = vector.shape_cast %38 : vector<8xf32> to vector<8x1xf32>
    %40 = vector.broadcast %39 : vector<8x1xf32> to vector<8x8xf32>
    %41 = arith.subf %37, %40 : vector<8x8xf32>
    %42 = math.exp %41 : vector<8x8xf32>
    %cst_16 = arith.constant dense<0.000000e+00> : vector<8xf32>
    %43 = vector.multi_reduction <add>, %42, %cst_16 [1] : vector<8x8xf32> to vector<8xf32>
    %44 = vector.shape_cast %43 : vector<8xf32> to vector<8x1xf32>
    %45 = arith.truncf %42 : vector<8x8xf32> to vector<8x8xbf16>
    %cst_17 = arith.constant dense<0.000000e+00> : vector<8x32xf32>
    %46 = tpu.matmul %45, %34, %cst_17 {dimension_numbers = #tpu.dot_dimension_numbers<[1], [0], [0], [1], [0, 0, 1, 1], [], []>} : vector<8x8xbf16>, vector<8x32xbf16>, vector<8x32xf32> -> vector<8x32xf32>
    %47 = vector.broadcast %44 : vector<8x1xf32> to vector<8x32xf32>
    %48 = arith.divf %46, %47 : vector<8x32xf32>
    %49 = arith.truncf %48 : vector<8x32xf32> to vector<8x32xbf16>
    %c0_18 = arith.constant 0 : index
    %c0_19 = arith.constant 0 : index
    %50 = vector.load %arg4[%c0_18, %c0_19] : memref<128x128xbf16, #tpu.memory_space<vmem>>, vector<32x128xbf16>
    %cst_20 = arith.constant dense<0.000000e+00> : vector<8x128xf32>
    %51 = tpu.matmul %49, %50, %cst_20 {dimension_numbers = #tpu.dot_dimension_numbers<[1], [0], [0], [1], [0, 0, 1, 1], [], []>} : vector<8x32xbf16>, vector<32x128xbf16>, vector<8x128xf32> -> vector<8x128xf32>
    %52 = arith.addf %31, %51 : vector<8x128xf32>
    %53 = vector.extract_strided_slice %25 {offsets = [0, 32], sizes = [8, 32], strides = [1, 1]} : vector<8x384xbf16> to vector<8x32xbf16>
    %54 = vector.extract_strided_slice %25 {offsets = [0, 160], sizes = [8, 32], strides = [1, 1]} : vector<8x384xbf16> to vector<8x32xbf16>
    %55 = vector.extract_strided_slice %25 {offsets = [0, 288], sizes = [8, 32], strides = [1, 1]} : vector<8x384xbf16> to vector<8x32xbf16>
    %cst_21 = arith.constant dense<0.000000e+00> : vector<8x8xf32>
    %56 = tpu.matmul %53, %54, %cst_21 {dimension_numbers = #tpu.dot_dimension_numbers<[1], [1], [0], [0], [0, 0, 1, 0], [], []>} : vector<8x32xbf16>, vector<8x32xbf16>, vector<8x8xf32> -> vector<8x8xf32>
    %cst_22 = arith.constant -1.000000e+30 : f32
    %57 = vector.broadcast %cst_22 : f32 to vector<8x8xf32>
    %58 = arith.select %28, %56, %57 : vector<8x8xi1>, vector<8x8xf32>
    %cst_23 = arith.constant dense<0xFF800000> : vector<8xf32>
    %59 = vector.multi_reduction <maximumf>, %58, %cst_23 [1] : vector<8x8xf32> to vector<8xf32>
    %60 = vector.shape_cast %59 : vector<8xf32> to vector<8x1xf32>
    %61 = vector.broadcast %60 : vector<8x1xf32> to vector<8x8xf32>
    %62 = arith.subf %58, %61 : vector<8x8xf32>
    %63 = math.exp %62 : vector<8x8xf32>
    %cst_24 = arith.constant dense<0.000000e+00> : vector<8xf32>
    %64 = vector.multi_reduction <add>, %63, %cst_24 [1] : vector<8x8xf32> to vector<8xf32>
    %65 = vector.shape_cast %64 : vector<8xf32> to vector<8x1xf32>
    %66 = arith.truncf %63 : vector<8x8xf32> to vector<8x8xbf16>
    %cst_25 = arith.constant dense<0.000000e+00> : vector<8x32xf32>
    %67 = tpu.matmul %66, %55, %cst_25 {dimension_numbers = #tpu.dot_dimension_numbers<[1], [0], [0], [1], [0, 0, 1, 1], [], []>} : vector<8x8xbf16>, vector<8x32xbf16>, vector<8x32xf32> -> vector<8x32xf32>
    %68 = vector.broadcast %65 : vector<8x1xf32> to vector<8x32xf32>
    %69 = arith.divf %67, %68 : vector<8x32xf32>
    %70 = arith.truncf %69 : vector<8x32xf32> to vector<8x32xbf16>
    %c32 = arith.constant 32 : index
    %c0_26 = arith.constant 0 : index
    %71 = vector.load %arg4[%c32, %c0_26] : memref<128x128xbf16, #tpu.memory_space<vmem>>, vector<32x128xbf16>
    %cst_27 = arith.constant dense<0.000000e+00> : vector<8x128xf32>
    %72 = tpu.matmul %70, %71, %cst_27 {dimension_numbers = #tpu.dot_dimension_numbers<[1], [0], [0], [1], [0, 0, 1, 1], [], []>} : vector<8x32xbf16>, vector<32x128xbf16>, vector<8x128xf32> -> vector<8x128xf32>
    %73 = arith.addf %52, %72 : vector<8x128xf32>
    %74 = vector.extract_strided_slice %25 {offsets = [0, 64], sizes = [8, 32], strides = [1, 1]} : vector<8x384xbf16> to vector<8x32xbf16>
    %75 = vector.extract_strided_slice %25 {offsets = [0, 192], sizes = [8, 32], strides = [1, 1]} : vector<8x384xbf16> to vector<8x32xbf16>
    %76 = vector.extract_strided_slice %25 {offsets = [0, 320], sizes = [8, 32], strides = [1, 1]} : vector<8x384xbf16> to vector<8x32xbf16>
    %cst_28 = arith.constant dense<0.000000e+00> : vector<8x8xf32>
    %77 = tpu.matmul %74, %75, %cst_28 {dimension_numbers = #tpu.dot_dimension_numbers<[1], [1], [0], [0], [0, 0, 1, 0], [], []>} : vector<8x32xbf16>, vector<8x32xbf16>, vector<8x8xf32> -> vector<8x8xf32>
    %cst_29 = arith.constant -1.000000e+30 : f32
    %78 = vector.broadcast %cst_29 : f32 to vector<8x8xf32>
    %79 = arith.select %28, %77, %78 : vector<8x8xi1>, vector<8x8xf32>
    %cst_30 = arith.constant dense<0xFF800000> : vector<8xf32>
    %80 = vector.multi_reduction <maximumf>, %79, %cst_30 [1] : vector<8x8xf32> to vector<8xf32>
    %81 = vector.shape_cast %80 : vector<8xf32> to vector<8x1xf32>
    %82 = vector.broadcast %81 : vector<8x1xf32> to vector<8x8xf32>
    %83 = arith.subf %79, %82 : vector<8x8xf32>
    %84 = math.exp %83 : vector<8x8xf32>
    %cst_31 = arith.constant dense<0.000000e+00> : vector<8xf32>
    %85 = vector.multi_reduction <add>, %84, %cst_31 [1] : vector<8x8xf32> to vector<8xf32>
    %86 = vector.shape_cast %85 : vector<8xf32> to vector<8x1xf32>
    %87 = arith.truncf %84 : vector<8x8xf32> to vector<8x8xbf16>
    %cst_32 = arith.constant dense<0.000000e+00> : vector<8x32xf32>
    %88 = tpu.matmul %87, %76, %cst_32 {dimension_numbers = #tpu.dot_dimension_numbers<[1], [0], [0], [1], [0, 0, 1, 1], [], []>} : vector<8x8xbf16>, vector<8x32xbf16>, vector<8x32xf32> -> vector<8x32xf32>
    %89 = vector.broadcast %86 : vector<8x1xf32> to vector<8x32xf32>
    %90 = arith.divf %88, %89 : vector<8x32xf32>
    %91 = arith.truncf %90 : vector<8x32xf32> to vector<8x32xbf16>
    %c64 = arith.constant 64 : index
    %c0_33 = arith.constant 0 : index
    %92 = vector.load %arg4[%c64, %c0_33] : memref<128x128xbf16, #tpu.memory_space<vmem>>, vector<32x128xbf16>
    %cst_34 = arith.constant dense<0.000000e+00> : vector<8x128xf32>
    %93 = tpu.matmul %91, %92, %cst_34 {dimension_numbers = #tpu.dot_dimension_numbers<[1], [0], [0], [1], [0, 0, 1, 1], [], []>} : vector<8x32xbf16>, vector<32x128xbf16>, vector<8x128xf32> -> vector<8x128xf32>
    %94 = arith.addf %73, %93 : vector<8x128xf32>
    %95 = vector.extract_strided_slice %25 {offsets = [0, 96], sizes = [8, 32], strides = [1, 1]} : vector<8x384xbf16> to vector<8x32xbf16>
    %96 = vector.extract_strided_slice %25 {offsets = [0, 224], sizes = [8, 32], strides = [1, 1]} : vector<8x384xbf16> to vector<8x32xbf16>
    %97 = vector.extract_strided_slice %25 {offsets = [0, 352], sizes = [8, 32], strides = [1, 1]} : vector<8x384xbf16> to vector<8x32xbf16>
    %cst_35 = arith.constant dense<0.000000e+00> : vector<8x8xf32>
    %98 = tpu.matmul %95, %96, %cst_35 {dimension_numbers = #tpu.dot_dimension_numbers<[1], [1], [0], [0], [0, 0, 1, 0], [], []>} : vector<8x32xbf16>, vector<8x32xbf16>, vector<8x8xf32> -> vector<8x8xf32>
    %cst_36 = arith.constant -1.000000e+30 : f32
    %99 = vector.broadcast %cst_36 : f32 to vector<8x8xf32>
    %100 = arith.select %28, %98, %99 : vector<8x8xi1>, vector<8x8xf32>
    %cst_37 = arith.constant dense<0xFF800000> : vector<8xf32>
    %101 = vector.multi_reduction <maximumf>, %100, %cst_37 [1] : vector<8x8xf32> to vector<8xf32>
    %102 = vector.shape_cast %101 : vector<8xf32> to vector<8x1xf32>
    %103 = vector.broadcast %102 : vector<8x1xf32> to vector<8x8xf32>
    %104 = arith.subf %100, %103 : vector<8x8xf32>
    %105 = math.exp %104 : vector<8x8xf32>
    %cst_38 = arith.constant dense<0.000000e+00> : vector<8xf32>
    %106 = vector.multi_reduction <add>, %105, %cst_38 [1] : vector<8x8xf32> to vector<8xf32>
    %107 = vector.shape_cast %106 : vector<8xf32> to vector<8x1xf32>
    %108 = arith.truncf %105 : vector<8x8xf32> to vector<8x8xbf16>
    %cst_39 = arith.constant dense<0.000000e+00> : vector<8x32xf32>
    %109 = tpu.matmul %108, %97, %cst_39 {dimension_numbers = #tpu.dot_dimension_numbers<[1], [0], [0], [1], [0, 0, 1, 1], [], []>} : vector<8x8xbf16>, vector<8x32xbf16>, vector<8x32xf32> -> vector<8x32xf32>
    %110 = vector.broadcast %107 : vector<8x1xf32> to vector<8x32xf32>
    %111 = arith.divf %109, %110 : vector<8x32xf32>
    %112 = arith.truncf %111 : vector<8x32xf32> to vector<8x32xbf16>
    %c96 = arith.constant 96 : index
    %c0_40 = arith.constant 0 : index
    %113 = vector.load %arg4[%c96, %c0_40] : memref<128x128xbf16, #tpu.memory_space<vmem>>, vector<32x128xbf16>
    %cst_41 = arith.constant dense<0.000000e+00> : vector<8x128xf32>
    %114 = tpu.matmul %112, %113, %cst_41 {dimension_numbers = #tpu.dot_dimension_numbers<[1], [0], [0], [1], [0, 0, 1, 1], [], []>} : vector<8x32xbf16>, vector<32x128xbf16>, vector<8x128xf32> -> vector<8x128xf32>
    %115 = arith.addf %94, %114 : vector<8x128xf32>
    %cst_42 = arith.constant dense<0.000000e+00> : vector<8xf32>
    %116 = vector.multi_reduction <add>, %115, %cst_42 [1] : vector<8x128xf32> to vector<8xf32>
    %117 = vector.shape_cast %116 : vector<8xf32> to vector<8x1xf32>
    %cst_43 = arith.constant 1.280000e+02 : f32
    %118 = vector.broadcast %cst_43 : f32 to vector<8x1xf32>
    %119 = arith.divf %117, %118 : vector<8x1xf32>
    %120 = vector.broadcast %119 : vector<8x1xf32> to vector<8x128xf32>
    %121 = arith.subf %115, %120 : vector<8x128xf32>
    %122 = arith.mulf %121, %121 : vector<8x128xf32>
    %cst_44 = arith.constant dense<0.000000e+00> : vector<8xf32>
    %123 = vector.multi_reduction <add>, %122, %cst_44 [1] : vector<8x128xf32> to vector<8xf32>
    %124 = vector.shape_cast %123 : vector<8xf32> to vector<8x1xf32>
    %cst_45 = arith.constant 1.280000e+02 : f32
    %125 = vector.broadcast %cst_45 : f32 to vector<8x1xf32>
    %126 = arith.divf %124, %125 : vector<8x1xf32>
    %cst_46 = arith.constant 9.99999974E-6 : f32
    %127 = vector.broadcast %cst_46 : f32 to vector<8x1xf32>
    %128 = arith.addf %126, %127 : vector<8x1xf32>
    %129 = math.rsqrt %128 : vector<8x1xf32>
    %130 = vector.broadcast %129 : vector<8x1xf32> to vector<8x128xf32>
    %131 = arith.mulf %121, %130 : vector<8x128xf32>
    %132 = arith.truncf %131 : vector<8x128xf32> to vector<8x128xbf16>
    %c0_47 = arith.constant 0 : index
    %c0_48 = arith.constant 0 : index
    %133 = vector.load %arg6[%c0_47, %c0_48] : memref<128x512xbf16, #tpu.memory_space<vmem>>, vector<128x512xbf16>
    %cst_49 = arith.constant dense<0.000000e+00> : vector<8x512xf32>
    %134 = tpu.matmul %132, %133, %cst_49 {dimension_numbers = #tpu.dot_dimension_numbers<[1], [0], [0], [1], [0, 0, 1, 1], [], []>} : vector<8x128xbf16>, vector<128x512xbf16>, vector<8x512xf32> -> vector<8x512xf32>
    %c0_50 = arith.constant 0 : index
    %c0_51 = arith.constant 0 : index
    %135 = vector.load %arg7[%c0_50, %c0_51] : memref<1x512xf32, #tpu.memory_space<vmem>>, vector<1x512xf32>
    %136 = vector.broadcast %135 : vector<1x512xf32> to vector<8x512xf32>
    %137 = arith.addf %134, %136 : vector<8x512xf32>
    %cst_52 = arith.constant 1.702000e+00 : f32
    %138 = vector.broadcast %cst_52 : f32 to vector<8x512xf32>
    %139 = arith.mulf %138, %137 : vector<8x512xf32>
    %140 = arith.negf %139 : vector<8x512xf32>
    %141 = math.exp %140 : vector<8x512xf32>
    %cst_53 = arith.constant 1.000000e+00 : f32
    %142 = vector.broadcast %cst_53 : f32 to vector<8x512xf32>
    %143 = arith.addf %142, %141 : vector<8x512xf32>
    %144 = arith.divf %142, %143 : vector<8x512xf32>
    %145 = arith.mulf %137, %144 : vector<8x512xf32>
    %146 = arith.truncf %145 : vector<8x512xf32> to vector<8x512xbf16>
    %c0_54 = arith.constant 0 : index
    %c0_55 = arith.constant 0 : index
    %147 = vector.load %arg8[%c0_54, %c0_55] : memref<512x128xbf16, #tpu.memory_space<vmem>>, vector<512x128xbf16>
    %cst_56 = arith.constant dense<0.000000e+00> : vector<8x128xf32>
    %148 = tpu.matmul %146, %147, %cst_56 {dimension_numbers = #tpu.dot_dimension_numbers<[1], [0], [0], [1], [0, 0, 1, 1], [], []>} : vector<8x512xbf16>, vector<512x128xbf16>, vector<8x128xf32> -> vector<8x128xf32>
    %149 = arith.addf %115, %148 : vector<8x128xf32>
    %c0_57 = arith.constant 0 : index
    %c0_58 = arith.constant 0 : index
    %150 = vector.load %arg9[%c0_57, %c0_58] : memref<1x128xf32, #tpu.memory_space<vmem>>, vector<1x128xf32>
    %151 = vector.broadcast %150 : vector<1x128xf32> to vector<8x128xf32>
    %152 = arith.addf %149, %151 : vector<8x128xf32>
    %153 = arith.truncf %152 : vector<8x128xf32> to vector<8x128xbf16>
    %c0_59 = arith.constant 0 : index
    %c0_60 = arith.constant 0 : index
    %c0_61 = arith.constant 0 : index
    %154 = vector.load %arg10[%c0_59, %c0_60, %c0_61] : memref<1x8x128xbf16, #tpu.memory_space<vmem>>, vector<1x8x128xbf16>
    %155 = vector.shape_cast %154 : vector<1x8x128xbf16> to vector<8x128xbf16>
    %156 = vector.shape_cast %153 : vector<8x128xbf16> to vector<1x8x128xbf16>
    tpu.vector_store %arg10[%c0_59, %c0_60, %c0_61], %156 {strides = array<i32>} : memref<1x8x128xbf16, #tpu.memory_space<vmem>>, vector<1x8x128xbf16>,
    return
  }
  func.func @transform_0(%arg0: i32) -> (i32, i32, i32) {
    %c0_i32 = arith.constant 0 : i32
    %c0_i32_0 = arith.constant 0 : i32
    %c0_i32_1 = arith.constant 0 : i32
    return %arg0, %c0_i32, %c0_i32_0 : i32, i32, i32
  }
  func.func @transform_1(%arg0: i32) -> (i32, i32) {
    %c0_i32 = arith.constant 0 : i32
    %c0_i32_0 = arith.constant 0 : i32
    %c0_i32_1 = arith.constant 0 : i32
    return %c0_i32, %c0_i32_0 : i32, i32
  }
  func.func @transform_2(%arg0: i32) -> (i32, i32) {
    %c0_i32 = arith.constant 0 : i32
    %c0_i32_0 = arith.constant 0 : i32
    %c0_i32_1 = arith.constant 0 : i32
    return %c0_i32, %c0_i32_0 : i32, i32
  }
  func.func @transform_3(%arg0: i32) -> (i32, i32) {
    %c0_i32 = arith.constant 0 : i32
    %c0_i32_0 = arith.constant 0 : i32
    %c0_i32_1 = arith.constant 0 : i32
    return %c0_i32, %c0_i32_0 : i32, i32
  }
  func.func @transform_4(%arg0: i32) -> (i32, i32) {
    %c0_i32 = arith.constant 0 : i32
    %c0_i32_0 = arith.constant 0 : i32
    %c0_i32_1 = arith.constant 0 : i32
    return %c0_i32, %c0_i32_0 : i32, i32
  }
  func.func @transform_5(%arg0: i32) -> (i32, i32) {
    %c0_i32 = arith.constant 0 : i32
    %c0_i32_0 = arith.constant 0 : i32
    %c0_i32_1 = arith.constant 0 : i32
    return %c0_i32, %c0_i32_0 : i32, i32
  }
  func.func @transform_6(%arg0: i32) -> (i32, i32) {
    %c0_i32 = arith.constant 0 : i32
    %c0_i32_0 = arith.constant 0 : i32
    %c0_i32_1 = arith.constant 0 : i32
    return %c0_i32, %c0_i32_0 : i32, i32
  }
  func.func @transform_7(%arg0: i32) -> (i32, i32) {
    %c0_i32 = arith.constant 0 : i32
    %c0_i32_0 = arith.constant 0 : i32
    %c0_i32_1 = arith.constant 0 : i32
    return %c0_i32, %c0_i32_0 : i32, i32
  }
  func.func @transform_8(%arg0: i32) -> (i32, i32) {
    %c0_i32 = arith.constant 0 : i32
    %c0_i32_0 = arith.constant 0 : i32
    %c0_i32_1 = arith.constant 0 : i32
    return %c0_i32, %c0_i32_0 : i32, i32
  }
  func.func @transform_9(%arg0: i32) -> (i32, i32, i32) {
    %c0_i32 = arith.constant 0 : i32
    %c0_i32_0 = arith.constant 0 : i32
    %c0_i32_1 = arith.constant 0 : i32
    return %arg0, %c0_i32, %c0_i32_0 : i32, i32, i32
  }
}

module attributes {stable_mosaic.version = 11 : i64} {
  func.func @_matmul_nobias_kernel(%arg0: i32, %arg1: memref<2x128xf32, #tpu.memory_space<vmem>>, %arg2: memref<128x128xbf16, #tpu.memory_space<vmem>>, %arg3: memref<2x128xf32, #tpu.memory_space<vmem>>) attributes {dimension_semantics = [#tpu.dimension_semantics<arbitrary>], iteration_bounds = array<i64: 1>, scalar_prefetch = 0 : i64, scratch_operands = 0 : i64, tpu.core_type = #tpu.core_type<tc>, window_params = [{pipeline_mode = #tpu.pipeline_mode<synchronous>, transform_indices = @transform_0, window_bounds = array<i64: 2, 128>}, {pipeline_mode = #tpu.pipeline_mode<synchronous>, transform_indices = @transform_1, window_bounds = array<i64: 128, 128>}, {pipeline_mode = #tpu.pipeline_mode<synchronous>, transform_indices = @transform_2, window_bounds = array<i64: 2, 128>}]} {
    %c0 = arith.constant 0 : index
    %c0_0 = arith.constant 0 : index
    %0 = vector.load %arg1[%c0, %c0_0] : memref<2x128xf32, #tpu.memory_space<vmem>>, vector<2x128xf32>
    %1 = arith.truncf %0 : vector<2x128xf32> to vector<2x128xbf16>
    %c0_1 = arith.constant 0 : index
    %c0_2 = arith.constant 0 : index
    %2 = vector.load %arg2[%c0_1, %c0_2] : memref<128x128xbf16, #tpu.memory_space<vmem>>, vector<128x128xbf16>
    %cst = arith.constant dense<0.000000e+00> : vector<2x128xf32>
    %3 = tpu.matmul %1, %2, %cst {dimension_numbers = #tpu.dot_dimension_numbers<[1], [0], [0], [1], [0, 0, 1, 1], [], []>} : vector<2x128xbf16>, vector<128x128xbf16>, vector<2x128xf32> -> vector<2x128xf32>
    %c0_3 = arith.constant 0 : index
    %c0_4 = arith.constant 0 : index
    %4 = vector.load %arg3[%c0_3, %c0_4] : memref<2x128xf32, #tpu.memory_space<vmem>>, vector<2x128xf32>
    tpu.vector_store %arg3[%c0_3, %c0_4], %3 {strides = array<i32>} : memref<2x128xf32, #tpu.memory_space<vmem>>, vector<2x128xf32>,
    return
  }
  func.func @transform_0(%arg0: i32) -> (i32, i32) {
    %c0_i32 = arith.constant 0 : i32
    %c0_i32_0 = arith.constant 0 : i32
    %c0_i32_1 = arith.constant 0 : i32
    return %c0_i32, %c0_i32_0 : i32, i32
  }
  func.func @transform_1(%arg0: i32) -> (i32, i32) {
    %c0_i32 = arith.constant 0 : i32
    %c0_i32_0 = arith.constant 0 : i32
    %c0_i32_1 = arith.constant 0 : i32
    return %c0_i32, %c0_i32_0 : i32, i32
  }
  func.func @transform_2(%arg0: i32) -> (i32, i32) {
    %c0_i32 = arith.constant 0 : i32
    %c0_i32_0 = arith.constant 0 : i32
    %c0_i32_1 = arith.constant 0 : i32
    return %c0_i32, %c0_i32_0 : i32, i32
  }
}

</mosaic_0001>

<llo_original>
// kernel: clip_text_forward.7
$region0: #{clip_text_forward.7}
  #allocation0 [shape = 'u32[]', space=smem, size = 0x4, offset = 0x4, fixed_abs, tag = 'smem constant byte address 0x4 - core index']
  #allocation1 [shape = 'u32[144,128]{1,0:T(1,128)}', space=vmem, size = 0x12000, scoped, tag = 'internal scratch']
  %s0 = inlined_call_operand.vmem [shape: f32[2,128], index: 0, kind: input, shape index: {}]
  %s1 = inlined_call_operand.vmem [shape: bf16[128,128], index: 1, kind: input, shape index: {}]
  %s2 = inlined_call_operand.hbm [shape: f32[2,128], index: 2, kind: output, shape index: {}]
  %s3 = sld [smem:[#allocation0]]
  $region18: #{clip_text_forward.7} parent=0
    _
  %s5 = ssub.s32 1, %s3
  %s6 = scalar_select 0, %s5, %s3
  $region1: #{clip_text_forward.7} parent=0
    #allocation2 [shape = 'u8[1024]{0}', space=vmem, size = 0x400, scoped, tag = 'output window, operand 0, single buffered']
    #allocation3 [shape = 's32[1]{0}', space=sflag, size = 0x4, scoped, tag = 'scoped memory for clip_text_forward.7']
    %7 = vsyncpa [#allocation3], 0
    // Predicated region
    $region2: #{clip_text_forward.7} parent=1 // pred_check
      _
    $region3: #{clip_text_forward.7} parent=1 // pred_check_branch
      %9 = sbr.rel (0) target = $region5
    $region4: #{clip_text_forward.7} parent=1 // pred_region
      _
    $region5: #{clip_text_forward.7} parent=1 // pred_fallthru
      _
    // Predicated region
    $region6: #{clip_text_forward.7} parent=1 // pred_check
      _
    $region7: #{clip_text_forward.7} parent=1 // pred_check_branch
      %11 = sbr.rel (0) target = $region9
    $region8: #{clip_text_forward.7} parent=1 // pred_region
      _
    $region9: #{clip_text_forward.7} parent=1 // pred_fallthru
      _
    %v13 = vld [vmem:[%s0] sm:$0x3]
    %v14 = vpack.c.bf16 %v13, %v13
    %v15 = vld [vmem:[%s1] sm:$0xf]
    %v16 = vld [vmem:[%s1 + $0x4] sm:$0xf]
    %v17 = vld [vmem:[%s1 + $0x8] sm:$0xf]
    %v18 = vld [vmem:[%s1 + $0xc] sm:$0xf]
    %v19 = vld [vmem:[%s1 + $0x10] sm:$0xf]
    %v20 = vld [vmem:[%s1 + $0x14] sm:$0xf]
    %v21 = vld [vmem:[%s1 + $0x18] sm:$0xf]
    %v22 = vld [vmem:[%s1 + $0x1c] sm:$0xf]
    %v23 = vld [vmem:[%s1 + $0x20] sm:$0xf]
    %v24 = vld [vmem:[%s1 + $0x24] sm:$0xf]
    %v25 = vld [vmem:[%s1 + $0x28] sm:$0xf]
    %v26 = vld [vmem:[%s1 + $0x2c] sm:$0xf]
    %v27 = vld [vmem:[%s1 + $0x30] sm:$0xf]
    %v28 = vld [vmem:[%s1 + $0x34] sm:$0xf]
    %v29 = vld [vmem:[%s1 + $0x38] sm:$0xf]
    %v30 = vld [vmem:[%s1 + $0x3c] sm:$0xf]
    %v47 = vunpack.c.l.b16 %v15
    %v48 = vunpack.c.l.b16 %v16
    %v49 = vunpack.c.l.b16 %v17
    %v50 = vunpack.c.l.b16 %v18
    %v51 = vunpack.c.l.b16 %v19
    %v52 = vunpack.c.l.b16 %v20
    %v53 = vunpack.c.l.b16 %v21
    %v54 = vunpack.c.l.b16 %v22
    %v55 = vunpack.c.l.b16 %v23
    %v56 = vunpack.c.l.b16 %v24
    %v57 = vunpack.c.l.b16 %v25
    %v58 = vunpack.c.l.b16 %v26
    %v59 = vunpack.c.l.b16 %v27
    %v60 = vunpack.c.l.b16 %v28
    %v61 = vunpack.c.l.b16 %v29
    %v62 = vunpack.c.l.b16 %v30
    %v63 = vpack.c.b16 %v48, %v47
    %v64 = vpack.c.b16 %v50, %v49
    %v65 = vpack.c.b16 %v52, %v51
    %v66 = vpack.c.b16 %v54, %v53
    %v67 = vpack.c.b16 %v56, %v55
    %v68 = vpack.c.b16 %v58, %v57
    %v69 = vpack.c.b16 %v60, %v59
    %v70 = vpack.c.b16 %v62, %v61
    %79 = vmatprep.subr.bf16.mxu0 0
    %80 = vmatpush1.bf16.msra.mxu0 %v70
    %81 = vmatprep.subr.bf16.mxu0 0
    %82 = vmatpush1.bf16.msra.mxu0 %v69
    %83 = vmatprep.subr.bf16.mxu0 0
    %84 = vmatpush1.bf16.msra.mxu0 %v68
    %85 = vmatprep.subr.bf16.mxu0 0
    %86 = vmatpush1.bf16.msra.mxu0 %v67
    %87 = vmatprep.subr.bf16.mxu0 0
    %88 = vmatpush1.bf16.msra.mxu0 %v66
    %89 = vmatprep.subr.bf16.mxu0 0
    %90 = vmatpush1.bf16.msra.mxu0 %v65
    %91 = vmatprep.subr.bf16.mxu0 0
    %92 = vmatpush1.bf16.msra.mxu0 %v64
    %93 = vmatprep.subr.bf16.mxu0 0
    %94 = vmatpush1.bf16.msra.mxu0 %v63
    %95 = vmatprep.subr.bf16.mxu0 0
    %96 = vmatpush2.bf16.msra.mxu0 0
    %97 = vmatprep.subr.bf16.mxu0 0
    %98 = vmatpush2.bf16.msra.mxu0 0
    %99 = vmatprep.subr.bf16.mxu0 0
    %100 = vmatpush2.bf16.msra.mxu0 0
    %101 = vmatprep.subr.bf16.mxu0 0
    %102 = vmatpush2.bf16.msra.mxu0 0
    %103 = vmatprep.subr.bf16.mxu0 0
    %104 = vmatpush2.bf16.msra.mxu0 0
    %105 = vmatprep.subr.bf16.mxu0 0
    %106 = vmatpush2.bf16.msra.mxu0 0
    %107 = vmatprep.subr.bf16.mxu0 0
    %108 = vmatpush2.bf16.msra.mxu0 0
    %109 = vmatprep.subr.bf16.mxu0 0
    %110 = vmatpush2.bf16.msra.mxu0 0
    %111 = vmatprep.mubr.bf16.mxu0 0
    %112 = vmatmul.mubr.bf16.gmra.mxu0 %v14
    %v113 = vpop.f32.mrf.mxu0
    %v114 = vadd.f32 0.0, %v113
    %v115 = vpop.f32.mrf.mxu0
    %v116 = vpop.f32.mrf.mxu0
    %v117 = vpop.f32.mrf.mxu0
    %118 = vdwg.mxu0
    %119 = vst [vmem:[#allocation2] sm:$0x3] %v114
    // Predicated region
    $region10: #{clip_text_forward.7} parent=1 // pred_check
      _
    $region11: #{clip_text_forward.7} parent=1 // pred_check_branch
      %121 = sbr.rel (0) target = $region13
    $region12: #{clip_text_forward.7} parent=1 // pred_region
      %s123 = ssub.s32 32, 32
      %124 = vsyncadd [#allocation3], %s123
      %s126 = sshll.u32 [#allocation2], 4
      %s127 = int_to_ptr.vmem [resolvable:$true] %s126
      %129 = dma.vmem_to_hbm [thread:$0]  %s127, 32, %s2, [#allocation3]
    $region13: #{clip_text_forward.7} parent=1 // pred_fallthru
      _
    // Predicated region
    $region14: #{clip_text_forward.7} parent=1 // pred_check
      _
    $region15: #{clip_text_forward.7} parent=1 // pred_check_branch
      %131 = sbr.rel (0) target = $region17
    $region16: #{clip_text_forward.7} parent=1 // pred_region
      %132 = dma.done [#allocation3], 32
    $region17: #{clip_text_forward.7} parent=1 // pred_fallthru
      _
    %133 = vsyncpa [#allocation3], 1

// kernel: clip_text_forward.6
$region0: #{clip_text_forward.6}
  #allocation0 [shape = 'u32[]', space=smem, size = 0x4, offset = 0x4, fixed_abs, tag = 'smem constant byte address 0x4 - core index']
  #allocation1 [shape = 'u32[144,128]{1,0:T(1,128)}', space=vmem, size = 0x12000, scoped, tag = 'internal scratch']
  %s0 = inlined_call_operand.vmem [shape: bf16[16,128], index: 0, kind: input, shape index: {}]
  %s1 = inlined_call_operand.vmem [shape: f32[1,128], index: 1, kind: input, shape index: {}]
  %s2 = inlined_call_operand.vmem [shape: f32[1,128], index: 2, kind: input, shape index: {}]
  %s3 = inlined_call_operand.vmem [shape: f32[16,128], index: 3, kind: output, shape index: {}]
  %s4 = sld [smem:[#allocation0]]
  $region45: #{clip_text_forward.6} parent=0
    _
  %s6 = ssub.s32 1, %s4
  %s7 = scalar_select 0, %s6, %s4
  loop: start=0, step=1, limit=4
  $region2: #{clip_text_forward.6} parent=0 // loop_pre_header
    _
  $region3: #{clip_text_forward.6} parent=0 // loop_header
    %s9 = sphi 0, %s13
    %p10 = scmp.ge.s32.totalorder %s9, 4
    %s19 = sphi 0, %s21
    %s22 = sphi 0, %s19
    %s23 = sphi 0, %s22
    %s39 = sphi 0, %s23
    %s43 = sphi 0, %s43
    %s45 = sphi 0, %s43
    %s46 = sphi 0, %s45
    %s60 = sphi 0, %s46
    %s64 = sphi 0, %s64
    %s66 = sphi 0, %s64
    %s67 = sphi 0, %s66
    %s81 = sphi 0, %s67
    %s87 = sphi 0, %s89
    %s90 = sphi 0, %s87
    %s91 = sphi 0, %s90
    %s107 = sphi 0, %s91
  $region4: #{clip_text_forward.6} parent=0 // loop_header_branch
    %12 = sbr.rel (%p10) target = $region8
  $region5: #{clip_text_forward.6} parent=0 // loop_body
    %s14 = ssub.s32 %s9, 1
    %s15 = ssub.s32 %s9, 2
    %s16 = sadd.s32 %s9, 1
    %s17 = ssub.s32 %s9, %s16
    %p18 = scmp.eq.s32.totalorder %s17, 0
    %s20 = sadd.s32 %s19, 1
    %s21 = scalar_select %p18, %s19, %s20
    %p24 = pneg %p18
    %p25 = scmp.eq.s32.totalorder %s9, 1
    %p26 = por %p24, %p25
    %p27 = scmp.ne.s32.totalorder %s19, %s22
    %p28 = scmp.eq.s32.totalorder %s9, 0
    %p29 = por %p27, %p28
    %p30 = scmp.ne.s32.totalorder %s19, %s22
    %p31 = scmp.eq.s32.totalorder %s14, 1
    %p32 = por %p30, %p31
    %p33 = scmp.ne.s32.totalorder %s22, %s23
    %p34 = scmp.eq.s32.totalorder %s14, 0
    %p35 = por %p33, %p34
    %p36 = scmp.ne.s32.totalorder %s22, %s23
    %p37 = scmp.eq.s32.totalorder %s15, 1
    %p38 = por %p36, %p37
    %p40 = scmp.ne.s32.totalorder %s23, %s39
    %p41 = scmp.eq.s32.totalorder %s15, 0
    %p42 = por %p40, %p41
    %s44 = sadd.s32 %s43, 1
    %p47 = scmp.eq.s32.totalorder %s9, 1
    %p48 = scmp.ne.s32.totalorder %s43, %s45
    %p49 = scmp.eq.s32.totalorder %s9, 0
    %p50 = por %p48, %p49
    %p51 = scmp.ne.s32.totalorder %s43, %s45
    %p52 = scmp.eq.s32.totalorder %s14, 1
    %p53 = por %p51, %p52
    %p54 = scmp.ne.s32.totalorder %s45, %s46
    %p55 = scmp.eq.s32.totalorder %s14, 0
    %p56 = por %p54, %p55
    %p57 = scmp.ne.s32.totalorder %s45, %s46
    %p58 = scmp.eq.s32.totalorder %s15, 1
    %p59 = por %p57, %p58
    %p61 = scmp.ne.s32.totalorder %s46, %s60
    %p62 = scmp.eq.s32.totalorder %s15, 0
    %p63 = por %p61, %p62
    %s65 = sadd.s32 %s64, 1
    %p68 = scmp.eq.s32.totalorder %s9, 1
    %p69 = scmp.ne.s32.totalorder %s64, %s66
    %p70 = scmp.eq.s32.totalorder %s9, 0
    %p71 = por %p69, %p70
    %p72 = scmp.ne.s32.totalorder %s64, %s66
    %p73 = scmp.eq.s32.totalorder %s14, 1
    %p74 = por %p72, %p73
    %p75 = scmp.ne.s32.totalorder %s66, %s67
    %p76 = scmp.eq.s32.totalorder %s14, 0
    %p77 = por %p75, %p76
    %p78 = scmp.ne.s32.totalorder %s66, %s67
    %p79 = scmp.eq.s32.totalorder %s15, 1
    %p80 = por %p78, %p79
    %p82 = scmp.ne.s32.totalorder %s67, %s81
    %p83 = scmp.eq.s32.totalorder %s15, 0
    %p84 = por %p82, %p83
    %s85 = ssub.s32 %s9, %s16
    %p86 = scmp.eq.s32.totalorder %s85, 0
    %s88 = sadd.s32 %s87, 1
    %s89 = scalar_select %p86, %s87, %s88
    %p92 = pneg %p86
    %p93 = scmp.eq.s32.totalorder %s9, 1
    %p94 = por %p92, %p93
    %p95 = scmp.ne.s32.totalorder %s87, %s90
    %p96 = scmp.eq.s32.totalorder %s9, 0
    %p97 = por %p95, %p96
    %p98 = scmp.ne.s32.totalorder %s87, %s90
    %p99 = scmp.eq.s32.totalorder %s14, 1
    %p100 = por %p98, %p99
    %p101 = scmp.ne.s32.totalorder %s90, %s91
    %p102 = scmp.eq.s32.totalorder %s14, 0
    %p103 = por %p101, %p102
    %p104 = scmp.ne.s32.totalorder %s90, %s91
    %p105 = scmp.eq.s32.totalorder %s15, 1
    %p106 = por %p104, %p105
    %p108 = scmp.ne.s32.totalorder %s91, %s107
    %p109 = scmp.eq.s32.totalorder %s15, 0
    %p110 = por %p108, %p109
    %p111 = scmp.le.s32.totalorder 1, %s9
    %p112 = scmp.lt.s32.totalorder %s9, 3
    %p113 = pnand %p111, %p112
    %p114 = pneg %p113
    // Predicated region
    $region9: #{clip_text_forward.6} parent=5 // pred_check
      _
    $region10: #{clip_text_forward.6} parent=5 // pred_check_branch
      %116 = sbr.rel (%p113) target = $region12
    $region11: #{clip_text_forward.6} parent=5 // pred_region
      %s117 = ssub.s32 %s9, 1
      // Predicated region
      $region13: #{clip_text_forward.6} parent=11 // pred_check
        %p118 = pneg %p56
      $region14: #{clip_text_forward.6} parent=11 // pred_check_branch
        %120 = sbr.rel (%p118) target = $region16
      $region15: #{clip_text_forward.6} parent=11 // pred_region
        _
      $region16: #{clip_text_forward.6} parent=11 // pred_fallthru
        _
      // Predicated region
      $region17: #{clip_text_forward.6} parent=11 // pred_check
        %p121 = pneg %p77
      $region18: #{clip_text_forward.6} parent=11 // pred_check_branch
        %123 = sbr.rel (%p121) target = $region20
      $region19: #{clip_text_forward.6} parent=11 // pred_region
        _
      $region20: #{clip_text_forward.6} parent=11 // pred_fallthru
        _
    $region12: #{clip_text_forward.6} parent=5 // pred_fallthru
      _
    %p124 = scmp.lt.s32.totalorder %s9, 2
    // Predicated region
    $region21: #{clip_text_forward.6} parent=5 // pred_check
      %p125 = pneg %p124
    $region22: #{clip_text_forward.6} parent=5 // pred_check_branch
      %127 = sbr.rel (%p125) target = $region24
    $region23: #{clip_text_forward.6} parent=5 // pred_region
      // Predicated region
      $region25: #{clip_text_forward.6} parent=23 // pred_check
        %p128 = pneg %p29
      $region26: #{clip_text_forward.6} parent=23 // pred_check_branch
        %130 = sbr.rel (%p128) target = $region28
      $region27: #{clip_text_forward.6} parent=23 // pred_region
        %p131 = scmp.lt.s32.totalorder %s9, 1
        %s132 = scalar_select %p131, %s9, 1
        %s133 = smul.addr %s132, 4
        %s134 = scalar_lea.vmem %s0, %s133
      $region28: #{clip_text_forward.6} parent=23 // pred_fallthru
        _
    $region24: #{clip_text_forward.6} parent=5 // pred_fallthru
      _
    %p135 = scmp.le.s32.totalorder 1, %s9
    %p136 = scmp.lt.s32.totalorder %s9, 3
    %p137 = pnand %p135, %p136
    %p138 = pneg %p137
    // Predicated region
    $region29: #{clip_text_forward.6} parent=5 // pred_check
      _
    $region30: #{clip_text_forward.6} parent=5 // pred_check_branch
      %140 = sbr.rel (%p137) target = $region32
    $region31: #{clip_text_forward.6} parent=5 // pred_region
      %s141 = ssub.s32 %s9, 1
      %p142 = scmp.lt.s32.totalorder %s14, 1
      %s143 = scalar_select %p142, %s14, 1
      %s144 = smul.addr %s143, 4
      %s145 = scalar_lea.vmem %s0, %s144
      %p146 = pneg %p35
      %p147 = pneg %p32
      %p148 = pneg %p56
      %p149 = pneg %p53
      %p150 = pneg %p77
      %p151 = pneg %p74
      %p152 = pneg %p103
      %p153 = pneg %p100
      %p154 = scmp.lt.s32.totalorder %s14, 1
      %s155 = scalar_select %p154, %s14, 1
      %s156 = smul.addr %s155, 8
      %s157 = scalar_lea.vmem %s3, %s156
      %p158 = scmp.lt.s32.totalorder %s14, 1
      %s159 = scalar_select %p158, %s14, 1
      %s160 = smul.addr %s159, 4
      %s161 = scalar_lea.vmem %s0, %s160
      %p162 = scmp.lt.s32.totalorder %s14, 1
      %s163 = scalar_select %p162, %s14, 1
      %s164 = smul.addr %s163, 8
      %s165 = scalar_lea.vmem %s3, %s164
      %v166 = vld [vmem:[%s161] sm:$0xf]
      %v167 = vunpack.c.l.bf16 %v166
      %168 = vadd.xlane.f32.xlu0 %v167
      %v169 = vpop.xlane.xlu0 %168
      %v170 = vrcp.pop 128.0
      %v171 = vmul.f32 %v169, %v170
      %v172 = vsub.f32 %v167, %v171
      %v173 = vmul.f32 %v172, %v172
      %174 = vadd.xlane.f32.xlu0 %v173
      %v175 = vpop.xlane.xlu0 %174
      %v176 = vmul.f32 %v175, %v170
      %v177 = vadd.f32 %v176, 1e-05
      %v178 = vrsqrt.pop %v177
      %v179 = vmul.f32 %v172, %v178
      %v180 = vld [vmem:[%s1] sm:$0x1]
      %v182 = vlaneseq
      %v183 = vshrl.u32 %v182, 7
      %v184 = vsub.s32 0, %v183
      %v185 = vrot.slane %v180, %v184
      %v187 = vmul.f32 %v179, %v185
      %v188 = vld [vmem:[%s2] sm:$0x1]
      %v190 = vlaneseq
      %v191 = vshrl.u32 %v190, 7
      %v192 = vsub.s32 0, %v191
      %v193 = vrot.slane %v188, %v192
      %v195 = vadd.f32 %v187, %v193
      %196 = vst [vmem:[%s165] sm:$0xff] %v195
      %p197 = scmp.lt.s32.totalorder %s14, 1
      %s198 = scalar_select %p197, %s14, 1
      %s199 = smul.addr %s198, 8
      %s200 = scalar_lea.vmem %s3, %s199
      // Predicated region
      $region33: #{clip_text_forward.6} parent=31 // pred_check
        %p201 = pneg %p100
      $region34: #{clip_text_forward.6} parent=31 // pred_check_branch
        %203 = sbr.rel (%p201) target = $region36
      $region35: #{clip_text_forward.6} parent=31 // pred_region
        _
      $region36: #{clip_text_forward.6} parent=31 // pred_fallthru
        _
    $region32: #{clip_text_forward.6} parent=5 // pred_fallthru
      _
    %p204 = scmp.le.s32.totalorder 2, %s9
    // Predicated region
    $region37: #{clip_text_forward.6} parent=5 // pred_check
      %p205 = pneg %p204
    $region38: #{clip_text_forward.6} parent=5 // pred_check_branch
      %207 = sbr.rel (%p205) target = $region40
    $region39: #{clip_text_forward.6} parent=5 // pred_region
      %s208 = ssub.s32 %s9, 2
      // Predicated region
      $region41: #{clip_text_forward.6} parent=39 // pred_check
        %p209 = pneg %p106
      $region42: #{clip_text_forward.6} parent=39 // pred_check_branch
        %211 = sbr.rel (%p209) target = $region44
      $region43: #{clip_text_forward.6} parent=39 // pred_region
        %p212 = scmp.lt.s32.totalorder %s15, 1
        %s213 = scalar_select %p212, %s15, 1
        %s214 = smul.addr %s213, 8
        %s215 = scalar_lea.vmem %s3, %s214
      $region44: #{clip_text_forward.6} parent=39 // pred_fallthru
        _
    $region40: #{clip_text_forward.6} parent=5 // pred_fallthru
      _
  $region6: #{clip_text_forward.6} parent=0 // loop_footer
    %s13 = sadd.s32 1, %s9
  $region7: #{clip_text_forward.6} parent=0 // loop_footer_branch
    %8 = sbr.rel target = $region3
  $region8: #{clip_text_forward.6} parent=0 // loop_exit
    _

// kernel: clip_text_forward.5
$region0: #{clip_text_forward.5}
  #allocation0 [shape = 'u32[]', space=smem, size = 0x4, offset = 0x4, fixed_abs, tag = 'smem constant byte address 0x4 - core index']
  #allocation1 [shape = 'u32[144,128]{1,0:T(1,128)}', space=vmem, size = 0x12000, scoped, tag = 'internal scratch']
  %s0 = inlined_call_operand.vmem [shape: bf16[2,8,128], index: 0, kind: input, shape index: {}]
  %s1 = inlined_call_operand.vmem [shape: bf16[128,384], index: 1, kind: input, shape index: {}]
  %s2 = inlined_call_operand.vmem [shape: f32[1,384], index: 2, kind: input, shape index: {}]
  %s3 = inlined_call_operand.vmem [shape: bf16[128,128], index: 3, kind: input, shape index: {}]
  %s4 = inlined_call_operand.vmem [shape: f32[1,128], index: 4, kind: input, shape index: {}]
  %s5 = inlined_call_operand.vmem [shape: bf16[128,512], index: 5, kind: input, shape index: {}]
  %s6 = inlined_call_operand.vmem [shape: f32[1,512], index: 6, kind: input, shape index: {}]
  %s7 = inlined_call_operand.vmem [shape: bf16[512,128], index: 7, kind: input, shape index: {}]
  %s8 = inlined_call_operand.vmem [shape: f32[1,128], index: 8, kind: input, shape index: {}]
  %s9 = inlined_call_operand.vmem [shape: bf16[2,8,128], index: 9, kind: output, shape index: {}]
  %s10 = sld [smem:[#allocation0]]
  $region69: #{clip_text_forward.5} parent=0
    _
  %s12 = ssub.s32 1, %s10
  %s13 = scalar_select 0, %s12, %s10
  loop: start=0, step=1, limit=4
  $region2: #{clip_text_forward.5} parent=0 // loop_pre_header
    _
  $region3: #{clip_text_forward.5} parent=0 // loop_header
    %s15 = sphi 0, %s19
    %p16 = scmp.ge.s32.totalorder %s15, 4
    %s25 = sphi 0, %s27
    %s28 = sphi 0, %s25
    %s29 = sphi 0, %s28
    %s45 = sphi 0, %s29
    %s49 = sphi 0, %s49
    %s51 = sphi 0, %s49
    %s52 = sphi 0, %s51
    %s66 = sphi 0, %s52
    %s70 = sphi 0, %s70
    %s72 = sphi 0, %s70
    %s73 = sphi 0, %s72
    %s87 = sphi 0, %s73
    %s91 = sphi 0, %s91
    %s93 = sphi 0, %s91
    %s94 = sphi 0, %s93
    %s108 = sphi 0, %s94
    %s112 = sphi 0, %s112
    %s114 = sphi 0, %s112
    %s115 = sphi 0, %s114
    %s129 = sphi 0, %s115
    %s133 = sphi 0, %s133
    %s135 = sphi 0, %s133
    %s136 = sphi 0, %s135
    %s150 = sphi 0, %s136
    %s154 = sphi 0, %s154
    %s156 = sphi 0, %s154
    %s157 = sphi 0, %s156
    %s171 = sphi 0, %s157
    %s175 = sphi 0, %s175
    %s177 = sphi 0, %s175
    %s178 = sphi 0, %s177
    %s192 = sphi 0, %s178
    %s196 = sphi 0, %s196
    %s198 = sphi 0, %s196
    %s199 = sphi 0, %s198
    %s213 = sphi 0, %s199
    %s219 = sphi 0, %s221
    %s222 = sphi 0, %s219
    %s223 = sphi 0, %s222
    %s239 = sphi 0, %s223
  $region4: #{clip_text_forward.5} parent=0 // loop_header_branch
    %18 = sbr.rel (%p16) target = $region8
  $region5: #{clip_text_forward.5} parent=0 // loop_body
    %s20 = ssub.s32 %s15, 1
    %s21 = ssub.s32 %s15, 2
    %s22 = sadd.s32 %s15, 1
    %s23 = ssub.s32 %s15, %s22
    %p24 = scmp.eq.s32.totalorder %s23, 0
    %s26 = sadd.s32 %s25, 1
    %s27 = scalar_select %p24, %s25, %s26
    %p30 = pneg %p24
    %p31 = scmp.eq.s32.totalorder %s15, 1
    %p32 = por %p30, %p31
    %p33 = scmp.ne.s32.totalorder %s25, %s28
    %p34 = scmp.eq.s32.totalorder %s15, 0
    %p35 = por %p33, %p34
    %p36 = scmp.ne.s32.totalorder %s25, %s28
    %p37 = scmp.eq.s32.totalorder %s20, 1
    %p38 = por %p36, %p37
    %p39 = scmp.ne.s32.totalorder %s28, %s29
    %p40 = scmp.eq.s32.totalorder %s20, 0
    %p41 = por %p39, %p40
    %p42 = scmp.ne.s32.totalorder %s28, %s29
    %p43 = scmp.eq.s32.totalorder %s21, 1
    %p44 = por %p42, %p43
    %p46 = scmp.ne.s32.totalorder %s29, %s45
    %p47 = scmp.eq.s32.totalorder %s21, 0
    %p48 = por %p46, %p47
    %s50 = sadd.s32 %s49, 1
    %p53 = scmp.eq.s32.totalorder %s15, 1
    %p54 = scmp.ne.s32.totalorder %s49, %s51
    %p55 = scmp.eq.s32.totalorder %s15, 0
    %p56 = por %p54, %p55
    %p57 = scmp.ne.s32.totalorder %s49, %s51
    %p58 = scmp.eq.s32.totalorder %s20, 1
    %p59 = por %p57, %p58
    %p60 = scmp.ne.s32.totalorder %s51, %s52
    %p61 = scmp.eq.s32.totalorder %s20, 0
    %p62 = por %p60, %p61
    %p63 = scmp.ne.s32.totalorder %s51, %s52
    %p64 = scmp.eq.s32.totalorder %s21, 1
    %p65 = por %p63, %p64
    %p67 = scmp.ne.s32.totalorder %s52, %s66
    %p68 = scmp.eq.s32.totalorder %s21, 0
    %p69 = por %p67, %p68
    %s71 = sadd.s32 %s70, 1
    %p74 = scmp.eq.s32.totalorder %s15, 1
    %p75 = scmp.ne.s32.totalorder %s70, %s72
    %p76 = scmp.eq.s32.totalorder %s15, 0
    %p77 = por %p75, %p76
    %p78 = scmp.ne.s32.totalorder %s70, %s72
    %p79 = scmp.eq.s32.totalorder %s20, 1
    %p80 = por %p78, %p79
    %p81 = scmp.ne.s32.totalorder %s72, %s73
    %p82 = scmp.eq.s32.totalorder %s20, 0
    %p83 = por %p81, %p82
    %p84 = scmp.ne.s32.totalorder %s72, %s73
    %p85 = scmp.eq.s32.totalorder %s21, 1
    %p86 = por %p84, %p85
    %p88 = scmp.ne.s32.totalorder %s73, %s87
    %p89 = scmp.eq.s32.totalorder %s21, 0
    %p90 = por %p88, %p89
    %s92 = sadd.s32 %s91, 1
    %p95 = scmp.eq.s32.totalorder %s15, 1
    %p96 = scmp.ne.s32.totalorder %s91, %s93
    %p97 = scmp.eq.s32.totalorder %s15, 0
    %p98 = por %p96, %p97
    %p99 = scmp.ne.s32.totalorder %s91, %s93
    %p100 = scmp.eq.s32.totalorder %s20, 1
    %p101 = por %p99, %p100
    %p102 = scmp.ne.s32.totalorder %s93, %s94
    %p103 = scmp.eq.s32.totalorder %s20, 0
    %p104 = por %p102, %p103
    %p105 = scmp.ne.s32.totalorder %s93, %s94
    %p106 = scmp.eq.s32.totalorder %s21, 1
    %p107 = por %p105, %p106
    %p109 = scmp.ne.s32.totalorder %s94, %s108
    %p110 = scmp.eq.s32.totalorder %s21, 0
    %p111 = por %p109, %p110
    %s113 = sadd.s32 %s112, 1
    %p116 = scmp.eq.s32.totalorder %s15, 1
    %p117 = scmp.ne.s32.totalorder %s112, %s114
    %p118 = scmp.eq.s32.totalorder %s15, 0
    %p119 = por %p117, %p118
    %p120 = scmp.ne.s32.totalorder %s112, %s114
    %p121 = scmp.eq.s32.totalorder %s20, 1
    %p122 = por %p120, %p121
    %p123 = scmp.ne.s32.totalorder %s114, %s115
    %p124 = scmp.eq.s32.totalorder %s20, 0
    %p125 = por %p123, %p124
    %p126 = scmp.ne.s32.totalorder %s114, %s115
    %p127 = scmp.eq.s32.totalorder %s21, 1
    %p128 = por %p126, %p127
    %p130 = scmp.ne.s32.totalorder %s115, %s129
    %p131 = scmp.eq.s32.totalorder %s21, 0
    %p132 = por %p130, %p131
    %s134 = sadd.s32 %s133, 1
    %p137 = scmp.eq.s32.totalorder %s15, 1
    %p138 = scmp.ne.s32.totalorder %s133, %s135
    %p139 = scmp.eq.s32.totalorder %s15, 0
    %p140 = por %p138, %p139
    %p141 = scmp.ne.s32.totalorder %s133, %s135
    %p142 = scmp.eq.s32.totalorder %s20, 1
    %p143 = por %p141, %p142
    %p144 = scmp.ne.s32.totalorder %s135, %s136
    %p145 = scmp.eq.s32.totalorder %s20, 0
    %p146 = por %p144, %p145
    %p147 = scmp.ne.s32.totalorder %s135, %s136
    %p148 = scmp.eq.s32.totalorder %s21, 1
    %p149 = por %p147, %p148
    %p151 = scmp.ne.s32.totalorder %s136, %s150
    %p152 = scmp.eq.s32.totalorder %s21, 0
    %p153 = por %p151, %p152
    %s155 = sadd.s32 %s154, 1
    %p158 = scmp.eq.s32.totalorder %s15, 1
    %p159 = scmp.ne.s32.totalorder %s154, %s156
    %p160 = scmp.eq.s32.totalorder %s15, 0
    %p161 = por %p159, %p160
    %p162 = scmp.ne.s32.totalorder %s154, %s156
    %p163 = scmp.eq.s32.totalorder %s20, 1
    %p164 = por %p162, %p163
    %p165 = scmp.ne.s32.totalorder %s156, %s157
    %p166 = scmp.eq.s32.totalorder %s20, 0
    %p167 = por %p165, %p166
    %p168 = scmp.ne.s32.totalorder %s156, %s157
    %p169 = scmp.eq.s32.totalorder %s21, 1
    %p170 = por %p168, %p169
    %p172 = scmp.ne.s32.totalorder %s157, %s171
    %p173 = scmp.eq.s32.totalorder %s21, 0
    %p174 = por %p172, %p173
    %s176 = sadd.s32 %s175, 1
    %p179 = scmp.eq.s32.totalorder %s15, 1
    %p180 = scmp.ne.s32.totalorder %s175, %s177
    %p181 = scmp.eq.s32.totalorder %s15, 0
    %p182 = por %p180, %p181
    %p183 = scmp.ne.s32.totalorder %s175, %s177
    %p184 = scmp.eq.s32.totalorder %s20, 1
    %p185 = por %p183, %p184
    %p186 = scmp.ne.s32.totalorder %s177, %s178
    %p187 = scmp.eq.s32.totalorder %s20, 0
    %p188 = por %p186, %p187
    %p189 = scmp.ne.s32.totalorder %s177, %s178
    %p190 = scmp.eq.s32.totalorder %s21, 1
    %p191 = por %p189, %p190
    %p193 = scmp.ne.s32.totalorder %s178, %s192
    %p194 = scmp.eq.s32.totalorder %s21, 0
    %p195 = por %p193, %p194
    %s197 = sadd.s32 %s196, 1
    %p200 = scmp.eq.s32.totalorder %s15, 1
    %p201 = scmp.ne.s32.totalorder %s196, %s198
    %p202 = scmp.eq.s32.totalorder %s15, 0
    %p203 = por %p201, %p202
    %p204 = scmp.ne.s32.totalorder %s196, %s198
    %p205 = scmp.eq.s32.totalorder %s20, 1
    %p206 = por %p204, %p205
    %p207 = scmp.ne.s32.totalorder %s198, %s199
    %p208 = scmp.eq.s32.totalorder %s20, 0
    %p209 = por %p207, %p208
    %p210 = scmp.ne.s32.totalorder %s198, %s199
    %p211 = scmp.eq.s32.totalorder %s21, 1
    %p212 = por %p210, %p211
    %p214 = scmp.ne.s32.totalorder %s199, %s213
    %p215 = scmp.eq.s32.totalorder %s21, 0
    %p216 = por %p214, %p215
    %s217 = ssub.s32 %s15, %s22
    %p218 = scmp.eq.s32.totalorder %s217, 0
    %s220 = sadd.s32 %s219, 1
    %s221 = scalar_select %p218, %s219, %s220
    %p224 = pneg %p218
    %p225 = scmp.eq.s32.totalorder %s15, 1
    %p226 = por %p224, %p225
    %p227 = scmp.ne.s32.totalorder %s219, %s222
    %p228 = scmp.eq.s32.totalorder %s15, 0
    %p229 = por %p227, %p228
    %p230 = scmp.ne.s32.totalorder %s219, %s222
    %p231 = scmp.eq.s32.totalorder %s20, 1
    %p232 = por %p230, %p231
    %p233 = scmp.ne.s32.totalorder %s222, %s223
    %p234 = scmp.eq.s32.totalorder %s20, 0
    %p235 = por %p233, %p234
    %p236 = scmp.ne.s32.totalorder %s222, %s223
    %p237 = scmp.eq.s32.totalorder %s21, 1
    %p238 = por %p236, %p237
    %p240 = scmp.ne.s32.totalorder %s223, %s239
    %p241 = scmp.eq.s32.totalorder %s21, 0
    %p242 = por %p240, %p241
    %p243 = scmp.le.s32.totalorder 1, %s15
    %p244 = scmp.lt.s32.totalorder %s15, 3
    %p245 = pnand %p243, %p244
    %p246 = pneg %p245
    // Predicated region
    $region9: #{clip_text_forward.5} parent=5 // pred_check
      _
    $region10: #{clip_text_forward.5} parent=5 // pred_check_branch
      %248 = sbr.rel (%p245) target = $region12
    $region11: #{clip_text_forward.5} parent=5 // pred_region
      %s249 = ssub.s32 %s15, 1
      // Predicated region
      $region13: #{clip_text_forward.5} parent=11 // pred_check
        %p250 = pneg %p62
      $region14: #{clip_text_forward.5} parent=11 // pred_check_branch
        %252 = sbr.rel (%p250) target = $region16
      $region15: #{clip_text_forward.5} parent=11 // pred_region
        _
      $region16: #{clip_text_forward.5} parent=11 // pred_fallthru
        _
      // Predicated region
      $region17: #{clip_text_forward.5} parent=11 // pred_check
        %p253 = pneg %p83
      $region18: #{clip_text_forward.5} parent=11 // pred_check_branch
        %255 = sbr.rel (%p253) target = $region20
      $region19: #{clip_text_forward.5} parent=11 // pred_region
        _
      $region20: #{clip_text_forward.5} parent=11 // pred_fallthru
        _
      // Predicated region
      $region21: #{clip_text_forward.5} parent=11 // pred_check
        %p256 = pneg %p104
      $region22: #{clip_text_forward.5} parent=11 // pred_check_branch
        %258 = sbr.rel (%p256) target = $region24
      $region23: #{clip_text_forward.5} parent=11 // pred_region
        _
      $region24: #{clip_text_forward.5} parent=11 // pred_fallthru
        _
      // Predicated region
      $region25: #{clip_text_forward.5} parent=11 // pred_check
        %p259 = pneg %p125
      $region26: #{clip_text_forward.5} parent=11 // pred_check_branch
        %261 = sbr.rel (%p259) target = $region28
      $region27: #{clip_text_forward.5} parent=11 // pred_region
        _
      $region28: #{clip_text_forward.5} parent=11 // pred_fallthru
        _
      // Predicated region
      $region29: #{clip_text_forward.5} parent=11 // pred_check
        %p262 = pneg %p146
      $region30: #{clip_text_forward.5} parent=11 // pred_check_branch
        %264 = sbr.rel (%p262) target = $region32
      $region31: #{clip_text_forward.5} parent=11 // pred_region
        _
      $region32: #{clip_text_forward.5} parent=11 // pred_fallthru
        _
      // Predicated region
      $region33: #{clip_text_forward.5} parent=11 // pred_check
        %p265 = pneg %p167
      $region34: #{clip_text_forward.5} parent=11 // pred_check_branch
        %267 = sbr.rel (%p265) target = $region36
      $region35: #{clip_text_forward.5} parent=11 // pred_region
        _
      $region36: #{clip_text_forward.5} parent=11 // pred_fallthru
        _
      // Predicated region
      $region37: #{clip_text_forward.5} parent=11 // pred_check
        %p268 = pneg %p188
      $region38: #{clip_text_forward.5} parent=11 // pred_check_branch
        %270 = sbr.rel (%p268) target = $region40
      $region39: #{clip_text_forward.5} parent=11 // pred_region
        _
      $region40: #{clip_text_forward.5} parent=11 // pred_fallthru
        _
      // Predicated region
      $region41: #{clip_text_forward.5} parent=11 // pred_check
        %p271 = pneg %p209
      $region42: #{clip_text_forward.5} parent=11 // pred_check_branch
        %273 = sbr.rel (%p271) target = $region44
      $region43: #{clip_text_forward.5} parent=11 // pred_region
        _
      $region44: #{clip_text_forward.5} parent=11 // pred_fallthru
        _
    $region12: #{clip_text_forward.5} parent=5 // pred_fallthru
      _
    %p274 = scmp.lt.s32.totalorder %s15, 2
    // Predicated region
    $region45: #{clip_text_forward.5} parent=5 // pred_check
      %p275 = pneg %p274
    $region46: #{clip_text_forward.5} parent=5 // pred_check_branch
      %277 = sbr.rel (%p275) target = $region48
    $region47: #{clip_text_forward.5} parent=5 // pred_region
      // Predicated region
      $region49: #{clip_text_forward.5} parent=47 // pred_check
        %p278 = pneg %p35
      $region50: #{clip_text_forward.5} parent=47 // pred_check_branch
        %280 = sbr.rel (%p278) target = $region52
      $region51: #{clip_text_forward.5} parent=47 // pred_region
        %p281 = scmp.lt.s32.totalorder %s15, 1
        %s282 = scalar_select %p281, %s15, 1
        %s283 = smul.addr %s282, 4
        %s284 = scalar_lea.vmem %s0, %s283
      $region52: #{clip_text_forward.5} parent=47 // pred_fallthru
        _
    $region48: #{clip_text_forward.5} parent=5 // pred_fallthru
      _
    %p285 = scmp.le.s32.totalorder 1, %s15
    %p286 = scmp.lt.s32.totalorder %s15, 3
    %p287 = pnand %p285, %p286
    %p288 = pneg %p287
    // Predicated region
    $region53: #{clip_text_forward.5} parent=5 // pred_check
      _
    $region54: #{clip_text_forward.5} parent=5 // pred_check_branch
      %290 = sbr.rel (%p287) target = $region56
    $region55: #{clip_text_forward.5} parent=5 // pred_region
      %s291 = ssub.s32 %s15, 1
      %p292 = scmp.lt.s32.totalorder %s20, 1
      %s293 = scalar_select %p292, %s20, 1
      %s294 = smul.addr %s293, 4
      %s295 = scalar_lea.vmem %s0, %s294
      %p296 = pneg %p41
      %p297 = pneg %p38
      %p298 = pneg %p62
      %p299 = pneg %p59
      %p300 = pneg %p83
      %p301 = pneg %p80
      %p302 = pneg %p104
      %p303 = pneg %p101
      %p304 = pneg %p125
      %p305 = pneg %p122
      %p306 = pneg %p146
      %p307 = pneg %p143
      %p308 = pneg %p167
      %p309 = pneg %p164
      %p310 = pneg %p188
      %p311 = pneg %p185
      %p312 = pneg %p209
      %p313 = pneg %p206
      %p314 = pneg %p235
      %p315 = pneg %p232
      %p316 = scmp.lt.s32.totalorder %s20, 1
      %s317 = scalar_select %p316, %s20, 1
      %s318 = smul.addr %s317, 4
      %s319 = scalar_lea.vmem %s9, %s318
      %p320 = scmp.lt.s32.totalorder %s20, 1
      %s321 = scalar_select %p320, %s20, 1
      %s322 = smul.addr %s321, 4
      %s323 = scalar_lea.vmem %s0, %s322
      %p324 = scmp.lt.s32.totalorder %s20, 1
      %s325 = scalar_select %p324, %s20, 1
      %s326 = smul.addr %s325, 4
      %s327 = scalar_lea.vmem %s9, %s326
      %v329 = vld [vmem:[%s323] sm:$0xf]
      %v330 = vunpack.c.l.bf16 %v329
      %331 = vadd.xlane.f32.xlu0 %v330
      %v332 = vpop.xlane.xlu0 %331
      %v333 = vrcp.pop 128.0
      %v334 = vmul.f32 %v332, %v333
      %v335 = vsub.f32 %v330, %v334
      %v336 = vmul.f32 %v335, %v335
      %337 = vadd.xlane.f32.xlu0 %v336
      %v338 = vpop.xlane.xlu0 %337
      %v339 = vmul.f32 %v338, %v333
      %v340 = vadd.f32 %v339, 1e-05
      %v341 = vrsqrt.pop %v340
      %v342 = vmul.f32 %v335, %v341
      %v343 = vpack.c.bf16 %v342, %v342
      %v344 = vld [vmem:[%s1] sm:$0xff]
      %v345 = vld [vmem:[%s1 + $0x8] sm:$0xf]
      %v346 = vld [vmem:[%s1 + $0xc] sm:$0xff]
      %v347 = vld [vmem:[%s1 + $0x14] sm:$0xf]
      %v348 = vld [vmem:[%s1 + $0x18] sm:$0xff]
      %v349 = vld [vmem:[%s1 + $0x20] sm:$0xf]
      %v350 = vld [vmem:[%s1 + $0x24] sm:$0xff]
      %v351 = vld [vmem:[%s1 + $0x2c] sm:$0xf]
      %v352 = vld [vmem:[%s1 + $0x30] sm:$0xff]
      %v353 = vld [vmem:[%s1 + $0x38] sm:$0xf]
      %v354 = vld [vmem:[%s1 + $0x3c] sm:$0xff]
      %v355 = vld [vmem:[%s1 + $0x44] sm:$0xf]
      %v356 = vld [vmem:[%s1 + $0x48] sm:$0xff]
      %v357 = vld [vmem:[%s1 + $0x50] sm:$0xf]
      %v358 = vld [vmem:[%s1 + $0x54] sm:$0xff]
      %v359 = vld [vmem:[%s1 + $0x5c] sm:$0xf]
      %v360 = vld [vmem:[%s1 + $0x60] sm:$0xff]
      %v361 = vld [vmem:[%s1 + $0x68] sm:$0xf]
      %v362 = vld [vmem:[%s1 + $0x6c] sm:$0xff]
      %v363 = vld [vmem:[%s1 + $0x74] sm:$0xf]
      %v364 = vld [vmem:[%s1 + $0x78] sm:$0xff]
      %v365 = vld [vmem:[%s1 + $0x80] sm:$0xf]
      %v366 = vld [vmem:[%s1 + $0x84] sm:$0xff]
      %v367 = vld [vmem:[%s1 + $0x8c] sm:$0xf]
      %v368 = vld [vmem:[%s1 + $0x90] sm:$0xff]
      %v369 = vld [vmem:[%s1 + $0x98] sm:$0xf]
      %v370 = vld [vmem:[%s1 + $0x9c] sm:$0xff]
      %v371 = vld [vmem:[%s1 + $0xa4] sm:$0xf]
      %v372 = vld [vmem:[%s1 + $0xa8] sm:$0xff]
      %v373 = vld [vmem:[%s1 + $0xb0] sm:$0xf]
      %v374 = vld [vmem:[%s1 + $0xb4] sm:$0xff]
      %v375 = vld [vmem:[%s1 + $0xbc] sm:$0xf]
      %v376 = vld [vmem:[%s2] sm:$0x7]
      %v378 = vlaneseq
      %v379 = vshrl.u32 %v378, 7
      %v380 = vsub.s32 0, %v379
      %v381 = vrot.slane %v376, %v380
      %v382 = vlaneseq
      %v383 = vshrl.u32 %v382, 7
      %v384 = vsub.s32 1, %v383
      %v385 = vrot.slane %v376, %v384
      %v386 = vlaneseq
      %v387 = vshrl.u32 %v386, 7
      %v388 = vsub.s32 2, %v387
      %v389 = vrot.slane %v376, %v388
      %v425 = vunpack.c.l.b16 %v344
      %v426 = vunpack.c.h.b16 %v344
      %v427 = vunpack.c.l.b16 %v345
      %v428 = vunpack.c.l.b16 %v346
      %v429 = vunpack.c.h.b16 %v346
      %v430 = vunpack.c.l.b16 %v347
      %v431 = vunpack.c.l.b16 %v348
      %v432 = vunpack.c.h.b16 %v348
      %v433 = vunpack.c.l.b16 %v349
      %v434 = vunpack.c.l.b16 %v350
      %v435 = vunpack.c.h.b16 %v350
      %v436 = vunpack.c.l.b16 %v351
      %v437 = vunpack.c.l.b16 %v352
      %v438 = vunpack.c.h.b16 %v352
      %v439 = vunpack.c.l.b16 %v353
      %v440 = vunpack.c.l.b16 %v354
      %v441 = vunpack.c.h.b16 %v354
      %v442 = vunpack.c.l.b16 %v355
      %v443 = vunpack.c.l.b16 %v356
      %v444 = vunpack.c.h.b16 %v356
      %v445 = vunpack.c.l.b16 %v357
      %v446 = vunpack.c.l.b16 %v358
      %v447 = vunpack.c.h.b16 %v358
      %v448 = vunpack.c.l.b16 %v359
      %v449 = vunpack.c.l.b16 %v360
      %v450 = vunpack.c.h.b16 %v360
      %v451 = vunpack.c.l.b16 %v361
      %v452 = vunpack.c.l.b16 %v362
      %v453 = vunpack.c.h.b16 %v362
      %v454 = vunpack.c.l.b16 %v363
      %v455 = vunpack.c.l.b16 %v364
      %v456 = vunpack.c.h.b16 %v364
      %v457 = vunpack.c.l.b16 %v365
      %v458 = vunpack.c.l.b16 %v366
      %v459 = vunpack.c.h.b16 %v366
      %v460 = vunpack.c.l.b16 %v367
      %v461 = vunpack.c.l.b16 %v368
      %v462 = vunpack.c.h.b16 %v368
      %v463 = vunpack.c.l.b16 %v369
      %v464 = vunpack.c.l.b16 %v370
      %v465 = vunpack.c.h.b16 %v370
      %v466 = vunpack.c.l.b16 %v371
      %v467 = vunpack.c.l.b16 %v372
      %v468 = vunpack.c.h.b16 %v372
      %v469 = vunpack.c.l.b16 %v373
      %v470 = vunpack.c.l.b16 %v374
      %v471 = vunpack.c.h.b16 %v374
      %v472 = vunpack.c.l.b16 %v375
      %v473 = vpack.c.b16 %v428, %v425
      %v474 = vpack.c.b16 %v429, %v426
      %v475 = vpack.c.b16 %v430, %v427
      %v476 = vpack.c.b16 %v434, %v431
      %v477 = vpack.c.b16 %v435, %v432
      %v478 = vpack.c.b16 %v436, %v433
      %v479 = vpack.c.b16 %v440, %v437
      %v480 = vpack.c.b16 %v441, %v438
      %v481 = vpack.c.b16 %v442, %v439
      %v482 = vpack.c.b16 %v446, %v443
      %v483 = vpack.c.b16 %v447, %v444
      %v484 = vpack.c.b16 %v448, %v445
      %v485 = vpack.c.b16 %v452, %v449
      %v486 = vpack.c.b16 %v453, %v450
      %v487 = vpack.c.b16 %v454, %v451
      %v488 = vpack.c.b16 %v458, %v455
      %v489 = vpack.c.b16 %v459, %v456
      %v490 = vpack.c.b16 %v460, %v457
      %v491 = vpack.c.b16 %v464, %v461
      %v492 = vpack.c.b16 %v465, %v462
      %v493 = vpack.c.b16 %v466, %v463
      %v494 = vpack.c.b16 %v470, %v467
      %v495 = vpack.c.b16 %v471, %v468
      %v496 = vpack.c.b16 %v472, %v469
      %521 = vmatprep.subr.bf16.mxu0 %v495
      %522 = vmatpush1.bf16.msra.mxu0 %v494
      %523 = vmatprep.subr.bf16.mxu0 %v492
      %524 = vmatpush1.bf16.msra.mxu0 %v491
      %525 = vmatprep.subr.bf16.mxu0 %v489
      %526 = vmatpush1.bf16.msra.mxu0 %v488
      %527 = vmatprep.subr.bf16.mxu0 %v486
      %528 = vmatpush1.bf16.msra.mxu0 %v485
      %529 = vmatprep.subr.bf16.mxu0 %v483
      %530 = vmatpush1.bf16.msra.mxu0 %v482
      %531 = vmatprep.subr.bf16.mxu0 %v480
      %532 = vmatpush1.bf16.msra.mxu0 %v479
      %533 = vmatprep.subr.bf16.mxu0 %v477
      %534 = vmatpush1.bf16.msra.mxu0 %v476
      %535 = vmatprep.subr.bf16.mxu0 %v474
      %536 = vmatpush1.bf16.msra.mxu0 %v473
      %537 = vmatprep.subr.bf16.mxu0 0
      %538 = vmatpush2.bf16.msra.mxu0 0
      %539 = vmatprep.subr.bf16.mxu0 0
      %540 = vmatpush2.bf16.msra.mxu0 0
      %541 = vmatprep.subr.bf16.mxu0 0
      %542 = vmatpush2.bf16.msra.mxu0 0
      %543 = vmatprep.subr.bf16.mxu0 0
      %544 = vmatpush2.bf16.msra.mxu0 0
      %545 = vmatprep.subr.bf16.mxu0 0
      %546 = vmatpush2.bf16.msra.mxu0 0
      %547 = vmatprep.subr.bf16.mxu0 0
      %548 = vmatpush2.bf16.msra.mxu0 0
      %549 = vmatprep.subr.bf16.mxu0 0
      %550 = vmatpush2.bf16.msra.mxu0 0
      %551 = vmatprep.subr.bf16.mxu0 0
      %552 = vmatpush2.bf16.msra.mxu0 0
      %553 = vmatprep.mubr.bf16.mxu0 0
      %554 = vmatmul.mubr.bf16.gmra.mxu0 %v343
      %v555 = vpop.f32.mrf.mxu0
      %v556 = vadd.f32 %v381, %v555
      %v557 = vpop.f32.mrf.mxu0
      %v558 = vadd.f32 %v385, %v557
      %v559 = vpop.f32.mrf.mxu0
      %v560 = vpop.f32.mrf.mxu0
      %561 = vdwg.mxu0
      %562 = vmatprep.subr.bf16.mxu0 0
      %563 = vmatpush1.bf16.msra.mxu0 %v496
      %564 = vmatprep.subr.bf16.mxu0 0
      %565 = vmatpush1.bf16.msra.mxu0 %v493
      %566 = vmatprep.subr.bf16.mxu0 0
      %567 = vmatpush1.bf16.msra.mxu0 %v490
      %568 = vmatprep.subr.bf16.mxu0 0
      %569 = vmatpush1.bf16.msra.mxu0 %v487
      %570 = vmatprep.subr.bf16.mxu0 0
      %571 = vmatpush1.bf16.msra.mxu0 %v484
      %572 = vmatprep.subr.bf16.mxu0 0
      %573 = vmatpush1.bf16.msra.mxu0 %v481
      %574 = vmatprep.subr.bf16.mxu0 0
      %575 = vmatpush1.bf16.msra.mxu0 %v478
      %576 = vmatprep.subr.bf16.mxu0 0
      %577 = vmatpush1.bf16.msra.mxu0 %v475
      %578 = vmatprep.subr.bf16.mxu0 0
      %579 = vmatpush2.bf16.msra.mxu0 0
      %580 = vmatprep.subr.bf16.mxu0 0
      %581 = vmatpush2.bf16.msra.mxu0 0
      %582 = vmatprep.subr.bf16.mxu0 0
      %583 = vmatpush2.bf16.msra.mxu0 0
      %584 = vmatprep.subr.bf16.mxu0 0
      %585 = vmatpush2.bf16.msra.mxu0 0
      %586 = vmatprep.subr.bf16.mxu0 0
      %587 = vmatpush2.bf16.msra.mxu0 0
      %588 = vmatprep.subr.bf16.mxu0 0
      %589 = vmatpush2.bf16.msra.mxu0 0
      %590 = vmatprep.subr.bf16.mxu0 0
      %591 = vmatpush2.bf16.msra.mxu0 0
      %592 = vmatprep.subr.bf16.mxu0 0
      %593 = vmatpush2.bf16.msra.mxu0 0
      %594 = vmatprep.mubr.bf16.mxu0 0
      %595 = vmatmul.mubr.bf16.gmra.mxu0 %v343
      %v596 = vpop.f32.mrf.mxu0
      %v597 = vadd.f32 %v389, %v596
      %v598 = vpop.f32.mrf.mxu0
      %v599 = vpop.f32.mrf.mxu0
      %v600 = vpop.f32.mrf.mxu0
      %601 = vdwg.mxu0
      %v602 = vpack.c.bf16 %v556, %v556
      %v603 = vpack.c.bf16 %v558, %v558
      %v604 = vpack.c.bf16 %v597, %v597
      %v605 = vlaneseq
      %v606 = vshrl.u32 %v605, 7
      %v607 = vlaneseq
      %v608 = vand.u32 %v607, 127
      %vm609 = vcmp.le.s32.totalorder %v608, %v606
      %v610 = vld [vmem:[%s4] sm:$0x1]
      %v612 = vlaneseq
      %v613 = vshrl.u32 %v612, 7
      %v614 = vsub.s32 0, %v613
      %v615 = vrot.slane %v610, %v614
      %v617 = vadd.f32 %v615, %v330
      %vm618 = vcmask 261120
      %v620 = vsel %vm618, %v602, 0
      %v623 = vsel %vm618, %v603, 0
      %625 = vmatprep.subr.bf16.mxu0 0
      %626 = vmatpush1.bf16.xpose.msra.mxu0 0
      %627 = vmatprep.subr.bf16.mxu0 0
      %628 = vmatpush1.bf16.xpose.msra.mxu0 0
      %629 = vmatprep.subr.bf16.mxu0 0
      %630 = vmatpush1.bf16.xpose.msra.mxu0 0
      %631 = vmatprep.subr.bf16.mxu0 0
      %632 = vmatpush1.bf16.xpose.msra.mxu0 0
      %633 = vmatprep.subr.bf16.mxu0 0
      %634 = vmatpush1.bf16.xpose.msra.mxu0 0
      %635 = vmatprep.subr.bf16.mxu0 0
      %636 = vmatpush1.bf16.xpose.msra.mxu0 0
      %637 = vmatprep.subr.bf16.mxu0 0
      %638 = vmatpush1.bf16.xpose.msra.mxu0 0
      %639 = vmatprep.subr.bf16.mxu0 0
      %640 = vmatpush1.bf16.xpose.msra.mxu0 %v623
      %641 = vmatprep.subr.bf16.mxu0 0
      %642 = vmatpush2.bf16.xpose.msra.mxu0 0
      %643 = vmatprep.subr.bf16.mxu0 0
      %644 = vmatpush2.bf16.xpose.msra.mxu0 0
      %645 = vmatprep.subr.bf16.mxu0 0
      %646 = vmatpush2.bf16.xpose.msra.mxu0 0
      %647 = vmatprep.subr.bf16.mxu0 0
      %648 = vmatpush2.bf16.xpose.msra.mxu0 0
      %649 = vmatprep.subr.bf16.mxu0 0
      %650 = vmatpush2.bf16.xpose.msra.mxu0 0
      %651 = vmatprep.subr.bf16.mxu0 0
      %652 = vmatpush2.bf16.xpose.msra.mxu0 0
      %653 = vmatprep.subr.bf16.mxu0 0
      %654 = vmatpush2.bf16.xpose.msra.mxu0 0
      %655 = vmatprep.subr.bf16.mxu0 0
      %656 = vmatpush2.bf16.xpose.msra.mxu0 0
      %657 = vmatprep.mubr.bf16.mxu0 0
      %658 = vmatmul.mubr.bf16.gmra.mxu0 %v620
      %v659 = vpop.f32.mrf.mxu0
      %v660 = vadd.f32 0.0, %v659
      %v661 = vpop.f32.mrf.mxu0
      %v662 = vpop.f32.mrf.mxu0
      %v663 = vpop.f32.mrf.mxu0
      %664 = vdwg.mxu0
      %v665 = vsel %vm609, %v660, -1e+30
      %vm666 = vcmask 64512
      %v667 = vsel %vm666, %v665, -inf
      %668 = vmax.xlane.f32.xlu0 %v667
      %v669 = vpop.xlane.xlu0 %668
      %v670 = vsub.f32 %v665, %v669
      %v671 = vmul.f32 %v670, 1.442695
      %v672 = vpow.pop %v671
      %v673 = vsel %vm666, %v672, 0.0
      %674 = vadd.xlane.f32.xlu0 %v673
      %v675 = vpop.xlane.xlu0 %674
      %v676 = vpack.c.bf16 %v672, %v672
      %v678 = vsel %vm666, %v676, 0
      %vm680 = vcmask 1043456
      %v682 = vsel %vm680, %v604, 0
      %684 = vmatprep.subr.bf16.mxu0 0
      %685 = vmatpush1.bf16.msra.mxu0 0
      %686 = vmatprep.subr.bf16.mxu0 0
      %687 = vmatpush1.bf16.msra.mxu0 0
      %688 = vmatprep.subr.bf16.mxu0 0
      %689 = vmatpush1.bf16.msra.mxu0 0
      %690 = vmatprep.subr.bf16.mxu0 0
      %691 = vmatpush1.bf16.msra.mxu0 0
      %692 = vmatprep.subr.bf16.mxu0 0
      %693 = vmatpush1.bf16.msra.mxu0 0
      %694 = vmatprep.subr.bf16.mxu0 0
      %695 = vmatpush1.bf16.msra.mxu0 0
      %696 = vmatprep.subr.bf16.mxu0 0
      %697 = vmatpush1.bf16.msra.mxu0 0
      %698 = vmatprep.subr.bf16.mxu0 0
      %699 = vmatpush1.bf16.msra.mxu0 %v682
      %700 = vmatprep.subr.bf16.mxu0 0
      %701 = vmatpush2.bf16.msra.mxu0 0
      %702 = vmatprep.subr.bf16.mxu0 0
      %703 = vmatpush2.bf16.msra.mxu0 0
      %704 = vmatprep.subr.bf16.mxu0 0
      %705 = vmatpush2.bf16.msra.mxu0 0
      %706 = vmatprep.subr.bf16.mxu0 0
      %707 = vmatpush2.bf16.msra.mxu0 0
      %708 = vmatprep.subr.bf16.mxu0 0
      %709 = vmatpush2.bf16.msra.mxu0 0
      %710 = vmatprep.subr.bf16.mxu0 0
      %711 = vmatpush2.bf16.msra.mxu0 0
      %712 = vmatprep.subr.bf16.mxu0 0
      %713 = vmatpush2.bf16.msra.mxu0 0
      %714 = vmatprep.subr.bf16.mxu0 0
      %715 = vmatpush2.bf16.msra.mxu0 0
      %716 = vmatprep.mubr.bf16.mxu0 0
      %717 = vmatmul.mubr.bf16.gmra.mxu0 %v678
      %v718 = vpop.f32.mrf.mxu0
      %v719 = vadd.f32 0.0, %v718
      %v720 = vpop.f32.mrf.mxu0
      %v721 = vpop.f32.mrf.mxu0
      %v722 = vpop.f32.mrf.mxu0
      %723 = vdwg.mxu0
      %v724 = vrcp.pop %v675
      %v725 = vmul.f32 %v719, %v724
      %v726 = vpack.c.bf16 %v725, %v725
      %v727 = vld [vmem:[%s3] sm:$0xf]
      %v728 = vld [vmem:[%s3 + $0x4] sm:$0xf]
      %v729 = vld [vmem:[%s3 + $0x8] sm:$0xf]
      %v730 = vld [vmem:[%s3 + $0xc] sm:$0xf]
      %v735 = vunpack.c.l.b16 %v727
      %v736 = vunpack.c.l.b16 %v728
      %v737 = vunpack.c.l.b16 %v729
      %v738 = vunpack.c.l.b16 %v730
      %v739 = vpack.c.b16 %v736, %v735
      %v740 = vpack.c.b16 %v738, %v737
      %v744 = vsel %vm618, %v726, 0
      %746 = vmatprep.subr.bf16.mxu0 0
      %747 = vmatpush1.bf16.msra.mxu0 0
      %748 = vmatprep.subr.bf16.mxu0 0
      %749 = vmatpush1.bf16.msra.mxu0 0
      %750 = vmatprep.subr.bf16.mxu0 0
      %751 = vmatpush1.bf16.msra.mxu0 0
      %752 = vmatprep.subr.bf16.mxu0 0
      %753 = vmatpush1.bf16.msra.mxu0 0
      %754 = vmatprep.subr.bf16.mxu0 0
      %755 = vmatpush1.bf16.msra.mxu0 0
      %756 = vmatprep.subr.bf16.mxu0 0
      %757 = vmatpush1.bf16.msra.mxu0 0
      %758 = vmatprep.subr.bf16.mxu0 0
      %759 = vmatpush1.bf16.msra.mxu0 %v740
      %760 = vmatprep.subr.bf16.mxu0 0
      %761 = vmatpush1.bf16.msra.mxu0 %v739
      %762 = vmatprep.subr.bf16.mxu0 0
      %763 = vmatpush2.bf16.msra.mxu0 0
      %764 = vmatprep.subr.bf16.mxu0 0
      %765 = vmatpush2.bf16.msra.mxu0 0
      %766 = vmatprep.subr.bf16.mxu0 0
      %767 = vmatpush2.bf16.msra.mxu0 0
      %768 = vmatprep.subr.bf16.mxu0 0
      %769 = vmatpush2.bf16.msra.mxu0 0
      %770 = vmatprep.subr.bf16.mxu0 0
      %771 = vmatpush2.bf16.msra.mxu0 0
      %772 = vmatprep.subr.bf16.mxu0 0
      %773 = vmatpush2.bf16.msra.mxu0 0
      %774 = vmatprep.subr.bf16.mxu0 0
      %775 = vmatpush2.bf16.msra.mxu0 0
      %776 = vmatprep.subr.bf16.mxu0 0
      %777 = vmatpush2.bf16.msra.mxu0 0
      %778 = vmatprep.mubr.bf16.mxu0 0
      %779 = vmatmul.mubr.bf16.gmra.mxu0 %v744
      %v780 = vpop.f32.mrf.mxu0
      %v781 = vadd.f32 0.0, %v780
      %v782 = vpop.f32.mrf.mxu0
      %v783 = vpop.f32.mrf.mxu0
      %v784 = vpop.f32.mrf.mxu0
      %785 = vdwg.mxu0
      %v786 = vadd.f32 %v617, %v781
      %788 = vrot.lane.b32.xlu0 %v602, 96
      %v789 = vpop.permute.xlu0 %788
      %791 = vrot.lane.b32.xlu0 %v603, 96
      %v792 = vpop.permute.xlu0 %791
      %v794 = vsel %vm618, %v789, 0
      %v797 = vsel %vm618, %v792, 0
      %799 = vmatprep.subr.bf16.mxu0 0
      %800 = vmatpush1.bf16.xpose.msra.mxu0 0
      %801 = vmatprep.subr.bf16.mxu0 0
      %802 = vmatpush1.bf16.xpose.msra.mxu0 0
      %803 = vmatprep.subr.bf16.mxu0 0
      %804 = vmatpush1.bf16.xpose.msra.mxu0 0
      %805 = vmatprep.subr.bf16.mxu0 0
      %806 = vmatpush1.bf16.xpose.msra.mxu0 0
      %807 = vmatprep.subr.bf16.mxu0 0
      %808 = vmatpush1.bf16.xpose.msra.mxu0 0
      %809 = vmatprep.subr.bf16.mxu0 0
      %810 = vmatpush1.bf16.xpose.msra.mxu0 0
      %811 = vmatprep.subr.bf16.mxu0 0
      %812 = vmatpush1.bf16.xpose.msra.mxu0 0
      %813 = vmatprep.subr.bf16.mxu0 0
      %814 = vmatpush1.bf16.xpose.msra.mxu0 %v797
      %815 = vmatprep.subr.bf16.mxu0 0
      %816 = vmatpush2.bf16.xpose.msra.mxu0 0
      %817 = vmatprep.subr.bf16.mxu0 0
      %818 = vmatpush2.bf16.xpose.msra.mxu0 0
      %819 = vmatprep.subr.bf16.mxu0 0
      %820 = vmatpush2.bf16.xpose.msra.mxu0 0
      %821 = vmatprep.subr.bf16.mxu0 0
      %822 = vmatpush2.bf16.xpose.msra.mxu0 0
      %823 = vmatprep.subr.bf16.mxu0 0
      %824 = vmatpush2.bf16.xpose.msra.mxu0 0
      %825 = vmatprep.subr.bf16.mxu0 0
      %826 = vmatpush2.bf16.xpose.msra.mxu0 0
      %827 = vmatprep.subr.bf16.mxu0 0
      %828 = vmatpush2.bf16.xpose.msra.mxu0 0
      %829 = vmatprep.subr.bf16.mxu0 0
      %830 = vmatpush2.bf16.xpose.msra.mxu0 0
      %831 = vmatprep.mubr.bf16.mxu0 0
      %832 = vmatmul.mubr.bf16.gmra.mxu0 %v794
      %v833 = vpop.f32.mrf.mxu0
      %v834 = vadd.f32 0.0, %v833
      %v835 = vpop.f32.mrf.mxu0
      %v836 = vpop.f32.mrf.mxu0
      %v837 = vpop.f32.mrf.mxu0
      %838 = vdwg.mxu0
      %v839 = vsel %vm609, %v834, -1e+30
      %v840 = vsel %vm666, %v839, -inf
      %841 = vmax.xlane.f32.xlu0 %v840
      %v842 = vpop.xlane.xlu0 %841
      %v843 = vsub.f32 %v839, %v842
      %v844 = vmul.f32 %v843, 1.442695
      %v845 = vpow.pop %v844
      %v846 = vsel %vm666, %v845, 0.0
      %847 = vadd.xlane.f32.xlu0 %v846
      %v848 = vpop.xlane.xlu0 %847
      %v849 = vpack.c.bf16 %v845, %v845
      %851 = vrot.lane.b32.xlu0 %v604, 96
      %v852 = vpop.permute.xlu0 %851
      %v854 = vsel %vm666, %v849, 0
      %v857 = vsel %vm680, %v852, 0
      %859 = vmatprep.subr.bf16.mxu0 0
      %860 = vmatpush1.bf16.msra.mxu0 0
      %861 = vmatprep.subr.bf16.mxu0 0
      %862 = vmatpush1.bf16.msra.mxu0 0
      %863 = vmatprep.subr.bf16.mxu0 0
      %864 = vmatpush1.bf16.msra.mxu0 0
      %865 = vmatprep.subr.bf16.mxu0 0
      %866 = vmatpush1.bf16.msra.mxu0 0
      %867 = vmatprep.subr.bf16.mxu0 0
      %868 = vmatpush1.bf16.msra.mxu0 0
      %869 = vmatprep.subr.bf16.mxu0 0
      %870 = vmatpush1.bf16.msra.mxu0 0
      %871 = vmatprep.subr.bf16.mxu0 0
      %872 = vmatpush1.bf16.msra.mxu0 0
      %873 = vmatprep.subr.bf16.mxu0 0
      %874 = vmatpush1.bf16.msra.mxu0 %v857
      %875 = vmatprep.subr.bf16.mxu0 0
      %876 = vmatpush2.bf16.msra.mxu0 0
      %877 = vmatprep.subr.bf16.mxu0 0
      %878 = vmatpush2.bf16.msra.mxu0 0
      %879 = vmatprep.subr.bf16.mxu0 0
      %880 = vmatpush2.bf16.msra.mxu0 0
      %881 = vmatprep.subr.bf16.mxu0 0
      %882 = vmatpush2.bf16.msra.mxu0 0
      %883 = vmatprep.subr.bf16.mxu0 0
      %884 = vmatpush2.bf16.msra.mxu0 0
      %885 = vmatprep.subr.bf16.mxu0 0
      %886 = vmatpush2.bf16.msra.mxu0 0
      %887 = vmatprep.subr.bf16.mxu0 0
      %888 = vmatpush2.bf16.msra.mxu0 0
      %889 = vmatprep.subr.bf16.mxu0 0
      %890 = vmatpush2.bf16.msra.mxu0 0
      %891 = vmatprep.mubr.bf16.mxu0 0
      %892 = vmatmul.mubr.bf16.gmra.mxu0 %v854
      %v893 = vpop.f32.mrf.mxu0
      %v894 = vadd.f32 0.0, %v893
      %v895 = vpop.f32.mrf.mxu0
      %v896 = vpop.f32.mrf.mxu0
      %v897 = vpop.f32.mrf.mxu0
      %898 = vdwg.mxu0
      %v899 = vrcp.pop %v848
      %v900 = vmul.f32 %v894, %v899
      %v901 = vpack.c.bf16 %v900, %v900
      %v902 = vld [vmem:[%s3 + $0x10] sm:$0xf]
      %v903 = vld [vmem:[%s3 + $0x14] sm:$0xf]
      %v904 = vld [vmem:[%s3 + $0x18] sm:$0xf]
      %v905 = vld [vmem:[%s3 + $0x1c] sm:$0xf]
      %v910 = vunpack.c.l.b16 %v902
      %v911 = vunpack.c.l.b16 %v903
      %v912 = vunpack.c.l.b16 %v904
      %v913 = vunpack.c.l.b16 %v905
      %v914 = vpack.c.b16 %v911, %v910
      %v915 = vpack.c.b16 %v913, %v912
      %v919 = vsel %vm618, %v901, 0
      %921 = vmatprep.subr.bf16.mxu0 0
      %922 = vmatpush1.bf16.msra.mxu0 0
      %923 = vmatprep.subr.bf16.mxu0 0
      %924 = vmatpush1.bf16.msra.mxu0 0
      %925 = vmatprep.subr.bf16.mxu0 0
      %926 = vmatpush1.bf16.msra.mxu0 0
      %927 = vmatprep.subr.bf16.mxu0 0
      %928 = vmatpush1.bf16.msra.mxu0 0
      %929 = vmatprep.subr.bf16.mxu0 0
      %930 = vmatpush1.bf16.msra.mxu0 0
      %931 = vmatprep.subr.bf16.mxu0 0
      %932 = vmatpush1.bf16.msra.mxu0 0
      %933 = vmatprep.subr.bf16.mxu0 0
      %934 = vmatpush1.bf16.msra.mxu0 %v915
      %935 = vmatprep.subr.bf16.mxu0 0
      %936 = vmatpush1.bf16.msra.mxu0 %v914
      %937 = vmatprep.subr.bf16.mxu0 0
      %938 = vmatpush2.bf16.msra.mxu0 0
      %939 = vmatprep.subr.bf16.mxu0 0
      %940 = vmatpush2.bf16.msra.mxu0 0
      %941 = vmatprep.subr.bf16.mxu0 0
      %942 = vmatpush2.bf16.msra.mxu0 0
      %943 = vmatprep.subr.bf16.mxu0 0
      %944 = vmatpush2.bf16.msra.mxu0 0
      %945 = vmatprep.subr.bf16.mxu0 0
      %946 = vmatpush2.bf16.msra.mxu0 0
      %947 = vmatprep.subr.bf16.mxu0 0
      %948 = vmatpush2.bf16.msra.mxu0 0
      %949 = vmatprep.subr.bf16.mxu0 0
      %950 = vmatpush2.bf16.msra.mxu0 0
      %951 = vmatprep.subr.bf16.mxu0 0
      %952 = vmatpush2.bf16.msra.mxu0 0
      %953 = vmatprep.mubr.bf16.mxu0 0
      %954 = vmatmul.mubr.bf16.gmra.mxu0 %v919
      %v955 = vpop.f32.mrf.mxu0
      %v956 = vadd.f32 0.0, %v955
      %v957 = vpop.f32.mrf.mxu0
      %v958 = vpop.f32.mrf.mxu0
      %v959 = vpop.f32.mrf.mxu0
      %960 = vdwg.mxu0
      %v961 = vadd.f32 %v786, %v956
      %962 = vrot.lane.b32.xlu0 %v602, 64
      %v963 = vpop.permute.xlu0 %962
      %964 = vrot.lane.b32.xlu0 %v603, 64
      %v965 = vpop.permute.xlu0 %964
      %v967 = vsel %vm618, %v963, 0
      %v970 = vsel %vm618, %v965, 0
      %972 = vmatprep.subr.bf16.mxu0 0
      %973 = vmatpush1.bf16.xpose.msra.mxu0 0
      %974 = vmatprep.subr.bf16.mxu0 0
      %975 = vmatpush1.bf16.xpose.msra.mxu0 0
      %976 = vmatprep.subr.bf16.mxu0 0
      %977 = vmatpush1.bf16.xpose.msra.mxu0 0
      %978 = vmatprep.subr.bf16.mxu0 0
      %979 = vmatpush1.bf16.xpose.msra.mxu0 0
      %980 = vmatprep.subr.bf16.mxu0 0
      %981 = vmatpush1.bf16.xpose.msra.mxu0 0
      %982 = vmatprep.subr.bf16.mxu0 0
      %983 = vmatpush1.bf16.xpose.msra.mxu0 0
      %984 = vmatprep.subr.bf16.mxu0 0
      %985 = vmatpush1.bf16.xpose.msra.mxu0 0
      %986 = vmatprep.subr.bf16.mxu0 0
      %987 = vmatpush1.bf16.xpose.msra.mxu0 %v970
      %988 = vmatprep.subr.bf16.mxu0 0
      %989 = vmatpush2.bf16.xpose.msra.mxu0 0
      %990 = vmatprep.subr.bf16.mxu0 0
      %991 = vmatpush2.bf16.xpose.msra.mxu0 0
      %992 = vmatprep.subr.bf16.mxu0 0
      %993 = vmatpush2.bf16.xpose.msra.mxu0 0
      %994 = vmatprep.subr.bf16.mxu0 0
      %995 = vmatpush2.bf16.xpose.msra.mxu0 0
      %996 = vmatprep.subr.bf16.mxu0 0
      %997 = vmatpush2.bf16.xpose.msra.mxu0 0
      %998 = vmatprep.subr.bf16.mxu0 0
      %999 = vmatpush2.bf16.xpose.msra.mxu0 0
      %1000 = vmatprep.subr.bf16.mxu0 0
      %1001 = vmatpush2.bf16.xpose.msra.mxu0 0
      %1002 = vmatprep.subr.bf16.mxu0 0
      %1003 = vmatpush2.bf16.xpose.msra.mxu0 0
      %1004 = vmatprep.mubr.bf16.mxu0 0
      %1005 = vmatmul.mubr.bf16.gmra.mxu0 %v967
      %v1006 = vpop.f32.mrf.mxu0
      %v1007 = vadd.f32 0.0, %v1006
      %v1008 = vpop.f32.mrf.mxu0
      %v1009 = vpop.f32.mrf.mxu0
      %v1010 = vpop.f32.mrf.mxu0
      %1011 = vdwg.mxu0
      %v1012 = vsel %vm609, %v1007, -1e+30
      %v1013 = vsel %vm666, %v1012, -inf
      %1014 = vmax.xlane.f32.xlu0 %v1013
      %v1015 = vpop.xlane.xlu0 %1014
      %v1016 = vsub.f32 %v1012, %v1015
      %v1017 = vmul.f32 %v1016, 1.442695
      %v1018 = vpow.pop %v1017
      %v1019 = vsel %vm666, %v1018, 0.0
      %1020 = vadd.xlane.f32.xlu0 %v1019
      %v1021 = vpop.xlane.xlu0 %1020
      %v1022 = vpack.c.bf16 %v1018, %v1018
      %1023 = vrot.lane.b32.xlu0 %v604, 64
      %v1024 = vpop.permute.xlu0 %1023
      %v1026 = vsel %vm666, %v1022, 0
      %v1029 = vsel %vm680, %v1024, 0
      %1031 = vmatprep.subr.bf16.mxu0 0
      %1032 = vmatpush1.bf16.msra.mxu0 0
      %1033 = vmatprep.subr.bf16.mxu0 0
      %1034 = vmatpush1.bf16.msra.mxu0 0
      %1035 = vmatprep.subr.bf16.mxu0 0
      %1036 = vmatpush1.bf16.msra.mxu0 0
      %1037 = vmatprep.subr.bf16.mxu0 0
      %1038 = vmatpush1.bf16.msra.mxu0 0
      %1039 = vmatprep.subr.bf16.mxu0 0
      %1040 = vmatpush1.bf16.msra.mxu0 0
      %1041 = vmatprep.subr.bf16.mxu0 0
      %1042 = vmatpush1.bf16.msra.mxu0 0
      %1043 = vmatprep.subr.bf16.mxu0 0
      %1044 = vmatpush1.bf16.msra.mxu0 0
      %1045 = vmatprep.subr.bf16.mxu0 0
      %1046 = vmatpush1.bf16.msra.mxu0 %v1029
      %1047 = vmatprep.subr.bf16.mxu0 0
      %1048 = vmatpush2.bf16.msra.mxu0 0
      %1049 = vmatprep.subr.bf16.mxu0 0
      %1050 = vmatpush2.bf16.msra.mxu0 0
      %1051 = vmatprep.subr.bf16.mxu0 0
      %1052 = vmatpush2.bf16.msra.mxu0 0
      %1053 = vmatprep.subr.bf16.mxu0 0
      %1054 = vmatpush2.bf16.msra.mxu0 0
      %1055 = vmatprep.subr.bf16.mxu0 0
      %1056 = vmatpush2.bf16.msra.mxu0 0
      %1057 = vmatprep.subr.bf16.mxu0 0
      %1058 = vmatpush2.bf16.msra.mxu0 0
      %1059 = vmatprep.subr.bf16.mxu0 0
      %1060 = vmatpush2.bf16.msra.mxu0 0
      %1061 = vmatprep.subr.bf16.mxu0 0
      %1062 = vmatpush2.bf16.msra.mxu0 0
      %1063 = vmatprep.mubr.bf16.mxu0 0
      %1064 = vmatmul.mubr.bf16.gmra.mxu0 %v1026
      %v1065 = vpop.f32.mrf.mxu0
      %v1066 = vadd.f32 0.0, %v1065
      %v1067 = vpop.f32.mrf.mxu0
      %v1068 = vpop.f32.mrf.mxu0
      %v1069 = vpop.f32.mrf.mxu0
      %1070 = vdwg.mxu0
      %v1071 = vrcp.pop %v1021
      %v1072 = vmul.f32 %v1066, %v1071
      %v1073 = vpack.c.bf16 %v1072, %v1072
      %v1074 = vld [vmem:[%s3 + $0x20] sm:$0xf]
      %v1075 = vld [vmem:[%s3 + $0x24] sm:$0xf]
      %v1076 = vld [vmem:[%s3 + $0x28] sm:$0xf]
      %v1077 = vld [vmem:[%s3 + $0x2c] sm:$0xf]
      %v1082 = vunpack.c.l.b16 %v1074
      %v1083 = vunpack.c.l.b16 %v1075
      %v1084 = vunpack.c.l.b16 %v1076
      %v1085 = vunpack.c.l.b16 %v1077
      %v1086 = vpack.c.b16 %v1083, %v1082
      %v1087 = vpack.c.b16 %v1085, %v1084
      %v1091 = vsel %vm618, %v1073, 0
      %1093 = vmatprep.subr.bf16.mxu0 0
      %1094 = vmatpush1.bf16.msra.mxu0 0
      %1095 = vmatprep.subr.bf16.mxu0 0
      %1096 = vmatpush1.bf16.msra.mxu0 0
      %1097 = vmatprep.subr.bf16.mxu0 0
      %1098 = vmatpush1.bf16.msra.mxu0 0
      %1099 = vmatprep.subr.bf16.mxu0 0
      %1100 = vmatpush1.bf16.msra.mxu0 0
      %1101 = vmatprep.subr.bf16.mxu0 0
      %1102 = vmatpush1.bf16.msra.mxu0 0
      %1103 = vmatprep.subr.bf16.mxu0 0
      %1104 = vmatpush1.bf16.msra.mxu0 0
      %1105 = vmatprep.subr.bf16.mxu0 0
      %1106 = vmatpush1.bf16.msra.mxu0 %v1087
      %1107 = vmatprep.subr.bf16.mxu0 0
      %1108 = vmatpush1.bf16.msra.mxu0 %v1086
      %1109 = vmatprep.subr.bf16.mxu0 0
      %1110 = vmatpush2.bf16.msra.mxu0 0
      %1111 = vmatprep.subr.bf16.mxu0 0
      %1112 = vmatpush2.bf16.msra.mxu0 0
      %1113 = vmatprep.subr.bf16.mxu0 0
      %1114 = vmatpush2.bf16.msra.mxu0 0
      %1115 = vmatprep.subr.bf16.mxu0 0
      %1116 = vmatpush2.bf16.msra.mxu0 0
      %1117 = vmatprep.subr.bf16.mxu0 0
      %1118 = vmatpush2.bf16.msra.mxu0 0
      %1119 = vmatprep.subr.bf16.mxu0 0
      %1120 = vmatpush2.bf16.msra.mxu0 0
      %1121 = vmatprep.subr.bf16.mxu0 0
      %1122 = vmatpush2.bf16.msra.mxu0 0
      %1123 = vmatprep.subr.bf16.mxu0 0
      %1124 = vmatpush2.bf16.msra.mxu0 0
      %1125 = vmatprep.mubr.bf16.mxu0 0
      %1126 = vmatmul.mubr.bf16.gmra.mxu0 %v1091
      %v1127 = vpop.f32.mrf.mxu0
      %v1128 = vadd.f32 0.0, %v1127
      %v1129 = vpop.f32.mrf.mxu0
      %v1130 = vpop.f32.mrf.mxu0
      %v1131 = vpop.f32.mrf.mxu0
      %1132 = vdwg.mxu0
      %v1133 = vadd.f32 %v961, %v1128
      %1134 = vrot.lane.b32.xlu0 %v602, 32
      %v1135 = vpop.permute.xlu0 %1134
      %1136 = vrot.lane.b32.xlu0 %v603, 32
      %v1137 = vpop.permute.xlu0 %1136
      %v1139 = vsel %vm618, %v1135, 0
      %v1142 = vsel %vm618, %v1137, 0
      %1144 = vmatprep.subr.bf16.mxu0 0
      %1145 = vmatpush1.bf16.xpose.msra.mxu0 0
      %1146 = vmatprep.subr.bf16.mxu0 0
      %1147 = vmatpush1.bf16.xpose.msra.mxu0 0
      %1148 = vmatprep.subr.bf16.mxu0 0
      %1149 = vmatpush1.bf16.xpose.msra.mxu0 0
      %1150 = vmatprep.subr.bf16.mxu0 0
      %1151 = vmatpush1.bf16.xpose.msra.mxu0 0
      %1152 = vmatprep.subr.bf16.mxu0 0
      %1153 = vmatpush1.bf16.xpose.msra.mxu0 0
      %1154 = vmatprep.subr.bf16.mxu0 0
      %1155 = vmatpush1.bf16.xpose.msra.mxu0 0
      %1156 = vmatprep.subr.bf16.mxu0 0
      %1157 = vmatpush1.bf16.xpose.msra.mxu0 0
      %1158 = vmatprep.subr.bf16.mxu0 0
      %1159 = vmatpush1.bf16.xpose.msra.mxu0 %v1142
      %1160 = vmatprep.subr.bf16.mxu0 0
      %1161 = vmatpush2.bf16.xpose.msra.mxu0 0
      %1162 = vmatprep.subr.bf16.mxu0 0
      %1163 = vmatpush2.bf16.xpose.msra.mxu0 0
      %1164 = vmatprep.subr.bf16.mxu0 0
      %1165 = vmatpush2.bf16.xpose.msra.mxu0 0
      %1166 = vmatprep.subr.bf16.mxu0 0
      %1167 = vmatpush2.bf16.xpose.msra.mxu0 0
      %1168 = vmatprep.subr.bf16.mxu0 0
      %1169 = vmatpush2.bf16.xpose.msra.mxu0 0
      %1170 = vmatprep.subr.bf16.mxu0 0
      %1171 = vmatpush2.bf16.xpose.msra.mxu0 0
      %1172 = vmatprep.subr.bf16.mxu0 0
      %1173 = vmatpush2.bf16.xpose.msra.mxu0 0
      %1174 = vmatprep.subr.bf16.mxu0 0
      %1175 = vmatpush2.bf16.xpose.msra.mxu0 0
      %1176 = vmatprep.mubr.bf16.mxu0 0
      %1177 = vmatmul.mubr.bf16.gmra.mxu0 %v1139
      %v1178 = vpop.f32.mrf.mxu0
      %v1179 = vadd.f32 0.0, %v1178
      %v1180 = vpop.f32.mrf.mxu0
      %v1181 = vpop.f32.mrf.mxu0
      %v1182 = vpop.f32.mrf.mxu0
      %1183 = vdwg.mxu0
      %v1184 = vsel %vm609, %v1179, -1e+30
      %v1185 = vsel %vm666, %v1184, -inf
      %1186 = vmax.xlane.f32.xlu0 %v1185
      %v1187 = vpop.xlane.xlu0 %1186
      %v1188 = vsub.f32 %v1184, %v1187
      %v1189 = vmul.f32 %v1188, 1.442695
      %v1190 = vpow.pop %v1189
      %v1191 = vsel %vm666, %v1190, 0.0
      %1192 = vadd.xlane.f32.xlu0 %v1191
      %v1193 = vpop.xlane.xlu0 %1192
      %v1194 = vpack.c.bf16 %v1190, %v1190
      %1195 = vrot.lane.b32.xlu0 %v604, 32
      %v1196 = vpop.permute.xlu0 %1195
      %v1198 = vsel %vm666, %v1194, 0
      %v1201 = vsel %vm680, %v1196, 0
      %1203 = vmatprep.subr.bf16.mxu0 0
      %1204 = vmatpush1.bf16.msra.mxu0 0
      %1205 = vmatprep.subr.bf16.mxu0 0
      %1206 = vmatpush1.bf16.msra.mxu0 0
      %1207 = vmatprep.subr.bf16.mxu0 0
      %1208 = vmatpush1.bf16.msra.mxu0 0
      %1209 = vmatprep.subr.bf16.mxu0 0
      %1210 = vmatpush1.bf16.msra.mxu0 0
      %1211 = vmatprep.subr.bf16.mxu0 0
      %1212 = vmatpush1.bf16.msra.mxu0 0
      %1213 = vmatprep.subr.bf16.mxu0 0
      %1214 = vmatpush1.bf16.msra.mxu0 0
      %1215 = vmatprep.subr.bf16.mxu0 0
      %1216 = vmatpush1.bf16.msra.mxu0 0
      %1217 = vmatprep.subr.bf16.mxu0 0
      %1218 = vmatpush1.bf16.msra.mxu0 %v1201
      %1219 = vmatprep.subr.bf16.mxu0 0
      %1220 = vmatpush2.bf16.msra.mxu0 0
      %1221 = vmatprep.subr.bf16.mxu0 0
      %1222 = vmatpush2.bf16.msra.mxu0 0
      %1223 = vmatprep.subr.bf16.mxu0 0
      %1224 = vmatpush2.bf16.msra.mxu0 0
      %1225 = vmatprep.subr.bf16.mxu0 0
      %1226 = vmatpush2.bf16.msra.mxu0 0
      %1227 = vmatprep.subr.bf16.mxu0 0
      %1228 = vmatpush2.bf16.msra.mxu0 0
      %1229 = vmatprep.subr.bf16.mxu0 0
      %1230 = vmatpush2.bf16.msra.mxu0 0
      %1231 = vmatprep.subr.bf16.mxu0 0
      %1232 = vmatpush2.bf16.msra.mxu0 0
      %1233 = vmatprep.subr.bf16.mxu0 0
      %1234 = vmatpush2.bf16.msra.mxu0 0
      %1235 = vmatprep.mubr.bf16.mxu0 0
      %1236 = vmatmul.mubr.bf16.gmra.mxu0 %v1198
      %v1237 = vpop.f32.mrf.mxu0
      %v1238 = vadd.f32 0.0, %v1237
      %v1239 = vpop.f32.mrf.mxu0
      %v1240 = vpop.f32.mrf.mxu0
      %v1241 = vpop.f32.mrf.mxu0
      %1242 = vdwg.mxu0
      %v1243 = vrcp.pop %v1193
      %v1244 = vmul.f32 %v1238, %v1243
      %v1245 = vpack.c.bf16 %v1244, %v1244
      %v1246 = vld [vmem:[%s3 + $0x30] sm:$0xf]
      %v1247 = vld [vmem:[%s3 + $0x34] sm:$0xf]
      %v1248 = vld [vmem:[%s3 + $0x38] sm:$0xf]
      %v1249 = vld [vmem:[%s3 + $0x3c] sm:$0xf]
      %v1254 = vunpack.c.l.b16 %v1246
      %v1255 = vunpack.c.l.b16 %v1247
      %v1256 = vunpack.c.l.b16 %v1248
      %v1257 = vunpack.c.l.b16 %v1249
      %v1258 = vpack.c.b16 %v1255, %v1254
      %v1259 = vpack.c.b16 %v1257, %v1256
      %v1263 = vsel %vm618, %v1245, 0
      %1265 = vmatprep.subr.bf16.mxu0 0
      %1266 = vmatpush1.bf16.msra.mxu0 0
      %1267 = vmatprep.subr.bf16.mxu0 0
      %1268 = vmatpush1.bf16.msra.mxu0 0
      %1269 = vmatprep.subr.bf16.mxu0 0
      %1270 = vmatpush1.bf16.msra.mxu0 0
      %1271 = vmatprep.subr.bf16.mxu0 0
      %1272 = vmatpush1.bf16.msra.mxu0 0
      %1273 = vmatprep.subr.bf16.mxu0 0
      %1274 = vmatpush1.bf16.msra.mxu0 0
      %1275 = vmatprep.subr.bf16.mxu0 0
      %1276 = vmatpush1.bf16.msra.mxu0 0
      %1277 = vmatprep.subr.bf16.mxu0 0
      %1278 = vmatpush1.bf16.msra.mxu0 %v1259
      %1279 = vmatprep.subr.bf16.mxu0 0
      %1280 = vmatpush1.bf16.msra.mxu0 %v1258
      %1281 = vmatprep.subr.bf16.mxu0 0
      %1282 = vmatpush2.bf16.msra.mxu0 0
      %1283 = vmatprep.subr.bf16.mxu0 0
      %1284 = vmatpush2.bf16.msra.mxu0 0
      %1285 = vmatprep.subr.bf16.mxu0 0
      %1286 = vmatpush2.bf16.msra.mxu0 0
      %1287 = vmatprep.subr.bf16.mxu0 0
      %1288 = vmatpush2.bf16.msra.mxu0 0
      %1289 = vmatprep.subr.bf16.mxu0 0
      %1290 = vmatpush2.bf16.msra.mxu0 0
      %1291 = vmatprep.subr.bf16.mxu0 0
      %1292 = vmatpush2.bf16.msra.mxu0 0
      %1293 = vmatprep.subr.bf16.mxu0 0
      %1294 = vmatpush2.bf16.msra.mxu0 0
      %1295 = vmatprep.subr.bf16.mxu0 0
      %1296 = vmatpush2.bf16.msra.mxu0 0
      %1297 = vmatprep.mubr.bf16.mxu0 0
      %1298 = vmatmul.mubr.bf16.gmra.mxu0 %v1263
      %v1299 = vpop.f32.mrf.mxu0
      %v1300 = vadd.f32 0.0, %v1299
      %v1301 = vpop.f32.mrf.mxu0
      %v1302 = vpop.f32.mrf.mxu0
      %v1303 = vpop.f32.mrf.mxu0
      %1304 = vdwg.mxu0
      %v1305 = vadd.f32 %v1133, %v1300
      %1306 = vadd.xlane.f32.xlu0 %v1305
      %v1307 = vpop.xlane.xlu0 %1306
      %v1308 = vmul.f32 %v1307, %v333
      %v1309 = vsub.f32 %v1305, %v1308
      %v1310 = vmul.f32 %v1309, %v1309
      %1311 = vadd.xlane.f32.xlu0 %v1310
      %v1312 = vpop.xlane.xlu0 %1311
      %v1313 = vmul.f32 %v1312, %v333
      %v1314 = vadd.f32 %v1313, 1e-05
      %v1315 = vrsqrt.pop %v1314
      %v1316 = vmul.f32 %v1309, %v1315
      %v1317 = vpack.c.bf16 %v1316, %v1316
      %v1318 = vld [vmem:[%s5] sm:$0xff]
      %v1319 = vld [vmem:[%s5 + $0x8] sm:$0xff]
      %v1320 = vld [vmem:[%s5 + $0x10] sm:$0xff]
      %v1321 = vld [vmem:[%s5 + $0x18] sm:$0xff]
      %v1322 = vld [vmem:[%s5 + $0x20] sm:$0xff]
      %v1323 = vld [vmem:[%s5 + $0x28] sm:$0xff]
      %v1324 = vld [vmem:[%s5 + $0x30] sm:$0xff]
      %v1325 = vld [vmem:[%s5 + $0x38] sm:$0xff]
      %v1326 = vld [vmem:[%s5 + $0x40] sm:$0xff]
      %v1327 = vld [vmem:[%s5 + $0x48] sm:$0xff]
      %v1328 = vld [vmem:[%s5 + $0x50] sm:$0xff]
      %v1329 = vld [vmem:[%s5 + $0x58] sm:$0xff]
      %v1330 = vld [vmem:[%s5 + $0x60] sm:$0xff]
      %v1331 = vld [vmem:[%s5 + $0x68] sm:$0xff]
      %v1332 = vld [vmem:[%s5 + $0x70] sm:$0xff]
      %v1333 = vld [vmem:[%s5 + $0x78] sm:$0xff]
      %v1334 = vld [vmem:[%s5 + $0x80] sm:$0xff]
      %v1335 = vld [vmem:[%s5 + $0x88] sm:$0xff]
      %v1336 = vld [vmem:[%s5 + $0x90] sm:$0xff]
      %v1337 = vld [vmem:[%s5 + $0x98] sm:$0xff]
      %v1338 = vld [vmem:[%s5 + $0xa0] sm:$0xff]
      %v1339 = vld [vmem:[%s5 + $0xa8] sm:$0xff]
      %v1340 = vld [vmem:[%s5 + $0xb0] sm:$0xff]
      %v1341 = vld [vmem:[%s5 + $0xb8] sm:$0xff]
      %v1342 = vld [vmem:[%s5 + $0xc0] sm:$0xff]
      %v1343 = vld [vmem:[%s5 + $0xc8] sm:$0xff]
      %v1344 = vld [vmem:[%s5 + $0xd0] sm:$0xff]
      %v1345 = vld [vmem:[%s5 + $0xd8] sm:$0xff]
      %v1346 = vld [vmem:[%s5 + $0xe0] sm:$0xff]
      %v1347 = vld [vmem:[%s5 + $0xe8] sm:$0xff]
      %v1348 = vld [vmem:[%s5 + $0xf0] sm:$0xff]
      %v1349 = vld [vmem:[%s5 + $0xf8] sm:$0xff]
      %v1350 = vld [vmem:[%s6] sm:$0xf]
      %v1352 = vlaneseq
      %v1353 = vshrl.u32 %v1352, 7
      %v1354 = vsub.s32 0, %v1353
      %v1355 = vrot.slane %v1350, %v1354
      %v1356 = vlaneseq
      %v1357 = vshrl.u32 %v1356, 7
      %v1358 = vsub.s32 1, %v1357
      %v1359 = vrot.slane %v1350, %v1358
      %v1360 = vlaneseq
      %v1361 = vshrl.u32 %v1360, 7
      %v1362 = vsub.s32 2, %v1361
      %v1363 = vrot.slane %v1350, %v1362
      %v1364 = vlaneseq
      %v1365 = vshrl.u32 %v1364, 7
      %v1366 = vsub.s32 3, %v1365
      %v1367 = vrot.slane %v1350, %v1366
      %v1404 = vunpack.c.l.b16 %v1318
      %v1405 = vunpack.c.h.b16 %v1318
      %v1406 = vunpack.c.l.b16 %v1319
      %v1407 = vunpack.c.h.b16 %v1319
      %v1408 = vunpack.c.l.b16 %v1320
      %v1409 = vunpack.c.h.b16 %v1320
      %v1410 = vunpack.c.l.b16 %v1321
      %v1411 = vunpack.c.h.b16 %v1321
      %v1412 = vunpack.c.l.b16 %v1322
      %v1413 = vunpack.c.h.b16 %v1322
      %v1414 = vunpack.c.l.b16 %v1323
      %v1415 = vunpack.c.h.b16 %v1323
      %v1416 = vunpack.c.l.b16 %v1324
      %v1417 = vunpack.c.h.b16 %v1324
      %v1418 = vunpack.c.l.b16 %v1325
      %v1419 = vunpack.c.h.b16 %v1325
      %v1420 = vunpack.c.l.b16 %v1326
      %v1421 = vunpack.c.h.b16 %v1326
      %v1422 = vunpack.c.l.b16 %v1327
      %v1423 = vunpack.c.h.b16 %v1327
      %v1424 = vunpack.c.l.b16 %v1328
      %v1425 = vunpack.c.h.b16 %v1328
      %v1426 = vunpack.c.l.b16 %v1329
      %v1427 = vunpack.c.h.b16 %v1329
      %v1428 = vunpack.c.l.b16 %v1330
      %v1429 = vunpack.c.h.b16 %v1330
      %v1430 = vunpack.c.l.b16 %v1331
      %v1431 = vunpack.c.h.b16 %v1331
      %v1432 = vunpack.c.l.b16 %v1332
      %v1433 = vunpack.c.h.b16 %v1332
      %v1434 = vunpack.c.l.b16 %v1333
      %v1435 = vunpack.c.h.b16 %v1333
      %v1436 = vunpack.c.l.b16 %v1334
      %v1437 = vunpack.c.h.b16 %v1334
      %v1438 = vunpack.c.l.b16 %v1335
      %v1439 = vunpack.c.h.b16 %v1335
      %v1440 = vunpack.c.l.b16 %v1336
      %v1441 = vunpack.c.h.b16 %v1336
      %v1442 = vunpack.c.l.b16 %v1337
      %v1443 = vunpack.c.h.b16 %v1337
      %v1444 = vunpack.c.l.b16 %v1338
      %v1445 = vunpack.c.h.b16 %v1338
      %v1446 = vunpack.c.l.b16 %v1339
      %v1447 = vunpack.c.h.b16 %v1339
      %v1448 = vunpack.c.l.b16 %v1340
      %v1449 = vunpack.c.h.b16 %v1340
      %v1450 = vunpack.c.l.b16 %v1341
      %v1451 = vunpack.c.h.b16 %v1341
      %v1452 = vunpack.c.l.b16 %v1342
      %v1453 = vunpack.c.h.b16 %v1342
      %v1454 = vunpack.c.l.b16 %v1343
      %v1455 = vunpack.c.h.b16 %v1343
      %v1456 = vunpack.c.l.b16 %v1344
      %v1457 = vunpack.c.h.b16 %v1344
      %v1458 = vunpack.c.l.b16 %v1345
      %v1459 = vunpack.c.h.b16 %v1345
      %v1460 = vunpack.c.l.b16 %v1346
      %v1461 = vunpack.c.h.b16 %v1346
      %v1462 = vunpack.c.l.b16 %v1347
      %v1463 = vunpack.c.h.b16 %v1347
      %v1464 = vunpack.c.l.b16 %v1348
      %v1465 = vunpack.c.h.b16 %v1348
      %v1466 = vunpack.c.l.b16 %v1349
      %v1467 = vunpack.c.h.b16 %v1349
      %v1468 = vpack.c.b16 %v1408, %v1404
      %v1469 = vpack.c.b16 %v1409, %v1405
      %v1470 = vpack.c.b16 %v1410, %v1406
      %v1471 = vpack.c.b16 %v1411, %v1407
      %v1472 = vpack.c.b16 %v1416, %v1412
      %v1473 = vpack.c.b16 %v1417, %v1413
      %v1474 = vpack.c.b16 %v1418, %v1414
      %v1475 = vpack.c.b16 %v1419, %v1415
      %v1476 = vpack.c.b16 %v1424, %v1420
      %v1477 = vpack.c.b16 %v1425, %v1421
      %v1478 = vpack.c.b16 %v1426, %v1422
      %v1479 = vpack.c.b16 %v1427, %v1423
      %v1480 = vpack.c.b16 %v1432, %v1428
      %v1481 = vpack.c.b16 %v1433, %v1429
      %v1482 = vpack.c.b16 %v1434, %v1430
      %v1483 = vpack.c.b16 %v1435, %v1431
      %v1484 = vpack.c.b16 %v1440, %v1436
      %v1485 = vpack.c.b16 %v1441, %v1437
      %v1486 = vpack.c.b16 %v1442, %v1438
      %v1487 = vpack.c.b16 %v1443, %v1439
      %v1488 = vpack.c.b16 %v1448, %v1444
      %v1489 = vpack.c.b16 %v1449, %v1445
      %v1490 = vpack.c.b16 %v1450, %v1446
      %v1491 = vpack.c.b16 %v1451, %v1447
      %v1492 = vpack.c.b16 %v1456, %v1452
      %v1493 = vpack.c.b16 %v1457, %v1453
      %v1494 = vpack.c.b16 %v1458, %v1454
      %v1495 = vpack.c.b16 %v1459, %v1455
      %v1496 = vpack.c.b16 %v1464, %v1460
      %v1497 = vpack.c.b16 %v1465, %v1461
      %v1498 = vpack.c.b16 %v1466, %v1462
      %v1499 = vpack.c.b16 %v1467, %v1463
      %1532 = vmatprep.subr.bf16.mxu0 %v1497
      %1533 = vmatpush1.bf16.msra.mxu0 %v1496
      %1534 = vmatprep.subr.bf16.mxu0 %v1493
      %1535 = vmatpush1.bf16.msra.mxu0 %v1492
      %1536 = vmatprep.subr.bf16.mxu0 %v1489
      %1537 = vmatpush1.bf16.msra.mxu0 %v1488
      %1538 = vmatprep.subr.bf16.mxu0 %v1485
      %1539 = vmatpush1.bf16.msra.mxu0 %v1484
      %1540 = vmatprep.subr.bf16.mxu0 %v1481
      %1541 = vmatpush1.bf16.msra.mxu0 %v1480
      %1542 = vmatprep.subr.bf16.mxu0 %v1477
      %1543 = vmatpush1.bf16.msra.mxu0 %v1476
      %1544 = vmatprep.subr.bf16.mxu0 %v1473
      %1545 = vmatpush1.bf16.msra.mxu0 %v1472
      %1546 = vmatprep.subr.bf16.mxu0 %v1469
      %1547 = vmatpush1.bf16.msra.mxu0 %v1468
      %1548 = vmatprep.subr.bf16.mxu0 0
      %1549 = vmatpush2.bf16.msra.mxu0 0
      %1550 = vmatprep.subr.bf16.mxu0 0
      %1551 = vmatpush2.bf16.msra.mxu0 0
      %1552 = vmatprep.subr.bf16.mxu0 0
      %1553 = vmatpush2.bf16.msra.mxu0 0
      %1554 = vmatprep.subr.bf16.mxu0 0
      %1555 = vmatpush2.bf16.msra.mxu0 0
      %1556 = vmatprep.subr.bf16.mxu0 0
      %1557 = vmatpush2.bf16.msra.mxu0 0
      %1558 = vmatprep.subr.bf16.mxu0 0
      %1559 = vmatpush2.bf16.msra.mxu0 0
      %1560 = vmatprep.subr.bf16.mxu0 0
      %1561 = vmatpush2.bf16.msra.mxu0 0
      %1562 = vmatprep.subr.bf16.mxu0 0
      %1563 = vmatpush2.bf16.msra.mxu0 0
      %1564 = vmatprep.mubr.bf16.mxu0 0
      %1565 = vmatmul.mubr.bf16.gmra.mxu0 %v1317
      %v1566 = vpop.f32.mrf.mxu0
      %v1567 = vadd.f32 %v1355, %v1566
      %v1568 = vpop.f32.mrf.mxu0
      %v1569 = vadd.f32 %v1359, %v1568
      %v1570 = vpop.f32.mrf.mxu0
      %v1571 = vpop.f32.mrf.mxu0
      %1572 = vdwg.mxu0
      %1573 = vmatprep.subr.bf16.mxu0 %v1499
      %1574 = vmatpush1.bf16.msra.mxu0 %v1498
      %1575 = vmatprep.subr.bf16.mxu0 %v1495
      %1576 = vmatpush1.bf16.msra.mxu0 %v1494
      %1577 = vmatprep.subr.bf16.mxu0 %v1491
      %1578 = vmatpush1.bf16.msra.mxu0 %v1490
      %1579 = vmatprep.subr.bf16.mxu0 %v1487
      %1580 = vmatpush1.bf16.msra.mxu0 %v1486
      %1581 = vmatprep.subr.bf16.mxu0 %v1483
      %1582 = vmatpush1.bf16.msra.mxu0 %v1482
      %1583 = vmatprep.subr.bf16.mxu0 %v1479
      %1584 = vmatpush1.bf16.msra.mxu0 %v1478
      %1585 = vmatprep.subr.bf16.mxu0 %v1475
      %1586 = vmatpush1.bf16.msra.mxu0 %v1474
      %1587 = vmatprep.subr.bf16.mxu0 %v1471
      %1588 = vmatpush1.bf16.msra.mxu0 %v1470
      %1589 = vmatprep.subr.bf16.mxu0 0
      %1590 = vmatpush2.bf16.msra.mxu0 0
      %1591 = vmatprep.subr.bf16.mxu0 0
      %1592 = vmatpush2.bf16.msra.mxu0 0
      %1593 = vmatprep.subr.bf16.mxu0 0
      %1594 = vmatpush2.bf16.msra.mxu0 0
      %1595 = vmatprep.subr.bf16.mxu0 0
      %1596 = vmatpush2.bf16.msra.mxu0 0
      %1597 = vmatprep.subr.bf16.mxu0 0
      %1598 = vmatpush2.bf16.msra.mxu0 0
      %1599 = vmatprep.subr.bf16.mxu0 0
      %1600 = vmatpush2.bf16.msra.mxu0 0
      %1601 = vmatprep.subr.bf16.mxu0 0
      %1602 = vmatpush2.bf16.msra.mxu0 0
      %1603 = vmatprep.subr.bf16.mxu0 0
      %1604 = vmatpush2.bf16.msra.mxu0 0
      %1605 = vmatprep.mubr.bf16.mxu0 0
      %1606 = vmatmul.mubr.bf16.gmra.mxu0 %v1317
      %v1607 = vpop.f32.mrf.mxu0
      %v1608 = vadd.f32 %v1363, %v1607
      %v1609 = vpop.f32.mrf.mxu0
      %v1610 = vadd.f32 %v1367, %v1609
      %v1611 = vpop.f32.mrf.mxu0
      %v1612 = vpop.f32.mrf.mxu0
      %1613 = vdwg.mxu0
      %v1614 = vmul.f32 %v1567, 1.702
      %v1615 = vmul.f32 %v1569, 1.702
      %v1616 = vmul.f32 %v1608, 1.702
      %v1617 = vmul.f32 %v1610, 1.702
      %v1618 = vxor.u32 %v1614, 2147483648
      %v1619 = vxor.u32 %v1615, 2147483648
      %v1620 = vxor.u32 %v1616, 2147483648
      %v1621 = vxor.u32 %v1617, 2147483648
      %v1622 = vmul.f32 %v1618, 1.442695
      %v1623 = vpow.pop %v1622
      %v1624 = vmul.f32 %v1619, 1.442695
      %v1625 = vpow.pop %v1624
      %v1626 = vmul.f32 %v1620, 1.442695
      %v1627 = vpow.pop %v1626
      %v1628 = vmul.f32 %v1621, 1.442695
      %v1629 = vpow.pop %v1628
      %v1630 = vadd.f32 %v1623, 1.0
      %v1631 = vadd.f32 %v1625, 1.0
      %v1632 = vadd.f32 %v1627, 1.0
      %v1633 = vadd.f32 %v1629, 1.0
      %v1634 = vrcp.pop %v1630
      %v1635 = vmul.f32 1.0, %v1634
      %v1636 = vrcp.pop %v1631
      %v1637 = vmul.f32 1.0, %v1636
      %v1638 = vrcp.pop %v1632
      %v1639 = vmul.f32 1.0, %v1638
      %v1640 = vrcp.pop %v1633
      %v1641 = vmul.f32 1.0, %v1640
      %v1642 = vmul.f32 %v1567, %v1635
      %v1643 = vmul.f32 %v1569, %v1637
      %v1644 = vmul.f32 %v1608, %v1639
      %v1645 = vmul.f32 %v1610, %v1641
      %v1646 = vpack.c.bf16 %v1642, %v1642
      %v1647 = vpack.c.bf16 %v1643, %v1643
      %v1648 = vpack.c.bf16 %v1644, %v1644
      %v1649 = vpack.c.bf16 %v1645, %v1645
      %v1650 = vld [vmem:[%s7] sm:$0xf]
      %v1651 = vld [vmem:[%s7 + $0x4] sm:$0xf]
      %v1652 = vld [vmem:[%s7 + $0x8] sm:$0xf]
      %v1653 = vld [vmem:[%s7 + $0xc] sm:$0xf]
      %v1654 = vld [vmem:[%s7 + $0x10] sm:$0xf]
      %v1655 = vld [vmem:[%s7 + $0x14] sm:$0xf]
      %v1656 = vld [vmem:[%s7 + $0x18] sm:$0xf]
      %v1657 = vld [vmem:[%s7 + $0x1c] sm:$0xf]
      %v1658 = vld [vmem:[%s7 + $0x20] sm:$0xf]
      %v1659 = vld [vmem:[%s7 + $0x24] sm:$0xf]
      %v1660 = vld [vmem:[%s7 + $0x28] sm:$0xf]
      %v1661 = vld [vmem:[%s7 + $0x2c] sm:$0xf]
      %v1662 = vld [vmem:[%s7 + $0x30] sm:$0xf]
      %v1663 = vld [vmem:[%s7 + $0x34] sm:$0xf]
      %v1664 = vld [vmem:[%s7 + $0x38] sm:$0xf]
      %v1665 = vld [vmem:[%s7 + $0x3c] sm:$0xf]
      %v1666 = vld [vmem:[%s7 + $0x40] sm:$0xf]
      %v1667 = vld [vmem:[%s7 + $0x44] sm:$0xf]
      %v1668 = vld [vmem:[%s7 + $0x48] sm:$0xf]
      %v1669 = vld [vmem:[%s7 + $0x4c] sm:$0xf]
      %v1670 = vld [vmem:[%s7 + $0x50] sm:$0xf]
      %v1671 = vld [vmem:[%s7 + $0x54] sm:$0xf]
      %v1672 = vld [vmem:[%s7 + $0x58] sm:$0xf]
      %v1673 = vld [vmem:[%s7 + $0x5c] sm:$0xf]
      %v1674 = vld [vmem:[%s7 + $0x60] sm:$0xf]
      %v1675 = vld [vmem:[%s7 + $0x64] sm:$0xf]
      %v1676 = vld [vmem:[%s7 + $0x68] sm:$0xf]
      %v1677 = vld [vmem:[%s7 + $0x6c] sm:$0xf]
      %v1678 = vld [vmem:[%s7 + $0x70] sm:$0xf]
      %v1679 = vld [vmem:[%s7 + $0x74] sm:$0xf]
      %v1680 = vld [vmem:[%s7 + $0x78] sm:$0xf]
      %v1681 = vld [vmem:[%s7 + $0x7c] sm:$0xf]
      %v1682 = vld [vmem:[%s7 + $0x80] sm:$0xf]
      %v1683 = vld [vmem:[%s7 + $0x84] sm:$0xf]
      %v1684 = vld [vmem:[%s7 + $0x88] sm:$0xf]
      %v1685 = vld [vmem:[%s7 + $0x8c] sm:$0xf]
      %v1686 = vld [vmem:[%s7 + $0x90] sm:$0xf]
      %v1687 = vld [vmem:[%s7 + $0x94] sm:$0xf]
      %v1688 = vld [vmem:[%s7 + $0x98] sm:$0xf]
      %v1689 = vld [vmem:[%s7 + $0x9c] sm:$0xf]
      %v1690 = vld [vmem:[%s7 + $0xa0] sm:$0xf]
      %v1691 = vld [vmem:[%s7 + $0xa4] sm:$0xf]
      %v1692 = vld [vmem:[%s7 + $0xa8] sm:$0xf]
      %v1693 = vld [vmem:[%s7 + $0xac] sm:$0xf]
      %v1694 = vld [vmem:[%s7 + $0xb0] sm:$0xf]
      %v1695 = vld [vmem:[%s7 + $0xb4] sm:$0xf]
      %v1696 = vld [vmem:[%s7 + $0xb8] sm:$0xf]
      %v1697 = vld [vmem:[%s7 + $0xbc] sm:$0xf]
      %v1698 = vld [vmem:[%s7 + $0xc0] sm:$0xf]
      %v1699 = vld [vmem:[%s7 + $0xc4] sm:$0xf]
      %v1700 = vld [vmem:[%s7 + $0xc8] sm:$0xf]
      %v1701 = vld [vmem:[%s7 + $0xcc] sm:$0xf]
      %v1702 = vld [vmem:[%s7 + $0xd0] sm:$0xf]
      %v1703 = vld [vmem:[%s7 + $0xd4] sm:$0xf]
      %v1704 = vld [vmem:[%s7 + $0xd8] sm:$0xf]
      %v1705 = vld [vmem:[%s7 + $0xdc] sm:$0xf]
      %v1706 = vld [vmem:[%s7 + $0xe0] sm:$0xf]
      %v1707 = vld [vmem:[%s7 + $0xe4] sm:$0xf]
      %v1708 = vld [vmem:[%s7 + $0xe8] sm:$0xf]
      %v1709 = vld [vmem:[%s7 + $0xec] sm:$0xf]
      %v1710 = vld [vmem:[%s7 + $0xf0] sm:$0xf]
      %v1711 = vld [vmem:[%s7 + $0xf4] sm:$0xf]
      %v1712 = vld [vmem:[%s7 + $0xf8] sm:$0xf]
      %v1713 = vld [vmem:[%s7 + $0xfc] sm:$0xf]
      %v1778 = vunpack.c.l.b16 %v1650
      %v1779 = vunpack.c.l.b16 %v1651
      %v1780 = vunpack.c.l.b16 %v1652
      %v1781 = vunpack.c.l.b16 %v1653
      %v1782 = vunpack.c.l.b16 %v1654
      %v1783 = vunpack.c.l.b16 %v1655
      %v1784 = vunpack.c.l.b16 %v1656
      %v1785 = vunpack.c.l.b16 %v1657
      %v1786 = vunpack.c.l.b16 %v1658
      %v1787 = vunpack.c.l.b16 %v1659
      %v1788 = vunpack.c.l.b16 %v1660
      %v1789 = vunpack.c.l.b16 %v1661
      %v1790 = vunpack.c.l.b16 %v1662
      %v1791 = vunpack.c.l.b16 %v1663
      %v1792 = vunpack.c.l.b16 %v1664
      %v1793 = vunpack.c.l.b16 %v1665
      %v1794 = vunpack.c.l.b16 %v1666
      %v1795 = vunpack.c.l.b16 %v1667
      %v1796 = vunpack.c.l.b16 %v1668
      %v1797 = vunpack.c.l.b16 %v1669
      %v1798 = vunpack.c.l.b16 %v1670
      %v1799 = vunpack.c.l.b16 %v1671
      %v1800 = vunpack.c.l.b16 %v1672
      %v1801 = vunpack.c.l.b16 %v1673
      %v1802 = vunpack.c.l.b16 %v1674
      %v1803 = vunpack.c.l.b16 %v1675
      %v1804 = vunpack.c.l.b16 %v1676
      %v1805 = vunpack.c.l.b16 %v1677
      %v1806 = vunpack.c.l.b16 %v1678
      %v1807 = vunpack.c.l.b16 %v1679
      %v1808 = vunpack.c.l.b16 %v1680
      %v1809 = vunpack.c.l.b16 %v1681
      %v1810 = vunpack.c.l.b16 %v1682
      %v1811 = vunpack.c.l.b16 %v1683
      %v1812 = vunpack.c.l.b16 %v1684
      %v1813 = vunpack.c.l.b16 %v1685
      %v1814 = vunpack.c.l.b16 %v1686
      %v1815 = vunpack.c.l.b16 %v1687
      %v1816 = vunpack.c.l.b16 %v1688
      %v1817 = vunpack.c.l.b16 %v1689
      %v1818 = vunpack.c.l.b16 %v1690
      %v1819 = vunpack.c.l.b16 %v1691
      %v1820 = vunpack.c.l.b16 %v1692
      %v1821 = vunpack.c.l.b16 %v1693
      %v1822 = vunpack.c.l.b16 %v1694
      %v1823 = vunpack.c.l.b16 %v1695
      %v1824 = vunpack.c.l.b16 %v1696
      %v1825 = vunpack.c.l.b16 %v1697
      %v1826 = vunpack.c.l.b16 %v1698
      %v1827 = vunpack.c.l.b16 %v1699
      %v1828 = vunpack.c.l.b16 %v1700
      %v1829 = vunpack.c.l.b16 %v1701
      %v1830 = vunpack.c.l.b16 %v1702
      %v1831 = vunpack.c.l.b16 %v1703
      %v1832 = vunpack.c.l.b16 %v1704
      %v1833 = vunpack.c.l.b16 %v1705
      %v1834 = vunpack.c.l.b16 %v1706
      %v1835 = vunpack.c.l.b16 %v1707
      %v1836 = vunpack.c.l.b16 %v1708
      %v1837 = vunpack.c.l.b16 %v1709
      %v1838 = vunpack.c.l.b16 %v1710
      %v1839 = vunpack.c.l.b16 %v1711
      %v1840 = vunpack.c.l.b16 %v1712
      %v1841 = vunpack.c.l.b16 %v1713
      %v1842 = vpack.c.b16 %v1779, %v1778
      %v1843 = vpack.c.b16 %v1781, %v1780
      %v1844 = vpack.c.b16 %v1783, %v1782
      %v1845 = vpack.c.b16 %v1785, %v1784
      %v1846 = vpack.c.b16 %v1787, %v1786
      %v1847 = vpack.c.b16 %v1789, %v1788
      %v1848 = vpack.c.b16 %v1791, %v1790
      %v1849 = vpack.c.b16 %v1793, %v1792
      %v1850 = vpack.c.b16 %v1795, %v1794
      %v1851 = vpack.c.b16 %v1797, %v1796
      %v1852 = vpack.c.b16 %v1799, %v1798
      %v1853 = vpack.c.b16 %v1801, %v1800
      %v1854 = vpack.c.b16 %v1803, %v1802
      %v1855 = vpack.c.b16 %v1805, %v1804
      %v1856 = vpack.c.b16 %v1807, %v1806
      %v1857 = vpack.c.b16 %v1809, %v1808
      %v1858 = vpack.c.b16 %v1811, %v1810
      %v1859 = vpack.c.b16 %v1813, %v1812
      %v1860 = vpack.c.b16 %v1815, %v1814
      %v1861 = vpack.c.b16 %v1817, %v1816
      %v1862 = vpack.c.b16 %v1819, %v1818
      %v1863 = vpack.c.b16 %v1821, %v1820
      %v1864 = vpack.c.b16 %v1823, %v1822
      %v1865 = vpack.c.b16 %v1825, %v1824
      %v1866 = vpack.c.b16 %v1827, %v1826
      %v1867 = vpack.c.b16 %v1829, %v1828
      %v1868 = vpack.c.b16 %v1831, %v1830
      %v1869 = vpack.c.b16 %v1833, %v1832
      %v1870 = vpack.c.b16 %v1835, %v1834
      %v1871 = vpack.c.b16 %v1837, %v1836
      %v1872 = vpack.c.b16 %v1839, %v1838
      %v1873 = vpack.c.b16 %v1841, %v1840
      %1906 = vmatprep.subr.bf16.mxu0 0
      %1907 = vmatpush1.bf16.msra.mxu0 %v1849
      %1908 = vmatprep.subr.bf16.mxu0 0
      %1909 = vmatpush1.bf16.msra.mxu0 %v1848
      %1910 = vmatprep.subr.bf16.mxu0 0
      %1911 = vmatpush1.bf16.msra.mxu0 %v1847
      %1912 = vmatprep.subr.bf16.mxu0 0
      %1913 = vmatpush1.bf16.msra.mxu0 %v1846
      %1914 = vmatprep.subr.bf16.mxu0 0
      %1915 = vmatpush1.bf16.msra.mxu0 %v1845
      %1916 = vmatprep.subr.bf16.mxu0 0
      %1917 = vmatpush1.bf16.msra.mxu0 %v1844
      %1918 = vmatprep.subr.bf16.mxu0 0
      %1919 = vmatpush1.bf16.msra.mxu0 %v1843
      %1920 = vmatprep.subr.bf16.mxu0 0
      %1921 = vmatpush1.bf16.msra.mxu0 %v1842
      %1922 = vmatprep.subr.bf16.mxu0 0
      %1923 = vmatpush2.bf16.msra.mxu0 %v1857
      %1924 = vmatprep.subr.bf16.mxu0 0
      %1925 = vmatpush2.bf16.msra.mxu0 %v1856
      %1926 = vmatprep.subr.bf16.mxu0 0
      %1927 = vmatpush2.bf16.msra.mxu0 %v1855
      %1928 = vmatprep.subr.bf16.mxu0 0
      %1929 = vmatpush2.bf16.msra.mxu0 %v1854
      %1930 = vmatprep.subr.bf16.mxu0 0
      %1931 = vmatpush2.bf16.msra.mxu0 %v1853
      %1932 = vmatprep.subr.bf16.mxu0 0
      %1933 = vmatpush2.bf16.msra.mxu0 %v1852
      %1934 = vmatprep.subr.bf16.mxu0 0
      %1935 = vmatpush2.bf16.msra.mxu0 %v1851
      %1936 = vmatprep.subr.bf16.mxu0 0
      %1937 = vmatpush2.bf16.msra.mxu0 %v1850
      %1938 = vmatprep.mubr.bf16.mxu0 %v1647
      %1939 = vmatmul.mubr.bf16.gmra.mxu0 %v1646
      %v1940 = vpop.f32.mrf.mxu0
      %v1941 = vadd.f32 0.0, %v1940
      %v1942 = vpop.f32.mrf.mxu0
      %v1943 = vpop.f32.mrf.mxu0
      %v1944 = vpop.f32.mrf.mxu0
      %1945 = vdwg.mxu0
      %1946 = vmatprep.subr.bf16.mxu0 0
      %1947 = vmatpush1.bf16.msra.mxu0 %v1865
      %1948 = vmatprep.subr.bf16.mxu0 0
      %1949 = vmatpush1.bf16.msra.mxu0 %v1864
      %1950 = vmatprep.subr.bf16.mxu0 0
      %1951 = vmatpush1.bf16.msra.mxu0 %v1863
      %1952 = vmatprep.subr.bf16.mxu0 0
      %1953 = vmatpush1.bf16.msra.mxu0 %v1862
      %1954 = vmatprep.subr.bf16.mxu0 0
      %1955 = vmatpush1.bf16.msra.mxu0 %v1861
      %1956 = vmatprep.subr.bf16.mxu0 0
      %1957 = vmatpush1.bf16.msra.mxu0 %v1860
      %1958 = vmatprep.subr.bf16.mxu0 0
      %1959 = vmatpush1.bf16.msra.mxu0 %v1859
      %1960 = vmatprep.subr.bf16.mxu0 0
      %1961 = vmatpush1.bf16.msra.mxu0 %v1858
      %1962 = vmatprep.subr.bf16.mxu0 0
      %1963 = vmatpush2.bf16.msra.mxu0 %v1873
      %1964 = vmatprep.subr.bf16.mxu0 0
      %1965 = vmatpush2.bf16.msra.mxu0 %v1872
      %1966 = vmatprep.subr.bf16.mxu0 0
      %1967 = vmatpush2.bf16.msra.mxu0 %v1871
      %1968 = vmatprep.subr.bf16.mxu0 0
      %1969 = vmatpush2.bf16.msra.mxu0 %v1870
      %1970 = vmatprep.subr.bf16.mxu0 0
      %1971 = vmatpush2.bf16.msra.mxu0 %v1869
      %1972 = vmatprep.subr.bf16.mxu0 0
      %1973 = vmatpush2.bf16.msra.mxu0 %v1868
      %1974 = vmatprep.subr.bf16.mxu0 0
      %1975 = vmatpush2.bf16.msra.mxu0 %v1867
      %1976 = vmatprep.subr.bf16.mxu0 0
      %1977 = vmatpush2.bf16.msra.mxu0 %v1866
      %1978 = vmatprep.mubr.bf16.mxu0 %v1649
      %1979 = vmatmul.mubr.bf16.gmra.mxu0 %v1648
      %v1980 = vpop.f32.mrf.mxu0
      %v1981 = vadd.f32 %v1941, %v1980
      %v1982 = vpop.f32.mrf.mxu0
      %v1983 = vpop.f32.mrf.mxu0
      %v1984 = vpop.f32.mrf.mxu0
      %1985 = vdwg.mxu0
      %v1986 = vadd.f32 %v1305, %v1981
      %v1987 = vld [vmem:[%s8] sm:$0x1]
      %v1989 = vlaneseq
      %v1990 = vshrl.u32 %v1989, 7
      %v1991 = vsub.s32 0, %v1990
      %v1992 = vrot.slane %v1987, %v1991
      %v1994 = vadd.f32 %v1986, %v1992
      %v1995 = vpack.c.bf16 %v1994, %v1994
      %1996 = vst [vmem:[%s327] sm:$0xf] %v1995
      %p1997 = scmp.lt.s32.totalorder %s20, 1
      %s1998 = scalar_select %p1997, %s20, 1
      %s1999 = smul.addr %s1998, 4
      %s2000 = scalar_lea.vmem %s9, %s1999
      // Predicated region
      $region57: #{clip_text_forward.5} parent=55 // pred_check
        %p2001 = pneg %p232
      $region58: #{clip_text_forward.5} parent=55 // pred_check_branch
        %2003 = sbr.rel (%p2001) target = $region60
      $region59: #{clip_text_forward.5} parent=55 // pred_region
        _
      $region60: #{clip_text_forward.5} parent=55 // pred_fallthru
        _
    $region56: #{clip_text_forward.5} parent=5 // pred_fallthru
      _
    %p2004 = scmp.le.s32.totalorder 2, %s15
    // Predicated region
    $region61: #{clip_text_forward.5} parent=5 // pred_check
      %p2005 = pneg %p2004
    $region62: #{clip_text_forward.5} parent=5 // pred_check_branch
      %2007 = sbr.rel (%p2005) target = $region64
    $region63: #{clip_text_forward.5} parent=5 // pred_region
      %s2008 = ssub.s32 %s15, 2
      // Predicated region
      $region65: #{clip_text_forward.5} parent=63 // pred_check
        %p2009 = pneg %p238
      $region66: #{clip_text_forward.5} parent=63 // pred_check_branch
        %2011 = sbr.rel (%p2009) target = $region68
      $region67: #{clip_text_forward.5} parent=63 // pred_region
        %p2012 = scmp.lt.s32.totalorder %s21, 1
        %s2013 = scalar_select %p2012, %s21, 1
        %s2014 = smul.addr %s2013, 4
        %s2015 = scalar_lea.vmem %s9, %s2014
      $region68: #{clip_text_forward.5} parent=63 // pred_fallthru
        _
    $region64: #{clip_text_forward.5} parent=5 // pred_fallthru
      _
  $region6: #{clip_text_forward.5} parent=0 // loop_footer
    %s19 = sadd.s32 1, %s15
  $region7: #{clip_text_forward.5} parent=0 // loop_footer_branch
    %14 = sbr.rel target = $region3
  $region8: #{clip_text_forward.5} parent=0 // loop_exit
    _

// kernel: clip_text_forward.4
$region0: #{clip_text_forward.4}
  #allocation0 [shape = 'u32[]', space=smem, size = 0x4, offset = 0x4, fixed_abs, tag = 'smem constant byte address 0x4 - core index']
  #allocation1 [shape = 'u32[144,128]{1,0:T(1,128)}', space=vmem, size = 0x12000, scoped, tag = 'internal scratch']
  %s0 = inlined_call_operand.vmem [shape: bf16[2,8,128], index: 0, kind: input, shape index: {}]
  %s1 = inlined_call_operand.vmem [shape: bf16[128,384], index: 1, kind: input, shape index: {}]
  %s2 = inlined_call_operand.vmem [shape: f32[1,384], index: 2, kind: input, shape index: {}]
  %s3 = inlined_call_operand.hbm [shape: bf16[128,128], index: 3, kind: input, shape index: {}]
  %s4 = inlined_call_operand.vmem [shape: f32[1,128], index: 4, kind: input, shape index: {}]
  %s5 = inlined_call_operand.hbm [shape: bf16[128,512], index: 5, kind: input, shape index: {}]
  %s6 = inlined_call_operand.vmem [shape: f32[1,512], index: 6, kind: input, shape index: {}]
  %s7 = inlined_call_operand.hbm [shape: bf16[512,128], index: 7, kind: input, shape index: {}]
  %s8 = inlined_call_operand.vmem [shape: f32[1,128], index: 8, kind: input, shape index: {}]
  %s9 = inlined_call_operand.vmem [shape: bf16[2,8,128], index: 9, kind: output, shape index: {}]
  %s10 = sld [smem:[#allocation0]]
  $region81: #{clip_text_forward.4} parent=0
    _
  %s12 = ssub.s32 1, %s10
  %s13 = scalar_select 0, %s12, %s10
  $region1: #{clip_text_forward.4} parent=0
    #allocation2 [shape = 'u8[32768]{0}', space=vmem, size = 0x8000, scoped, tag = 'input window, operand 3, single buffered']
    #allocation3 [shape = 's32[2]{0}', space=sflag, size = 0x8, scoped, tag = 'scoped memory for clip_text_forward.4']
    #allocation4 [shape = 'u8[131072]{0}', space=vmem, size = 0x20000, scoped, tag = 'input window, operand 5, single buffered']
    #allocation5 [shape = 's32[1]{0}', space=sflag, size = 0x4, scoped, tag = 'scoped memory for clip_text_forward.4']
    #allocation6 [shape = 'u8[131072]{0}', space=vmem, size = 0x20000, scoped, tag = 'input window, operand 7, single buffered']
    %14 = vsyncpa [#allocation3], 0
    %15 = vsyncpa [#allocation5], 0
    loop: start=0, step=1, limit=4
    $region2: #{clip_text_forward.4} parent=1 // loop_pre_header
      _
    $region3: #{clip_text_forward.4} parent=1 // loop_header
      %s17 = sphi 0, %s21
      %p18 = scmp.ge.s32.totalorder %s17, 4
      %s27 = sphi 0, %s29
      %s30 = sphi 0, %s27
      %s31 = sphi 0, %s30
      %s47 = sphi 0, %s31
      %s51 = sphi 0, %s51
      %s53 = sphi 0, %s51
      %s54 = sphi 0, %s53
      %s68 = sphi 0, %s54
      %s72 = sphi 0, %s72
      %s74 = sphi 0, %s72
      %s75 = sphi 0, %s74
      %s89 = sphi 0, %s75
      %s93 = sphi 0, %s93
      %s95 = sphi 0, %s93
      %s96 = sphi 0, %s95
      %s110 = sphi 0, %s96
      %s114 = sphi 0, %s114
      %s116 = sphi 0, %s114
      %s117 = sphi 0, %s116
      %s131 = sphi 0, %s117
      %s135 = sphi 0, %s135
      %s137 = sphi 0, %s135
      %s138 = sphi 0, %s137
      %s152 = sphi 0, %s138
      %s156 = sphi 0, %s156
      %s158 = sphi 0, %s156
      %s159 = sphi 0, %s158
      %s173 = sphi 0, %s159
      %s177 = sphi 0, %s177
      %s179 = sphi 0, %s177
      %s180 = sphi 0, %s179
      %s194 = sphi 0, %s180
      %s198 = sphi 0, %s198
      %s200 = sphi 0, %s198
      %s201 = sphi 0, %s200
      %s215 = sphi 0, %s201
      %s221 = sphi 0, %s223
      %s224 = sphi 0, %s221
      %s225 = sphi 0, %s224
      %s241 = sphi 0, %s225
    $region4: #{clip_text_forward.4} parent=1 // loop_header_branch
      %20 = sbr.rel (%p18) target = $region8
    $region5: #{clip_text_forward.4} parent=1 // loop_body
      %s22 = ssub.s32 %s17, 1
      %s23 = ssub.s32 %s17, 2
      %s24 = sadd.s32 %s17, 1
      %s25 = ssub.s32 %s17, %s24
      %p26 = scmp.eq.s32.totalorder %s25, 0
      %s28 = sadd.s32 %s27, 1
      %s29 = scalar_select %p26, %s27, %s28
      %p32 = pneg %p26
      %p33 = scmp.eq.s32.totalorder %s17, 1
      %p34 = por %p32, %p33
      %p35 = scmp.ne.s32.totalorder %s27, %s30
      %p36 = scmp.eq.s32.totalorder %s17, 0
      %p37 = por %p35, %p36
      %p38 = scmp.ne.s32.totalorder %s27, %s30
      %p39 = scmp.eq.s32.totalorder %s22, 1
      %p40 = por %p38, %p39
      %p41 = scmp.ne.s32.totalorder %s30, %s31
      %p42 = scmp.eq.s32.totalorder %s22, 0
      %p43 = por %p41, %p42
      %p44 = scmp.ne.s32.totalorder %s30, %s31
      %p45 = scmp.eq.s32.totalorder %s23, 1
      %p46 = por %p44, %p45
      %p48 = scmp.ne.s32.totalorder %s31, %s47
      %p49 = scmp.eq.s32.totalorder %s23, 0
      %p50 = por %p48, %p49
      %s52 = sadd.s32 %s51, 1
      %p55 = scmp.eq.s32.totalorder %s17, 1
      %p56 = scmp.ne.s32.totalorder %s51, %s53
      %p57 = scmp.eq.s32.totalorder %s17, 0
      %p58 = por %p56, %p57
      %p59 = scmp.ne.s32.totalorder %s51, %s53
      %p60 = scmp.eq.s32.totalorder %s22, 1
      %p61 = por %p59, %p60
      %p62 = scmp.ne.s32.totalorder %s53, %s54
      %p63 = scmp.eq.s32.totalorder %s22, 0
      %p64 = por %p62, %p63
      %p65 = scmp.ne.s32.totalorder %s53, %s54
      %p66 = scmp.eq.s32.totalorder %s23, 1
      %p67 = por %p65, %p66
      %p69 = scmp.ne.s32.totalorder %s54, %s68
      %p70 = scmp.eq.s32.totalorder %s23, 0
      %p71 = por %p69, %p70
      %s73 = sadd.s32 %s72, 1
      %p76 = scmp.eq.s32.totalorder %s17, 1
      %p77 = scmp.ne.s32.totalorder %s72, %s74
      %p78 = scmp.eq.s32.totalorder %s17, 0
      %p79 = por %p77, %p78
      %p80 = scmp.ne.s32.totalorder %s72, %s74
      %p81 = scmp.eq.s32.totalorder %s22, 1
      %p82 = por %p80, %p81
      %p83 = scmp.ne.s32.totalorder %s74, %s75
      %p84 = scmp.eq.s32.totalorder %s22, 0
      %p85 = por %p83, %p84
      %p86 = scmp.ne.s32.totalorder %s74, %s75
      %p87 = scmp.eq.s32.totalorder %s23, 1
      %p88 = por %p86, %p87
      %p90 = scmp.ne.s32.totalorder %s75, %s89
      %p91 = scmp.eq.s32.totalorder %s23, 0
      %p92 = por %p90, %p91
      %s94 = sadd.s32 %s93, 1
      %p97 = scmp.eq.s32.totalorder %s17, 1
      %p98 = scmp.ne.s32.totalorder %s93, %s95
      %p99 = scmp.eq.s32.totalorder %s17, 0
      %p100 = por %p98, %p99
      %p101 = scmp.ne.s32.totalorder %s93, %s95
      %p102 = scmp.eq.s32.totalorder %s22, 1
      %p103 = por %p101, %p102
      %p104 = scmp.ne.s32.totalorder %s95, %s96
      %p105 = scmp.eq.s32.totalorder %s22, 0
      %p106 = por %p104, %p105
      %p107 = scmp.ne.s32.totalorder %s95, %s96
      %p108 = scmp.eq.s32.totalorder %s23, 1
      %p109 = por %p107, %p108
      %p111 = scmp.ne.s32.totalorder %s96, %s110
      %p112 = scmp.eq.s32.totalorder %s23, 0
      %p113 = por %p111, %p112
      %s115 = sadd.s32 %s114, 1
      %p118 = scmp.eq.s32.totalorder %s17, 1
      %p119 = scmp.ne.s32.totalorder %s114, %s116
      %p120 = scmp.eq.s32.totalorder %s17, 0
      %p121 = por %p119, %p120
      %p122 = scmp.ne.s32.totalorder %s114, %s116
      %p123 = scmp.eq.s32.totalorder %s22, 1
      %p124 = por %p122, %p123
      %p125 = scmp.ne.s32.totalorder %s116, %s117
      %p126 = scmp.eq.s32.totalorder %s22, 0
      %p127 = por %p125, %p126
      %p128 = scmp.ne.s32.totalorder %s116, %s117
      %p129 = scmp.eq.s32.totalorder %s23, 1
      %p130 = por %p128, %p129
      %p132 = scmp.ne.s32.totalorder %s117, %s131
      %p133 = scmp.eq.s32.totalorder %s23, 0
      %p134 = por %p132, %p133
      %s136 = sadd.s32 %s135, 1
      %p139 = scmp.eq.s32.totalorder %s17, 1
      %p140 = scmp.ne.s32.totalorder %s135, %s137
      %p141 = scmp.eq.s32.totalorder %s17, 0
      %p142 = por %p140, %p141
      %p143 = scmp.ne.s32.totalorder %s135, %s137
      %p144 = scmp.eq.s32.totalorder %s22, 1
      %p145 = por %p143, %p144
      %p146 = scmp.ne.s32.totalorder %s137, %s138
      %p147 = scmp.eq.s32.totalorder %s22, 0
      %p148 = por %p146, %p147
      %p149 = scmp.ne.s32.totalorder %s137, %s138
      %p150 = scmp.eq.s32.totalorder %s23, 1
      %p151 = por %p149, %p150
      %p153 = scmp.ne.s32.totalorder %s138, %s152
      %p154 = scmp.eq.s32.totalorder %s23, 0
      %p155 = por %p153, %p154
      %s157 = sadd.s32 %s156, 1
      %p160 = scmp.eq.s32.totalorder %s17, 1
      %p161 = scmp.ne.s32.totalorder %s156, %s158
      %p162 = scmp.eq.s32.totalorder %s17, 0
      %p163 = por %p161, %p162
      %p164 = scmp.ne.s32.totalorder %s156, %s158
      %p165 = scmp.eq.s32.totalorder %s22, 1
      %p166 = por %p164, %p165
      %p167 = scmp.ne.s32.totalorder %s158, %s159
      %p168 = scmp.eq.s32.totalorder %s22, 0
      %p169 = por %p167, %p168
      %p170 = scmp.ne.s32.totalorder %s158, %s159
      %p171 = scmp.eq.s32.totalorder %s23, 1
      %p172 = por %p170, %p171
      %p174 = scmp.ne.s32.totalorder %s159, %s173
      %p175 = scmp.eq.s32.totalorder %s23, 0
      %p176 = por %p174, %p175
      %s178 = sadd.s32 %s177, 1
      %p181 = scmp.eq.s32.totalorder %s17, 1
      %p182 = scmp.ne.s32.totalorder %s177, %s179
      %p183 = scmp.eq.s32.totalorder %s17, 0
      %p184 = por %p182, %p183
      %p185 = scmp.ne.s32.totalorder %s177, %s179
      %p186 = scmp.eq.s32.totalorder %s22, 1
      %p187 = por %p185, %p186
      %p188 = scmp.ne.s32.totalorder %s179, %s180
      %p189 = scmp.eq.s32.totalorder %s22, 0
      %p190 = por %p188, %p189
      %p191 = scmp.ne.s32.totalorder %s179, %s180
      %p192 = scmp.eq.s32.totalorder %s23, 1
      %p193 = por %p191, %p192
      %p195 = scmp.ne.s32.totalorder %s180, %s194
      %p196 = scmp.eq.s32.totalorder %s23, 0
      %p197 = por %p195, %p196
      %s199 = sadd.s32 %s198, 1
      %p202 = scmp.eq.s32.totalorder %s17, 1
      %p203 = scmp.ne.s32.totalorder %s198, %s200
      %p204 = scmp.eq.s32.totalorder %s17, 0
      %p205 = por %p203, %p204
      %p206 = scmp.ne.s32.totalorder %s198, %s200
      %p207 = scmp.eq.s32.totalorder %s22, 1
      %p208 = por %p206, %p207
      %p209 = scmp.ne.s32.totalorder %s200, %s201
      %p210 = scmp.eq.s32.totalorder %s22, 0
      %p211 = por %p209, %p210
      %p212 = scmp.ne.s32.totalorder %s200, %s201
      %p213 = scmp.eq.s32.totalorder %s23, 1
      %p214 = por %p212, %p213
      %p216 = scmp.ne.s32.totalorder %s201, %s215
      %p217 = scmp.eq.s32.totalorder %s23, 0
      %p218 = por %p216, %p217
      %s219 = ssub.s32 %s17, %s24
      %p220 = scmp.eq.s32.totalorder %s219, 0
      %s222 = sadd.s32 %s221, 1
      %s223 = scalar_select %p220, %s221, %s222
      %p226 = pneg %p220
      %p227 = scmp.eq.s32.totalorder %s17, 1
      %p228 = por %p226, %p227
      %p229 = scmp.ne.s32.totalorder %s221, %s224
      %p230 = scmp.eq.s32.totalorder %s17, 0
      %p231 = por %p229, %p230
      %p232 = scmp.ne.s32.totalorder %s221, %s224
      %p233 = scmp.eq.s32.totalorder %s22, 1
      %p234 = por %p232, %p233
      %p235 = scmp.ne.s32.totalorder %s224, %s225
      %p236 = scmp.eq.s32.totalorder %s22, 0
      %p237 = por %p235, %p236
      %p238 = scmp.ne.s32.totalorder %s224, %s225
      %p239 = scmp.eq.s32.totalorder %s23, 1
      %p240 = por %p238, %p239
      %p242 = scmp.ne.s32.totalorder %s225, %s241
      %p243 = scmp.eq.s32.totalorder %s23, 0
      %p244 = por %p242, %p243
      %p245 = scmp.le.s32.totalorder 1, %s17
      %p246 = scmp.lt.s32.totalorder %s17, 3
      %p247 = pnand %p245, %p246
      %p248 = pneg %p247
      // Predicated region
      $region9: #{clip_text_forward.4} parent=5 // pred_check
        _
      $region10: #{clip_text_forward.4} parent=5 // pred_check_branch
        %250 = sbr.rel (%p247) target = $region12
      $region11: #{clip_text_forward.4} parent=5 // pred_region
        %s251 = ssub.s32 %s17, 1
        // Predicated region
        $region13: #{clip_text_forward.4} parent=11 // pred_check
          %p252 = pneg %p64
        $region14: #{clip_text_forward.4} parent=11 // pred_check_branch
          %254 = sbr.rel (%p252) target = $region16
        $region15: #{clip_text_forward.4} parent=11 // pred_region
          _
        $region16: #{clip_text_forward.4} parent=11 // pred_fallthru
          _
        // Predicated region
        $region17: #{clip_text_forward.4} parent=11 // pred_check
          %p255 = pneg %p85
        $region18: #{clip_text_forward.4} parent=11 // pred_check_branch
          %257 = sbr.rel (%p255) target = $region20
        $region19: #{clip_text_forward.4} parent=11 // pred_region
          _
        $region20: #{clip_text_forward.4} parent=11 // pred_fallthru
          _
        // Predicated region
        $region21: #{clip_text_forward.4} parent=11 // pred_check
          %p258 = pneg %p106
        $region22: #{clip_text_forward.4} parent=11 // pred_check_branch
          %260 = sbr.rel (%p258) target = $region24
        $region23: #{clip_text_forward.4} parent=11 // pred_region
          %s262 = ssub.s32 1024, 1024
          %263 = vsyncadd [#allocation3], %s262
          %s264 = sshll.u32 [#allocation2], 4
          %s265 = int_to_ptr.vmem [resolvable:$true] %s264
          %270 = dma.hbm_to_vmem [thread:$0]  %s3, 1024, %s265, [#allocation3], 64, 64, 4
        $region24: #{clip_text_forward.4} parent=11 // pred_fallthru
          _
        // Predicated region
        $region25: #{clip_text_forward.4} parent=11 // pred_check
          %p271 = pneg %p127
        $region26: #{clip_text_forward.4} parent=11 // pred_check_branch
          %273 = sbr.rel (%p271) target = $region28
        $region27: #{clip_text_forward.4} parent=11 // pred_region
          _
        $region28: #{clip_text_forward.4} parent=11 // pred_fallthru
          _
        // Predicated region
        $region29: #{clip_text_forward.4} parent=11 // pred_check
          %p274 = pneg %p148
        $region30: #{clip_text_forward.4} parent=11 // pred_check_branch
          %276 = sbr.rel (%p274) target = $region32
        $region31: #{clip_text_forward.4} parent=11 // pred_region
          %s278 = ssub.s32 4096, 4096
          %279 = vsyncadd [#allocation5], %s278
          %s280 = sshll.u32 [#allocation4], 4
          %s281 = int_to_ptr.vmem [resolvable:$true] %s280
          %286 = dma.hbm_to_vmem [thread:$0]  %s5, 4096, %s281, [#allocation5], 256, 256, 16
        $region32: #{clip_text_forward.4} parent=11 // pred_fallthru
          _
        // Predicated region
        $region33: #{clip_text_forward.4} parent=11 // pred_check
          %p287 = pneg %p169
        $region34: #{clip_text_forward.4} parent=11 // pred_check_branch
          %289 = sbr.rel (%p287) target = $region36
        $region35: #{clip_text_forward.4} parent=11 // pred_region
          _
        $region36: #{clip_text_forward.4} parent=11 // pred_fallthru
          _
        // Predicated region
        $region37: #{clip_text_forward.4} parent=11 // pred_check
          %p290 = pneg %p190
        $region38: #{clip_text_forward.4} parent=11 // pred_check_branch
          %292 = sbr.rel (%p290) target = $region40
        $region39: #{clip_text_forward.4} parent=11 // pred_region
          %s294 = ssub.s32 4096, 4096
          %295 = vsyncadd [#allocation5], %s294
          %s296 = sshll.u32 [#allocation6], 4
          %s297 = int_to_ptr.vmem [resolvable:$true] %s296
          %302 = dma.hbm_to_vmem [thread:$0]  %s7, 4096, %s297, [#allocation5], 64, 64, 4
        $region40: #{clip_text_forward.4} parent=11 // pred_fallthru
          _
        // Predicated region
        $region41: #{clip_text_forward.4} parent=11 // pred_check
          %p303 = pneg %p211
        $region42: #{clip_text_forward.4} parent=11 // pred_check_branch
          %305 = sbr.rel (%p303) target = $region44
        $region43: #{clip_text_forward.4} parent=11 // pred_region
          _
        $region44: #{clip_text_forward.4} parent=11 // pred_fallthru
          _
      $region12: #{clip_text_forward.4} parent=5 // pred_fallthru
        _
      %p306 = scmp.lt.s32.totalorder %s17, 2
      // Predicated region
      $region45: #{clip_text_forward.4} parent=5 // pred_check
        %p307 = pneg %p306
      $region46: #{clip_text_forward.4} parent=5 // pred_check_branch
        %309 = sbr.rel (%p307) target = $region48
      $region47: #{clip_text_forward.4} parent=5 // pred_region
        // Predicated region
        $region49: #{clip_text_forward.4} parent=47 // pred_check
          %p310 = pneg %p37
        $region50: #{clip_text_forward.4} parent=47 // pred_check_branch
          %312 = sbr.rel (%p310) target = $region52
        $region51: #{clip_text_forward.4} parent=47 // pred_region
          %p313 = scmp.lt.s32.totalorder %s17, 1
          %s314 = scalar_select %p313, %s17, 1
          %s315 = smul.addr %s314, 4
          %s316 = scalar_lea.vmem %s0, %s315
        $region52: #{clip_text_forward.4} parent=47 // pred_fallthru
          _
      $region48: #{clip_text_forward.4} parent=5 // pred_fallthru
        _
      %p317 = scmp.le.s32.totalorder 1, %s17
      %p318 = scmp.lt.s32.totalorder %s17, 3
      %p319 = pnand %p317, %p318
      %p320 = pneg %p319
      // Predicated region
      $region53: #{clip_text_forward.4} parent=5 // pred_check
        _
      $region54: #{clip_text_forward.4} parent=5 // pred_check_branch
        %322 = sbr.rel (%p319) target = $region56
      $region55: #{clip_text_forward.4} parent=5 // pred_region
        %s323 = ssub.s32 %s17, 1
        // Predicated region
        $region57: #{clip_text_forward.4} parent=55 // pred_check
          %p324 = pneg %p106
        $region58: #{clip_text_forward.4} parent=55 // pred_check_branch
          %326 = sbr.rel (%p324) target = $region60
        $region59: #{clip_text_forward.4} parent=55 // pred_region
          %327 = dma.done [#allocation3], 1024
        $region60: #{clip_text_forward.4} parent=55 // pred_fallthru
          _
        // Predicated region
        $region61: #{clip_text_forward.4} parent=55 // pred_check
          %p328 = pneg %p148
        $region62: #{clip_text_forward.4} parent=55 // pred_check_branch
          %330 = sbr.rel (%p328) target = $region64
        $region63: #{clip_text_forward.4} parent=55 // pred_region
          %331 = dma.done [#allocation5], 4096
        $region64: #{clip_text_forward.4} parent=55 // pred_fallthru
          _
        // Predicated region
        $region65: #{clip_text_forward.4} parent=55 // pred_check
          %p332 = pneg %p190
        $region66: #{clip_text_forward.4} parent=55 // pred_check_branch
          %334 = sbr.rel (%p332) target = $region68
        $region67: #{clip_text_forward.4} parent=55 // pred_region
          %335 = dma.done [#allocation5], 4096
        $region68: #{clip_text_forward.4} parent=55 // pred_fallthru
          _
        %p336 = scmp.lt.s32.totalorder %s22, 1
        %s337 = scalar_select %p336, %s22, 1
        %s338 = smul.addr %s337, 4
        %s339 = scalar_lea.vmem %s0, %s338
        %p340 = pneg %p43
        %p341 = pneg %p40
        %p342 = pneg %p64
        %p343 = pneg %p61
        %p344 = pneg %p85
        %p345 = pneg %p82
        %p346 = pneg %p106
        %p347 = pneg %p103
        %p348 = pneg %p127
        %p349 = pneg %p124
        %p350 = pneg %p148
        %p351 = pneg %p145
        %p352 = pneg %p169
        %p353 = pneg %p166
        %p354 = pneg %p190
        %p355 = pneg %p187
        %p356 = pneg %p211
        %p357 = pneg %p208
        %p358 = pneg %p237
        %p359 = pneg %p234
        %p360 = scmp.lt.s32.totalorder %s22, 1
        %s361 = scalar_select %p360, %s22, 1
        %s362 = smul.addr %s361, 4
        %s363 = scalar_lea.vmem %s9, %s362
        %p364 = scmp.lt.s32.totalorder %s22, 1
        %s365 = scalar_select %p364, %s22, 1
        %s366 = smul.addr %s365, 4
        %s367 = scalar_lea.vmem %s0, %s366
        %p368 = scmp.lt.s32.totalorder %s22, 1
        %s369 = scalar_select %p368, %s22, 1
        %s370 = smul.addr %s369, 4
        %s371 = scalar_lea.vmem %s9, %s370
        %v373 = vld [vmem:[%s367] sm:$0xf]
        %v374 = vunpack.c.l.bf16 %v373
        %375 = vadd.xlane.f32.xlu0 %v374
        %v376 = vpop.xlane.xlu0 %375
        %v377 = vrcp.pop 128.0
        %v378 = vmul.f32 %v376, %v377
        %v379 = vsub.f32 %v374, %v378
        %v380 = vmul.f32 %v379, %v379
        %381 = vadd.xlane.f32.xlu0 %v380
        %v382 = vpop.xlane.xlu0 %381
        %v383 = vmul.f32 %v382, %v377
        %v384 = vadd.f32 %v383, 1e-05
        %v385 = vrsqrt.pop %v384
        %v386 = vmul.f32 %v379, %v385
        %v387 = vpack.c.bf16 %v386, %v386
        %v388 = vld [vmem:[%s1] sm:$0xff]
        %v389 = vld [vmem:[%s1 + $0x8] sm:$0xf]
        %v390 = vld [vmem:[%s1 + $0xc] sm:$0xff]
        %v391 = vld [vmem:[%s1 + $0x14] sm:$0xf]
        %v392 = vld [vmem:[%s1 + $0x18] sm:$0xff]
        %v393 = vld [vmem:[%s1 + $0x20] sm:$0xf]
        %v394 = vld [vmem:[%s1 + $0x24] sm:$0xff]
        %v395 = vld [vmem:[%s1 + $0x2c] sm:$0xf]
        %v396 = vld [vmem:[%s1 + $0x30] sm:$0xff]
        %v397 = vld [vmem:[%s1 + $0x38] sm:$0xf]
        %v398 = vld [vmem:[%s1 + $0x3c] sm:$0xff]
        %v399 = vld [vmem:[%s1 + $0x44] sm:$0xf]
        %v400 = vld [vmem:[%s1 + $0x48] sm:$0xff]
        %v401 = vld [vmem:[%s1 + $0x50] sm:$0xf]
        %v402 = vld [vmem:[%s1 + $0x54] sm:$0xff]
        %v403 = vld [vmem:[%s1 + $0x5c] sm:$0xf]
        %v404 = vld [vmem:[%s1 + $0x60] sm:$0xff]
        %v405 = vld [vmem:[%s1 + $0x68] sm:$0xf]
        %v406 = vld [vmem:[%s1 + $0x6c] sm:$0xff]
        %v407 = vld [vmem:[%s1 + $0x74] sm:$0xf]
        %v408 = vld [vmem:[%s1 + $0x78] sm:$0xff]
        %v409 = vld [vmem:[%s1 + $0x80] sm:$0xf]
        %v410 = vld [vmem:[%s1 + $0x84] sm:$0xff]
        %v411 = vld [vmem:[%s1 + $0x8c] sm:$0xf]
        %v412 = vld [vmem:[%s1 + $0x90] sm:$0xff]
        %v413 = vld [vmem:[%s1 + $0x98] sm:$0xf]
        %v414 = vld [vmem:[%s1 + $0x9c] sm:$0xff]
        %v415 = vld [vmem:[%s1 + $0xa4] sm:$0xf]
        %v416 = vld [vmem:[%s1 + $0xa8] sm:$0xff]
        %v417 = vld [vmem:[%s1 + $0xb0] sm:$0xf]
        %v418 = vld [vmem:[%s1 + $0xb4] sm:$0xff]
        %v419 = vld [vmem:[%s1 + $0xbc] sm:$0xf]
        %v420 = vld [vmem:[%s2] sm:$0x7]
        %v422 = vlaneseq
        %v423 = vshrl.u32 %v422, 7
        %v424 = vsub.s32 0, %v423
        %v425 = vrot.slane %v420, %v424
        %v426 = vlaneseq
        %v427 = vshrl.u32 %v426, 7
        %v428 = vsub.s32 1, %v427
        %v429 = vrot.slane %v420, %v428
        %v430 = vlaneseq
        %v431 = vshrl.u32 %v430, 7
        %v432 = vsub.s32 2, %v431
        %v433 = vrot.slane %v420, %v432
        %v469 = vunpack.c.l.b16 %v388
        %v470 = vunpack.c.h.b16 %v388
        %v471 = vunpack.c.l.b16 %v389
        %v472 = vunpack.c.l.b16 %v390
        %v473 = vunpack.c.h.b16 %v390
        %v474 = vunpack.c.l.b16 %v391
        %v475 = vunpack.c.l.b16 %v392
        %v476 = vunpack.c.h.b16 %v392
        %v477 = vunpack.c.l.b16 %v393
        %v478 = vunpack.c.l.b16 %v394
        %v479 = vunpack.c.h.b16 %v394
        %v480 = vunpack.c.l.b16 %v395
        %v481 = vunpack.c.l.b16 %v396
        %v482 = vunpack.c.h.b16 %v396
        %v483 = vunpack.c.l.b16 %v397
        %v484 = vunpack.c.l.b16 %v398
        %v485 = vunpack.c.h.b16 %v398
        %v486 = vunpack.c.l.b16 %v399
        %v487 = vunpack.c.l.b16 %v400
        %v488 = vunpack.c.h.b16 %v400
        %v489 = vunpack.c.l.b16 %v401
        %v490 = vunpack.c.l.b16 %v402
        %v491 = vunpack.c.h.b16 %v402
        %v492 = vunpack.c.l.b16 %v403
        %v493 = vunpack.c.l.b16 %v404
        %v494 = vunpack.c.h.b16 %v404
        %v495 = vunpack.c.l.b16 %v405
        %v496 = vunpack.c.l.b16 %v406
        %v497 = vunpack.c.h.b16 %v406
        %v498 = vunpack.c.l.b16 %v407
        %v499 = vunpack.c.l.b16 %v408
        %v500 = vunpack.c.h.b16 %v408
        %v501 = vunpack.c.l.b16 %v409
        %v502 = vunpack.c.l.b16 %v410
        %v503 = vunpack.c.h.b16 %v410
        %v504 = vunpack.c.l.b16 %v411
        %v505 = vunpack.c.l.b16 %v412
        %v506 = vunpack.c.h.b16 %v412
        %v507 = vunpack.c.l.b16 %v413
        %v508 = vunpack.c.l.b16 %v414
        %v509 = vunpack.c.h.b16 %v414
        %v510 = vunpack.c.l.b16 %v415
        %v511 = vunpack.c.l.b16 %v416
        %v512 = vunpack.c.h.b16 %v416
        %v513 = vunpack.c.l.b16 %v417
        %v514 = vunpack.c.l.b16 %v418
        %v515 = vunpack.c.h.b16 %v418
        %v516 = vunpack.c.l.b16 %v419
        %v517 = vpack.c.b16 %v472, %v469
        %v518 = vpack.c.b16 %v473, %v470
        %v519 = vpack.c.b16 %v474, %v471
        %v520 = vpack.c.b16 %v478, %v475
        %v521 = vpack.c.b16 %v479, %v476
        %v522 = vpack.c.b16 %v480, %v477
        %v523 = vpack.c.b16 %v484, %v481
        %v524 = vpack.c.b16 %v485, %v482
        %v525 = vpack.c.b16 %v486, %v483
        %v526 = vpack.c.b16 %v490, %v487
        %v527 = vpack.c.b16 %v491, %v488
        %v528 = vpack.c.b16 %v492, %v489
        %v529 = vpack.c.b16 %v496, %v493
        %v530 = vpack.c.b16 %v497, %v494
        %v531 = vpack.c.b16 %v498, %v495
        %v532 = vpack.c.b16 %v502, %v499
        %v533 = vpack.c.b16 %v503, %v500
        %v534 = vpack.c.b16 %v504, %v501
        %v535 = vpack.c.b16 %v508, %v505
        %v536 = vpack.c.b16 %v509, %v506
        %v537 = vpack.c.b16 %v510, %v507
        %v538 = vpack.c.b16 %v514, %v511
        %v539 = vpack.c.b16 %v515, %v512
        %v540 = vpack.c.b16 %v516, %v513
        %565 = vmatprep.subr.bf16.mxu0 %v539
        %566 = vmatpush1.bf16.msra.mxu0 %v538
        %567 = vmatprep.subr.bf16.mxu0 %v536
        %568 = vmatpush1.bf16.msra.mxu0 %v535
        %569 = vmatprep.subr.bf16.mxu0 %v533
        %570 = vmatpush1.bf16.msra.mxu0 %v532
        %571 = vmatprep.subr.bf16.mxu0 %v530
        %572 = vmatpush1.bf16.msra.mxu0 %v529
        %573 = vmatprep.subr.bf16.mxu0 %v527
        %574 = vmatpush1.bf16.msra.mxu0 %v526
        %575 = vmatprep.subr.bf16.mxu0 %v524
        %576 = vmatpush1.bf16.msra.mxu0 %v523
        %577 = vmatprep.subr.bf16.mxu0 %v521
        %578 = vmatpush1.bf16.msra.mxu0 %v520
        %579 = vmatprep.subr.bf16.mxu0 %v518
        %580 = vmatpush1.bf16.msra.mxu0 %v517
        %581 = vmatprep.subr.bf16.mxu0 0
        %582 = vmatpush2.bf16.msra.mxu0 0
        %583 = vmatprep.subr.bf16.mxu0 0
        %584 = vmatpush2.bf16.msra.mxu0 0
        %585 = vmatprep.subr.bf16.mxu0 0
        %586 = vmatpush2.bf16.msra.mxu0 0
        %587 = vmatprep.subr.bf16.mxu0 0
        %588 = vmatpush2.bf16.msra.mxu0 0
        %589 = vmatprep.subr.bf16.mxu0 0
        %590 = vmatpush2.bf16.msra.mxu0 0
        %591 = vmatprep.subr.bf16.mxu0 0
        %592 = vmatpush2.bf16.msra.mxu0 0
        %593 = vmatprep.subr.bf16.mxu0 0
        %594 = vmatpush2.bf16.msra.mxu0 0
        %595 = vmatprep.subr.bf16.mxu0 0
        %596 = vmatpush2.bf16.msra.mxu0 0
        %597 = vmatprep.mubr.bf16.mxu0 0
        %598 = vmatmul.mubr.bf16.gmra.mxu0 %v387
        %v599 = vpop.f32.mrf.mxu0
        %v600 = vadd.f32 %v425, %v599
        %v601 = vpop.f32.mrf.mxu0
        %v602 = vadd.f32 %v429, %v601
        %v603 = vpop.f32.mrf.mxu0
        %v604 = vpop.f32.mrf.mxu0
        %605 = vdwg.mxu0
        %606 = vmatprep.subr.bf16.mxu0 0
        %607 = vmatpush1.bf16.msra.mxu0 %v540
        %608 = vmatprep.subr.bf16.mxu0 0
        %609 = vmatpush1.bf16.msra.mxu0 %v537
        %610 = vmatprep.subr.bf16.mxu0 0
        %611 = vmatpush1.bf16.msra.mxu0 %v534
        %612 = vmatprep.subr.bf16.mxu0 0
        %613 = vmatpush1.bf16.msra.mxu0 %v531
        %614 = vmatprep.subr.bf16.mxu0 0
        %615 = vmatpush1.bf16.msra.mxu0 %v528
        %616 = vmatprep.subr.bf16.mxu0 0
        %617 = vmatpush1.bf16.msra.mxu0 %v525
        %618 = vmatprep.subr.bf16.mxu0 0
        %619 = vmatpush1.bf16.msra.mxu0 %v522
        %620 = vmatprep.subr.bf16.mxu0 0
        %621 = vmatpush1.bf16.msra.mxu0 %v519
        %622 = vmatprep.subr.bf16.mxu0 0
        %623 = vmatpush2.bf16.msra.mxu0 0
        %624 = vmatprep.subr.bf16.mxu0 0
        %625 = vmatpush2.bf16.msra.mxu0 0
        %626 = vmatprep.subr.bf16.mxu0 0
        %627 = vmatpush2.bf16.msra.mxu0 0
        %628 = vmatprep.subr.bf16.mxu0 0
        %629 = vmatpush2.bf16.msra.mxu0 0
        %630 = vmatprep.subr.bf16.mxu0 0
        %631 = vmatpush2.bf16.msra.mxu0 0
        %632 = vmatprep.subr.bf16.mxu0 0
        %633 = vmatpush2.bf16.msra.mxu0 0
        %634 = vmatprep.subr.bf16.mxu0 0
        %635 = vmatpush2.bf16.msra.mxu0 0
        %636 = vmatprep.subr.bf16.mxu0 0
        %637 = vmatpush2.bf16.msra.mxu0 0
        %638 = vmatprep.mubr.bf16.mxu0 0
        %639 = vmatmul.mubr.bf16.gmra.mxu0 %v387
        %v640 = vpop.f32.mrf.mxu0
        %v641 = vadd.f32 %v433, %v640
        %v642 = vpop.f32.mrf.mxu0
        %v643 = vpop.f32.mrf.mxu0
        %v644 = vpop.f32.mrf.mxu0
        %645 = vdwg.mxu0
        %v646 = vpack.c.bf16 %v600, %v600
        %v647 = vpack.c.bf16 %v602, %v602
        %v648 = vpack.c.bf16 %v641, %v641
        %v649 = vlaneseq
        %v650 = vshrl.u32 %v649, 7
        %v651 = vlaneseq
        %v652 = vand.u32 %v651, 127
        %vm653 = vcmp.le.s32.totalorder %v652, %v650
        %v654 = vld [vmem:[%s4] sm:$0x1]
        %v656 = vlaneseq
        %v657 = vshrl.u32 %v656, 7
        %v658 = vsub.s32 0, %v657
        %v659 = vrot.slane %v654, %v658
        %v661 = vadd.f32 %v659, %v374
        %vm662 = vcmask 261120
        %v664 = vsel %vm662, %v646, 0
        %v667 = vsel %vm662, %v647, 0
        %669 = vmatprep.subr.bf16.mxu0 0
        %670 = vmatpush1.bf16.xpose.msra.mxu0 0
        %671 = vmatprep.subr.bf16.mxu0 0
        %672 = vmatpush1.bf16.xpose.msra.mxu0 0
        %673 = vmatprep.subr.bf16.mxu0 0
        %674 = vmatpush1.bf16.xpose.msra.mxu0 0
        %675 = vmatprep.subr.bf16.mxu0 0
        %676 = vmatpush1.bf16.xpose.msra.mxu0 0
        %677 = vmatprep.subr.bf16.mxu0 0
        %678 = vmatpush1.bf16.xpose.msra.mxu0 0
        %679 = vmatprep.subr.bf16.mxu0 0
        %680 = vmatpush1.bf16.xpose.msra.mxu0 0
        %681 = vmatprep.subr.bf16.mxu0 0
        %682 = vmatpush1.bf16.xpose.msra.mxu0 0
        %683 = vmatprep.subr.bf16.mxu0 0
        %684 = vmatpush1.bf16.xpose.msra.mxu0 %v667
        %685 = vmatprep.subr.bf16.mxu0 0
        %686 = vmatpush2.bf16.xpose.msra.mxu0 0
        %687 = vmatprep.subr.bf16.mxu0 0
        %688 = vmatpush2.bf16.xpose.msra.mxu0 0
        %689 = vmatprep.subr.bf16.mxu0 0
        %690 = vmatpush2.bf16.xpose.msra.mxu0 0
        %691 = vmatprep.subr.bf16.mxu0 0
        %692 = vmatpush2.bf16.xpose.msra.mxu0 0
        %693 = vmatprep.subr.bf16.mxu0 0
        %694 = vmatpush2.bf16.xpose.msra.mxu0 0
        %695 = vmatprep.subr.bf16.mxu0 0
        %696 = vmatpush2.bf16.xpose.msra.mxu0 0
        %697 = vmatprep.subr.bf16.mxu0 0
        %698 = vmatpush2.bf16.xpose.msra.mxu0 0
        %699 = vmatprep.subr.bf16.mxu0 0
        %700 = vmatpush2.bf16.xpose.msra.mxu0 0
        %701 = vmatprep.mubr.bf16.mxu0 0
        %702 = vmatmul.mubr.bf16.gmra.mxu0 %v664
        %v703 = vpop.f32.mrf.mxu0
        %v704 = vadd.f32 0.0, %v703
        %v705 = vpop.f32.mrf.mxu0
        %v706 = vpop.f32.mrf.mxu0
        %v707 = vpop.f32.mrf.mxu0
        %708 = vdwg.mxu0
        %v709 = vsel %vm653, %v704, -1e+30
        %vm710 = vcmask 64512
        %v711 = vsel %vm710, %v709, -inf
        %712 = vmax.xlane.f32.xlu0 %v711
        %v713 = vpop.xlane.xlu0 %712
        %v714 = vsub.f32 %v709, %v713
        %v715 = vmul.f32 %v714, 1.442695
        %v716 = vpow.pop %v715
        %v717 = vsel %vm710, %v716, 0.0
        %718 = vadd.xlane.f32.xlu0 %v717
        %v719 = vpop.xlane.xlu0 %718
        %v720 = vpack.c.bf16 %v716, %v716
        %v722 = vsel %vm710, %v720, 0
        %vm724 = vcmask 1043456
        %v726 = vsel %vm724, %v648, 0
        %728 = vmatprep.subr.bf16.mxu0 0
        %729 = vmatpush1.bf16.msra.mxu0 0
        %730 = vmatprep.subr.bf16.mxu0 0
        %731 = vmatpush1.bf16.msra.mxu0 0
        %732 = vmatprep.subr.bf16.mxu0 0
        %733 = vmatpush1.bf16.msra.mxu0 0
        %734 = vmatprep.subr.bf16.mxu0 0
        %735 = vmatpush1.bf16.msra.mxu0 0
        %736 = vmatprep.subr.bf16.mxu0 0
        %737 = vmatpush1.bf16.msra.mxu0 0
        %738 = vmatprep.subr.bf16.mxu0 0
        %739 = vmatpush1.bf16.msra.mxu0 0
        %740 = vmatprep.subr.bf16.mxu0 0
        %741 = vmatpush1.bf16.msra.mxu0 0
        %742 = vmatprep.subr.bf16.mxu0 0
        %743 = vmatpush1.bf16.msra.mxu0 %v726
        %744 = vmatprep.subr.bf16.mxu0 0
        %745 = vmatpush2.bf16.msra.mxu0 0
        %746 = vmatprep.subr.bf16.mxu0 0
        %747 = vmatpush2.bf16.msra.mxu0 0
        %748 = vmatprep.subr.bf16.mxu0 0
        %749 = vmatpush2.bf16.msra.mxu0 0
        %750 = vmatprep.subr.bf16.mxu0 0
        %751 = vmatpush2.bf16.msra.mxu0 0
        %752 = vmatprep.subr.bf16.mxu0 0
        %753 = vmatpush2.bf16.msra.mxu0 0
        %754 = vmatprep.subr.bf16.mxu0 0
        %755 = vmatpush2.bf16.msra.mxu0 0
        %756 = vmatprep.subr.bf16.mxu0 0
        %757 = vmatpush2.bf16.msra.mxu0 0
        %758 = vmatprep.subr.bf16.mxu0 0
        %759 = vmatpush2.bf16.msra.mxu0 0
        %760 = vmatprep.mubr.bf16.mxu0 0
        %761 = vmatmul.mubr.bf16.gmra.mxu0 %v722
        %v762 = vpop.f32.mrf.mxu0
        %v763 = vadd.f32 0.0, %v762
        %v764 = vpop.f32.mrf.mxu0
        %v765 = vpop.f32.mrf.mxu0
        %v766 = vpop.f32.mrf.mxu0
        %767 = vdwg.mxu0
        %v768 = vrcp.pop %v719
        %v769 = vmul.f32 %v763, %v768
        %v770 = vpack.c.bf16 %v769, %v769
        %v771 = vld [vmem:[#allocation2] sm:$0xf]
        %v772 = vld [vmem:[#allocation2 + $0x4] sm:$0xf]
        %v773 = vld [vmem:[#allocation2 + $0x8] sm:$0xf]
        %v774 = vld [vmem:[#allocation2 + $0xc] sm:$0xf]
        %v779 = vunpack.c.l.b16 %v771
        %v780 = vunpack.c.l.b16 %v772
        %v781 = vunpack.c.l.b16 %v773
        %v782 = vunpack.c.l.b16 %v774
        %v783 = vpack.c.b16 %v780, %v779
        %v784 = vpack.c.b16 %v782, %v781
        %v788 = vsel %vm662, %v770, 0
        %790 = vmatprep.subr.bf16.mxu0 0
        %791 = vmatpush1.bf16.msra.mxu0 0
        %792 = vmatprep.subr.bf16.mxu0 0
        %793 = vmatpush1.bf16.msra.mxu0 0
        %794 = vmatprep.subr.bf16.mxu0 0
        %795 = vmatpush1.bf16.msra.mxu0 0
        %796 = vmatprep.subr.bf16.mxu0 0
        %797 = vmatpush1.bf16.msra.mxu0 0
        %798 = vmatprep.subr.bf16.mxu0 0
        %799 = vmatpush1.bf16.msra.mxu0 0
        %800 = vmatprep.subr.bf16.mxu0 0
        %801 = vmatpush1.bf16.msra.mxu0 0
        %802 = vmatprep.subr.bf16.mxu0 0
        %803 = vmatpush1.bf16.msra.mxu0 %v784
        %804 = vmatprep.subr.bf16.mxu0 0
        %805 = vmatpush1.bf16.msra.mxu0 %v783
        %806 = vmatprep.subr.bf16.mxu0 0
        %807 = vmatpush2.bf16.msra.mxu0 0
        %808 = vmatprep.subr.bf16.mxu0 0
        %809 = vmatpush2.bf16.msra.mxu0 0
        %810 = vmatprep.subr.bf16.mxu0 0
        %811 = vmatpush2.bf16.msra.mxu0 0
        %812 = vmatprep.subr.bf16.mxu0 0
        %813 = vmatpush2.bf16.msra.mxu0 0
        %814 = vmatprep.subr.bf16.mxu0 0
        %815 = vmatpush2.bf16.msra.mxu0 0
        %816 = vmatprep.subr.bf16.mxu0 0
        %817 = vmatpush2.bf16.msra.mxu0 0
        %818 = vmatprep.subr.bf16.mxu0 0
        %819 = vmatpush2.bf16.msra.mxu0 0
        %820 = vmatprep.subr.bf16.mxu0 0
        %821 = vmatpush2.bf16.msra.mxu0 0
        %822 = vmatprep.mubr.bf16.mxu0 0
        %823 = vmatmul.mubr.bf16.gmra.mxu0 %v788
        %v824 = vpop.f32.mrf.mxu0
        %v825 = vadd.f32 0.0, %v824
        %v826 = vpop.f32.mrf.mxu0
        %v827 = vpop.f32.mrf.mxu0
        %v828 = vpop.f32.mrf.mxu0
        %829 = vdwg.mxu0
        %v830 = vadd.f32 %v661, %v825
        %832 = vrot.lane.b32.xlu0 %v646, 96
        %v833 = vpop.permute.xlu0 %832
        %835 = vrot.lane.b32.xlu0 %v647, 96
        %v836 = vpop.permute.xlu0 %835
        %v838 = vsel %vm662, %v833, 0
        %v841 = vsel %vm662, %v836, 0
        %843 = vmatprep.subr.bf16.mxu0 0
        %844 = vmatpush1.bf16.xpose.msra.mxu0 0
        %845 = vmatprep.subr.bf16.mxu0 0
        %846 = vmatpush1.bf16.xpose.msra.mxu0 0
        %847 = vmatprep.subr.bf16.mxu0 0
        %848 = vmatpush1.bf16.xpose.msra.mxu0 0
        %849 = vmatprep.subr.bf16.mxu0 0
        %850 = vmatpush1.bf16.xpose.msra.mxu0 0
        %851 = vmatprep.subr.bf16.mxu0 0
        %852 = vmatpush1.bf16.xpose.msra.mxu0 0
        %853 = vmatprep.subr.bf16.mxu0 0
        %854 = vmatpush1.bf16.xpose.msra.mxu0 0
        %855 = vmatprep.subr.bf16.mxu0 0
        %856 = vmatpush1.bf16.xpose.msra.mxu0 0
        %857 = vmatprep.subr.bf16.mxu0 0
        %858 = vmatpush1.bf16.xpose.msra.mxu0 %v841
        %859 = vmatprep.subr.bf16.mxu0 0
        %860 = vmatpush2.bf16.xpose.msra.mxu0 0
        %861 = vmatprep.subr.bf16.mxu0 0
        %862 = vmatpush2.bf16.xpose.msra.mxu0 0
        %863 = vmatprep.subr.bf16.mxu0 0
        %864 = vmatpush2.bf16.xpose.msra.mxu0 0
        %865 = vmatprep.subr.bf16.mxu0 0
        %866 = vmatpush2.bf16.xpose.msra.mxu0 0
        %867 = vmatprep.subr.bf16.mxu0 0
        %868 = vmatpush2.bf16.xpose.msra.mxu0 0
        %869 = vmatprep.subr.bf16.mxu0 0
        %870 = vmatpush2.bf16.xpose.msra.mxu0 0
        %871 = vmatprep.subr.bf16.mxu0 0
        %872 = vmatpush2.bf16.xpose.msra.mxu0 0
        %873 = vmatprep.subr.bf16.mxu0 0
        %874 = vmatpush2.bf16.xpose.msra.mxu0 0
        %875 = vmatprep.mubr.bf16.mxu0 0
        %876 = vmatmul.mubr.bf16.gmra.mxu0 %v838
        %v877 = vpop.f32.mrf.mxu0
        %v878 = vadd.f32 0.0, %v877
        %v879 = vpop.f32.mrf.mxu0
        %v880 = vpop.f32.mrf.mxu0
        %v881 = vpop.f32.mrf.mxu0
        %882 = vdwg.mxu0
        %v883 = vsel %vm653, %v878, -1e+30
        %v884 = vsel %vm710, %v883, -inf
        %885 = vmax.xlane.f32.xlu0 %v884
        %v886 = vpop.xlane.xlu0 %885
        %v887 = vsub.f32 %v883, %v886
        %v888 = vmul.f32 %v887, 1.442695
        %v889 = vpow.pop %v888
        %v890 = vsel %vm710, %v889, 0.0
        %891 = vadd.xlane.f32.xlu0 %v890
        %v892 = vpop.xlane.xlu0 %891
        %v893 = vpack.c.bf16 %v889, %v889
        %895 = vrot.lane.b32.xlu0 %v648, 96
        %v896 = vpop.permute.xlu0 %895
        %v898 = vsel %vm710, %v893, 0
        %v901 = vsel %vm724, %v896, 0
        %903 = vmatprep.subr.bf16.mxu0 0
        %904 = vmatpush1.bf16.msra.mxu0 0
        %905 = vmatprep.subr.bf16.mxu0 0
        %906 = vmatpush1.bf16.msra.mxu0 0
        %907 = vmatprep.subr.bf16.mxu0 0
        %908 = vmatpush1.bf16.msra.mxu0 0
        %909 = vmatprep.subr.bf16.mxu0 0
        %910 = vmatpush1.bf16.msra.mxu0 0
        %911 = vmatprep.subr.bf16.mxu0 0
        %912 = vmatpush1.bf16.msra.mxu0 0
        %913 = vmatprep.subr.bf16.mxu0 0
        %914 = vmatpush1.bf16.msra.mxu0 0
        %915 = vmatprep.subr.bf16.mxu0 0
        %916 = vmatpush1.bf16.msra.mxu0 0
        %917 = vmatprep.subr.bf16.mxu0 0
        %918 = vmatpush1.bf16.msra.mxu0 %v901
        %919 = vmatprep.subr.bf16.mxu0 0
        %920 = vmatpush2.bf16.msra.mxu0 0
        %921 = vmatprep.subr.bf16.mxu0 0
        %922 = vmatpush2.bf16.msra.mxu0 0
        %923 = vmatprep.subr.bf16.mxu0 0
        %924 = vmatpush2.bf16.msra.mxu0 0
        %925 = vmatprep.subr.bf16.mxu0 0
        %926 = vmatpush2.bf16.msra.mxu0 0
        %927 = vmatprep.subr.bf16.mxu0 0
        %928 = vmatpush2.bf16.msra.mxu0 0
        %929 = vmatprep.subr.bf16.mxu0 0
        %930 = vmatpush2.bf16.msra.mxu0 0
        %931 = vmatprep.subr.bf16.mxu0 0
        %932 = vmatpush2.bf16.msra.mxu0 0
        %933 = vmatprep.subr.bf16.mxu0 0
        %934 = vmatpush2.bf16.msra.mxu0 0
        %935 = vmatprep.mubr.bf16.mxu0 0
        %936 = vmatmul.mubr.bf16.gmra.mxu0 %v898
        %v937 = vpop.f32.mrf.mxu0
        %v938 = vadd.f32 0.0, %v937
        %v939 = vpop.f32.mrf.mxu0
        %v940 = vpop.f32.mrf.mxu0
        %v941 = vpop.f32.mrf.mxu0
        %942 = vdwg.mxu0
        %v943 = vrcp.pop %v892
        %v944 = vmul.f32 %v938, %v943
        %v945 = vpack.c.bf16 %v944, %v944
        %v946 = vld [vmem:[#allocation2 + $0x10] sm:$0xf]
        %v947 = vld [vmem:[#allocation2 + $0x14] sm:$0xf]
        %v948 = vld [vmem:[#allocation2 + $0x18] sm:$0xf]
        %v949 = vld [vmem:[#allocation2 + $0x1c] sm:$0xf]
        %v954 = vunpack.c.l.b16 %v946
        %v955 = vunpack.c.l.b16 %v947
        %v956 = vunpack.c.l.b16 %v948
        %v957 = vunpack.c.l.b16 %v949
        %v958 = vpack.c.b16 %v955, %v954
        %v959 = vpack.c.b16 %v957, %v956
        %v963 = vsel %vm662, %v945, 0
        %965 = vmatprep.subr.bf16.mxu0 0
        %966 = vmatpush1.bf16.msra.mxu0 0
        %967 = vmatprep.subr.bf16.mxu0 0
        %968 = vmatpush1.bf16.msra.mxu0 0
        %969 = vmatprep.subr.bf16.mxu0 0
        %970 = vmatpush1.bf16.msra.mxu0 0
        %971 = vmatprep.subr.bf16.mxu0 0
        %972 = vmatpush1.bf16.msra.mxu0 0
        %973 = vmatprep.subr.bf16.mxu0 0
        %974 = vmatpush1.bf16.msra.mxu0 0
        %975 = vmatprep.subr.bf16.mxu0 0
        %976 = vmatpush1.bf16.msra.mxu0 0
        %977 = vmatprep.subr.bf16.mxu0 0
        %978 = vmatpush1.bf16.msra.mxu0 %v959
        %979 = vmatprep.subr.bf16.mxu0 0
        %980 = vmatpush1.bf16.msra.mxu0 %v958
        %981 = vmatprep.subr.bf16.mxu0 0
        %982 = vmatpush2.bf16.msra.mxu0 0
        %983 = vmatprep.subr.bf16.mxu0 0
        %984 = vmatpush2.bf16.msra.mxu0 0
        %985 = vmatprep.subr.bf16.mxu0 0
        %986 = vmatpush2.bf16.msra.mxu0 0
        %987 = vmatprep.subr.bf16.mxu0 0
        %988 = vmatpush2.bf16.msra.mxu0 0
        %989 = vmatprep.subr.bf16.mxu0 0
        %990 = vmatpush2.bf16.msra.mxu0 0
        %991 = vmatprep.subr.bf16.mxu0 0
        %992 = vmatpush2.bf16.msra.mxu0 0
        %993 = vmatprep.subr.bf16.mxu0 0
        %994 = vmatpush2.bf16.msra.mxu0 0
        %995 = vmatprep.subr.bf16.mxu0 0
        %996 = vmatpush2.bf16.msra.mxu0 0
        %997 = vmatprep.mubr.bf16.mxu0 0
        %998 = vmatmul.mubr.bf16.gmra.mxu0 %v963
        %v999 = vpop.f32.mrf.mxu0
        %v1000 = vadd.f32 0.0, %v999
        %v1001 = vpop.f32.mrf.mxu0
        %v1002 = vpop.f32.mrf.mxu0
        %v1003 = vpop.f32.mrf.mxu0
        %1004 = vdwg.mxu0
        %v1005 = vadd.f32 %v830, %v1000
        %1006 = vrot.lane.b32.xlu0 %v646, 64
        %v1007 = vpop.permute.xlu0 %1006
        %1008 = vrot.lane.b32.xlu0 %v647, 64
        %v1009 = vpop.permute.xlu0 %1008
        %v1011 = vsel %vm662, %v1007, 0
        %v1014 = vsel %vm662, %v1009, 0
        %1016 = vmatprep.subr.bf16.mxu0 0
        %1017 = vmatpush1.bf16.xpose.msra.mxu0 0
        %1018 = vmatprep.subr.bf16.mxu0 0
        %1019 = vmatpush1.bf16.xpose.msra.mxu0 0
        %1020 = vmatprep.subr.bf16.mxu0 0
        %1021 = vmatpush1.bf16.xpose.msra.mxu0 0
        %1022 = vmatprep.subr.bf16.mxu0 0
        %1023 = vmatpush1.bf16.xpose.msra.mxu0 0
        %1024 = vmatprep.subr.bf16.mxu0 0
        %1025 = vmatpush1.bf16.xpose.msra.mxu0 0
        %1026 = vmatprep.subr.bf16.mxu0 0
        %1027 = vmatpush1.bf16.xpose.msra.mxu0 0
        %1028 = vmatprep.subr.bf16.mxu0 0
        %1029 = vmatpush1.bf16.xpose.msra.mxu0 0
        %1030 = vmatprep.subr.bf16.mxu0 0
        %1031 = vmatpush1.bf16.xpose.msra.mxu0 %v1014
        %1032 = vmatprep.subr.bf16.mxu0 0
        %1033 = vmatpush2.bf16.xpose.msra.mxu0 0
        %1034 = vmatprep.subr.bf16.mxu0 0
        %1035 = vmatpush2.bf16.xpose.msra.mxu0 0
        %1036 = vmatprep.subr.bf16.mxu0 0
        %1037 = vmatpush2.bf16.xpose.msra.mxu0 0
        %1038 = vmatprep.subr.bf16.mxu0 0
        %1039 = vmatpush2.bf16.xpose.msra.mxu0 0
        %1040 = vmatprep.subr.bf16.mxu0 0
        %1041 = vmatpush2.bf16.xpose.msra.mxu0 0
        %1042 = vmatprep.subr.bf16.mxu0 0
        %1043 = vmatpush2.bf16.xpose.msra.mxu0 0
        %1044 = vmatprep.subr.bf16.mxu0 0
        %1045 = vmatpush2.bf16.xpose.msra.mxu0 0
        %1046 = vmatprep.subr.bf16.mxu0 0
        %1047 = vmatpush2.bf16.xpose.msra.mxu0 0
        %1048 = vmatprep.mubr.bf16.mxu0 0
        %1049 = vmatmul.mubr.bf16.gmra.mxu0 %v1011
        %v1050 = vpop.f32.mrf.mxu0
        %v1051 = vadd.f32 0.0, %v1050
        %v1052 = vpop.f32.mrf.mxu0
        %v1053 = vpop.f32.mrf.mxu0
        %v1054 = vpop.f32.mrf.mxu0
        %1055 = vdwg.mxu0
        %v1056 = vsel %vm653, %v1051, -1e+30
        %v1057 = vsel %vm710, %v1056, -inf
        %1058 = vmax.xlane.f32.xlu0 %v1057
        %v1059 = vpop.xlane.xlu0 %1058
        %v1060 = vsub.f32 %v1056, %v1059
        %v1061 = vmul.f32 %v1060, 1.442695
        %v1062 = vpow.pop %v1061
        %v1063 = vsel %vm710, %v1062, 0.0
        %1064 = vadd.xlane.f32.xlu0 %v1063
        %v1065 = vpop.xlane.xlu0 %1064
        %v1066 = vpack.c.bf16 %v1062, %v1062
        %1067 = vrot.lane.b32.xlu0 %v648, 64
        %v1068 = vpop.permute.xlu0 %1067
        %v1070 = vsel %vm710, %v1066, 0
        %v1073 = vsel %vm724, %v1068, 0
        %1075 = vmatprep.subr.bf16.mxu0 0
        %1076 = vmatpush1.bf16.msra.mxu0 0
        %1077 = vmatprep.subr.bf16.mxu0 0
        %1078 = vmatpush1.bf16.msra.mxu0 0
        %1079 = vmatprep.subr.bf16.mxu0 0
        %1080 = vmatpush1.bf16.msra.mxu0 0
        %1081 = vmatprep.subr.bf16.mxu0 0
        %1082 = vmatpush1.bf16.msra.mxu0 0
        %1083 = vmatprep.subr.bf16.mxu0 0
        %1084 = vmatpush1.bf16.msra.mxu0 0
        %1085 = vmatprep.subr.bf16.mxu0 0
        %1086 = vmatpush1.bf16.msra.mxu0 0
        %1087 = vmatprep.subr.bf16.mxu0 0
        %1088 = vmatpush1.bf16.msra.mxu0 0
        %1089 = vmatprep.subr.bf16.mxu0 0
        %1090 = vmatpush1.bf16.msra.mxu0 %v1073
        %1091 = vmatprep.subr.bf16.mxu0 0
        %1092 = vmatpush2.bf16.msra.mxu0 0
        %1093 = vmatprep.subr.bf16.mxu0 0
        %1094 = vmatpush2.bf16.msra.mxu0 0
        %1095 = vmatprep.subr.bf16.mxu0 0
        %1096 = vmatpush2.bf16.msra.mxu0 0
        %1097 = vmatprep.subr.bf16.mxu0 0
        %1098 = vmatpush2.bf16.msra.mxu0 0
        %1099 = vmatprep.subr.bf16.mxu0 0
        %1100 = vmatpush2.bf16.msra.mxu0 0
        %1101 = vmatprep.subr.bf16.mxu0 0
        %1102 = vmatpush2.bf16.msra.mxu0 0
        %1103 = vmatprep.subr.bf16.mxu0 0
        %1104 = vmatpush2.bf16.msra.mxu0 0
        %1105 = vmatprep.subr.bf16.mxu0 0
        %1106 = vmatpush2.bf16.msra.mxu0 0
        %1107 = vmatprep.mubr.bf16.mxu0 0
        %1108 = vmatmul.mubr.bf16.gmra.mxu0 %v1070
        %v1109 = vpop.f32.mrf.mxu0
        %v1110 = vadd.f32 0.0, %v1109
        %v1111 = vpop.f32.mrf.mxu0
        %v1112 = vpop.f32.mrf.mxu0
        %v1113 = vpop.f32.mrf.mxu0
        %1114 = vdwg.mxu0
        %v1115 = vrcp.pop %v1065
        %v1116 = vmul.f32 %v1110, %v1115
        %v1117 = vpack.c.bf16 %v1116, %v1116
        %v1118 = vld [vmem:[#allocation2 + $0x20] sm:$0xf]
        %v1119 = vld [vmem:[#allocation2 + $0x24] sm:$0xf]
        %v1120 = vld [vmem:[#allocation2 + $0x28] sm:$0xf]
        %v1121 = vld [vmem:[#allocation2 + $0x2c] sm:$0xf]
        %v1126 = vunpack.c.l.b16 %v1118
        %v1127 = vunpack.c.l.b16 %v1119
        %v1128 = vunpack.c.l.b16 %v1120
        %v1129 = vunpack.c.l.b16 %v1121
        %v1130 = vpack.c.b16 %v1127, %v1126
        %v1131 = vpack.c.b16 %v1129, %v1128
        %v1135 = vsel %vm662, %v1117, 0
        %1137 = vmatprep.subr.bf16.mxu0 0
        %1138 = vmatpush1.bf16.msra.mxu0 0
        %1139 = vmatprep.subr.bf16.mxu0 0
        %1140 = vmatpush1.bf16.msra.mxu0 0
        %1141 = vmatprep.subr.bf16.mxu0 0
        %1142 = vmatpush1.bf16.msra.mxu0 0
        %1143 = vmatprep.subr.bf16.mxu0 0
        %1144 = vmatpush1.bf16.msra.mxu0 0
        %1145 = vmatprep.subr.bf16.mxu0 0
        %1146 = vmatpush1.bf16.msra.mxu0 0
        %1147 = vmatprep.subr.bf16.mxu0 0
        %1148 = vmatpush1.bf16.msra.mxu0 0
        %1149 = vmatprep.subr.bf16.mxu0 0
        %1150 = vmatpush1.bf16.msra.mxu0 %v1131
        %1151 = vmatprep.subr.bf16.mxu0 0
        %1152 = vmatpush1.bf16.msra.mxu0 %v1130
        %1153 = vmatprep.subr.bf16.mxu0 0
        %1154 = vmatpush2.bf16.msra.mxu0 0
        %1155 = vmatprep.subr.bf16.mxu0 0
        %1156 = vmatpush2.bf16.msra.mxu0 0
        %1157 = vmatprep.subr.bf16.mxu0 0
        %1158 = vmatpush2.bf16.msra.mxu0 0
        %1159 = vmatprep.subr.bf16.mxu0 0
        %1160 = vmatpush2.bf16.msra.mxu0 0
        %1161 = vmatprep.subr.bf16.mxu0 0
        %1162 = vmatpush2.bf16.msra.mxu0 0
        %1163 = vmatprep.subr.bf16.mxu0 0
        %1164 = vmatpush2.bf16.msra.mxu0 0
        %1165 = vmatprep.subr.bf16.mxu0 0
        %1166 = vmatpush2.bf16.msra.mxu0 0
        %1167 = vmatprep.subr.bf16.mxu0 0
        %1168 = vmatpush2.bf16.msra.mxu0 0
        %1169 = vmatprep.mubr.bf16.mxu0 0
        %1170 = vmatmul.mubr.bf16.gmra.mxu0 %v1135
        %v1171 = vpop.f32.mrf.mxu0
        %v1172 = vadd.f32 0.0, %v1171
        %v1173 = vpop.f32.mrf.mxu0
        %v1174 = vpop.f32.mrf.mxu0
        %v1175 = vpop.f32.mrf.mxu0
        %1176 = vdwg.mxu0
        %v1177 = vadd.f32 %v1005, %v1172
        %1178 = vrot.lane.b32.xlu0 %v646, 32
        %v1179 = vpop.permute.xlu0 %1178
        %1180 = vrot.lane.b32.xlu0 %v647, 32
        %v1181 = vpop.permute.xlu0 %1180
        %v1183 = vsel %vm662, %v1179, 0
        %v1186 = vsel %vm662, %v1181, 0
        %1188 = vmatprep.subr.bf16.mxu0 0
        %1189 = vmatpush1.bf16.xpose.msra.mxu0 0
        %1190 = vmatprep.subr.bf16.mxu0 0
        %1191 = vmatpush1.bf16.xpose.msra.mxu0 0
        %1192 = vmatprep.subr.bf16.mxu0 0
        %1193 = vmatpush1.bf16.xpose.msra.mxu0 0
        %1194 = vmatprep.subr.bf16.mxu0 0
        %1195 = vmatpush1.bf16.xpose.msra.mxu0 0
        %1196 = vmatprep.subr.bf16.mxu0 0
        %1197 = vmatpush1.bf16.xpose.msra.mxu0 0
        %1198 = vmatprep.subr.bf16.mxu0 0
        %1199 = vmatpush1.bf16.xpose.msra.mxu0 0
        %1200 = vmatprep.subr.bf16.mxu0 0
        %1201 = vmatpush1.bf16.xpose.msra.mxu0 0
        %1202 = vmatprep.subr.bf16.mxu0 0
        %1203 = vmatpush1.bf16.xpose.msra.mxu0 %v1186
        %1204 = vmatprep.subr.bf16.mxu0 0
        %1205 = vmatpush2.bf16.xpose.msra.mxu0 0
        %1206 = vmatprep.subr.bf16.mxu0 0
        %1207 = vmatpush2.bf16.xpose.msra.mxu0 0
        %1208 = vmatprep.subr.bf16.mxu0 0
        %1209 = vmatpush2.bf16.xpose.msra.mxu0 0
        %1210 = vmatprep.subr.bf16.mxu0 0
        %1211 = vmatpush2.bf16.xpose.msra.mxu0 0
        %1212 = vmatprep.subr.bf16.mxu0 0
        %1213 = vmatpush2.bf16.xpose.msra.mxu0 0
        %1214 = vmatprep.subr.bf16.mxu0 0
        %1215 = vmatpush2.bf16.xpose.msra.mxu0 0
        %1216 = vmatprep.subr.bf16.mxu0 0
        %1217 = vmatpush2.bf16.xpose.msra.mxu0 0
        %1218 = vmatprep.subr.bf16.mxu0 0
        %1219 = vmatpush2.bf16.xpose.msra.mxu0 0
        %1220 = vmatprep.mubr.bf16.mxu0 0
        %1221 = vmatmul.mubr.bf16.gmra.mxu0 %v1183
        %v1222 = vpop.f32.mrf.mxu0
        %v1223 = vadd.f32 0.0, %v1222
        %v1224 = vpop.f32.mrf.mxu0
        %v1225 = vpop.f32.mrf.mxu0
        %v1226 = vpop.f32.mrf.mxu0
        %1227 = vdwg.mxu0
        %v1228 = vsel %vm653, %v1223, -1e+30
        %v1229 = vsel %vm710, %v1228, -inf
        %1230 = vmax.xlane.f32.xlu0 %v1229
        %v1231 = vpop.xlane.xlu0 %1230
        %v1232 = vsub.f32 %v1228, %v1231
        %v1233 = vmul.f32 %v1232, 1.442695
        %v1234 = vpow.pop %v1233
        %v1235 = vsel %vm710, %v1234, 0.0
        %1236 = vadd.xlane.f32.xlu0 %v1235
        %v1237 = vpop.xlane.xlu0 %1236
        %v1238 = vpack.c.bf16 %v1234, %v1234
        %1239 = vrot.lane.b32.xlu0 %v648, 32
        %v1240 = vpop.permute.xlu0 %1239
        %v1242 = vsel %vm710, %v1238, 0
        %v1245 = vsel %vm724, %v1240, 0
        %1247 = vmatprep.subr.bf16.mxu0 0
        %1248 = vmatpush1.bf16.msra.mxu0 0
        %1249 = vmatprep.subr.bf16.mxu0 0
        %1250 = vmatpush1.bf16.msra.mxu0 0
        %1251 = vmatprep.subr.bf16.mxu0 0
        %1252 = vmatpush1.bf16.msra.mxu0 0
        %1253 = vmatprep.subr.bf16.mxu0 0
        %1254 = vmatpush1.bf16.msra.mxu0 0
        %1255 = vmatprep.subr.bf16.mxu0 0
        %1256 = vmatpush1.bf16.msra.mxu0 0
        %1257 = vmatprep.subr.bf16.mxu0 0
        %1258 = vmatpush1.bf16.msra.mxu0 0
        %1259 = vmatprep.subr.bf16.mxu0 0
        %1260 = vmatpush1.bf16.msra.mxu0 0
        %1261 = vmatprep.subr.bf16.mxu0 0
        %1262 = vmatpush1.bf16.msra.mxu0 %v1245
        %1263 = vmatprep.subr.bf16.mxu0 0
        %1264 = vmatpush2.bf16.msra.mxu0 0
        %1265 = vmatprep.subr.bf16.mxu0 0
        %1266 = vmatpush2.bf16.msra.mxu0 0
        %1267 = vmatprep.subr.bf16.mxu0 0
        %1268 = vmatpush2.bf16.msra.mxu0 0
        %1269 = vmatprep.subr.bf16.mxu0 0
        %1270 = vmatpush2.bf16.msra.mxu0 0
        %1271 = vmatprep.subr.bf16.mxu0 0
        %1272 = vmatpush2.bf16.msra.mxu0 0
        %1273 = vmatprep.subr.bf16.mxu0 0
        %1274 = vmatpush2.bf16.msra.mxu0 0
        %1275 = vmatprep.subr.bf16.mxu0 0
        %1276 = vmatpush2.bf16.msra.mxu0 0
        %1277 = vmatprep.subr.bf16.mxu0 0
        %1278 = vmatpush2.bf16.msra.mxu0 0
        %1279 = vmatprep.mubr.bf16.mxu0 0
        %1280 = vmatmul.mubr.bf16.gmra.mxu0 %v1242
        %v1281 = vpop.f32.mrf.mxu0
        %v1282 = vadd.f32 0.0, %v1281
        %v1283 = vpop.f32.mrf.mxu0
        %v1284 = vpop.f32.mrf.mxu0
        %v1285 = vpop.f32.mrf.mxu0
        %1286 = vdwg.mxu0
        %v1287 = vrcp.pop %v1237
        %v1288 = vmul.f32 %v1282, %v1287
        %v1289 = vpack.c.bf16 %v1288, %v1288
        %v1290 = vld [vmem:[#allocation2 + $0x30] sm:$0xf]
        %v1291 = vld [vmem:[#allocation2 + $0x34] sm:$0xf]
        %v1292 = vld [vmem:[#allocation2 + $0x38] sm:$0xf]
        %v1293 = vld [vmem:[#allocation2 + $0x3c] sm:$0xf]
        %v1298 = vunpack.c.l.b16 %v1290
        %v1299 = vunpack.c.l.b16 %v1291
        %v1300 = vunpack.c.l.b16 %v1292
        %v1301 = vunpack.c.l.b16 %v1293
        %v1302 = vpack.c.b16 %v1299, %v1298
        %v1303 = vpack.c.b16 %v1301, %v1300
        %v1307 = vsel %vm662, %v1289, 0
        %1309 = vmatprep.subr.bf16.mxu0 0
        %1310 = vmatpush1.bf16.msra.mxu0 0
        %1311 = vmatprep.subr.bf16.mxu0 0
        %1312 = vmatpush1.bf16.msra.mxu0 0
        %1313 = vmatprep.subr.bf16.mxu0 0
        %1314 = vmatpush1.bf16.msra.mxu0 0
        %1315 = vmatprep.subr.bf16.mxu0 0
        %1316 = vmatpush1.bf16.msra.mxu0 0
        %1317 = vmatprep.subr.bf16.mxu0 0
        %1318 = vmatpush1.bf16.msra.mxu0 0
        %1319 = vmatprep.subr.bf16.mxu0 0
        %1320 = vmatpush1.bf16.msra.mxu0 0
        %1321 = vmatprep.subr.bf16.mxu0 0
        %1322 = vmatpush1.bf16.msra.mxu0 %v1303
        %1323 = vmatprep.subr.bf16.mxu0 0
        %1324 = vmatpush1.bf16.msra.mxu0 %v1302
        %1325 = vmatprep.subr.bf16.mxu0 0
        %1326 = vmatpush2.bf16.msra.mxu0 0
        %1327 = vmatprep.subr.bf16.mxu0 0
        %1328 = vmatpush2.bf16.msra.mxu0 0
        %1329 = vmatprep.subr.bf16.mxu0 0
        %1330 = vmatpush2.bf16.msra.mxu0 0
        %1331 = vmatprep.subr.bf16.mxu0 0
        %1332 = vmatpush2.bf16.msra.mxu0 0
        %1333 = vmatprep.subr.bf16.mxu0 0
        %1334 = vmatpush2.bf16.msra.mxu0 0
        %1335 = vmatprep.subr.bf16.mxu0 0
        %1336 = vmatpush2.bf16.msra.mxu0 0
        %1337 = vmatprep.subr.bf16.mxu0 0
        %1338 = vmatpush2.bf16.msra.mxu0 0
        %1339 = vmatprep.subr.bf16.mxu0 0
        %1340 = vmatpush2.bf16.msra.mxu0 0
        %1341 = vmatprep.mubr.bf16.mxu0 0
        %1342 = vmatmul.mubr.bf16.gmra.mxu0 %v1307
        %v1343 = vpop.f32.mrf.mxu0
        %v1344 = vadd.f32 0.0, %v1343
        %v1345 = vpop.f32.mrf.mxu0
        %v1346 = vpop.f32.mrf.mxu0
        %v1347 = vpop.f32.mrf.mxu0
        %1348 = vdwg.mxu0
        %v1349 = vadd.f32 %v1177, %v1344
        %1350 = vadd.xlane.f32.xlu0 %v1349
        %v1351 = vpop.xlane.xlu0 %1350
        %v1352 = vmul.f32 %v1351, %v377
        %v1353 = vsub.f32 %v1349, %v1352
        %v1354 = vmul.f32 %v1353, %v1353
        %1355 = vadd.xlane.f32.xlu0 %v1354
        %v1356 = vpop.xlane.xlu0 %1355
        %v1357 = vmul.f32 %v1356, %v377
        %v1358 = vadd.f32 %v1357, 1e-05
        %v1359 = vrsqrt.pop %v1358
        %v1360 = vmul.f32 %v1353, %v1359
        %v1361 = vpack.c.bf16 %v1360, %v1360
        %v1362 = vld [vmem:[#allocation4] sm:$0xff]
        %v1363 = vld [vmem:[#allocation4 + $0x8] sm:$0xff]
        %v1364 = vld [vmem:[#allocation4 + $0x10] sm:$0xff]
        %v1365 = vld [vmem:[#allocation4 + $0x18] sm:$0xff]
        %v1366 = vld [vmem:[#allocation4 + $0x20] sm:$0xff]
        %v1367 = vld [vmem:[#allocation4 + $0x28] sm:$0xff]
        %v1368 = vld [vmem:[#allocation4 + $0x30] sm:$0xff]
        %v1369 = vld [vmem:[#allocation4 + $0x38] sm:$0xff]
        %v1370 = vld [vmem:[#allocation4 + $0x40] sm:$0xff]
        %v1371 = vld [vmem:[#allocation4 + $0x48] sm:$0xff]
        %v1372 = vld [vmem:[#allocation4 + $0x50] sm:$0xff]
        %v1373 = vld [vmem:[#allocation4 + $0x58] sm:$0xff]
        %v1374 = vld [vmem:[#allocation4 + $0x60] sm:$0xff]
        %v1375 = vld [vmem:[#allocation4 + $0x68] sm:$0xff]
        %v1376 = vld [vmem:[#allocation4 + $0x70] sm:$0xff]
        %v1377 = vld [vmem:[#allocation4 + $0x78] sm:$0xff]
        %v1378 = vld [vmem:[#allocation4 + $0x80] sm:$0xff]
        %v1379 = vld [vmem:[#allocation4 + $0x88] sm:$0xff]
        %v1380 = vld [vmem:[#allocation4 + $0x90] sm:$0xff]
        %v1381 = vld [vmem:[#allocation4 + $0x98] sm:$0xff]
        %v1382 = vld [vmem:[#allocation4 + $0xa0] sm:$0xff]
        %v1383 = vld [vmem:[#allocation4 + $0xa8] sm:$0xff]
        %v1384 = vld [vmem:[#allocation4 + $0xb0] sm:$0xff]
        %v1385 = vld [vmem:[#allocation4 + $0xb8] sm:$0xff]
        %v1386 = vld [vmem:[#allocation4 + $0xc0] sm:$0xff]
        %v1387 = vld [vmem:[#allocation4 + $0xc8] sm:$0xff]
        %v1388 = vld [vmem:[#allocation4 + $0xd0] sm:$0xff]
        %v1389 = vld [vmem:[#allocation4 + $0xd8] sm:$0xff]
        %v1390 = vld [vmem:[#allocation4 + $0xe0] sm:$0xff]
        %v1391 = vld [vmem:[#allocation4 + $0xe8] sm:$0xff]
        %v1392 = vld [vmem:[#allocation4 + $0xf0] sm:$0xff]
        %v1393 = vld [vmem:[#allocation4 + $0xf8] sm:$0xff]
        %v1394 = vld [vmem:[%s6] sm:$0xf]
        %v1396 = vlaneseq
        %v1397 = vshrl.u32 %v1396, 7
        %v1398 = vsub.s32 0, %v1397
        %v1399 = vrot.slane %v1394, %v1398
        %v1400 = vlaneseq
        %v1401 = vshrl.u32 %v1400, 7
        %v1402 = vsub.s32 1, %v1401
        %v1403 = vrot.slane %v1394, %v1402
        %v1404 = vlaneseq
        %v1405 = vshrl.u32 %v1404, 7
        %v1406 = vsub.s32 2, %v1405
        %v1407 = vrot.slane %v1394, %v1406
        %v1408 = vlaneseq
        %v1409 = vshrl.u32 %v1408, 7
        %v1410 = vsub.s32 3, %v1409
        %v1411 = vrot.slane %v1394, %v1410
        %v1448 = vunpack.c.l.b16 %v1362
        %v1449 = vunpack.c.h.b16 %v1362
        %v1450 = vunpack.c.l.b16 %v1363
        %v1451 = vunpack.c.h.b16 %v1363
        %v1452 = vunpack.c.l.b16 %v1364
        %v1453 = vunpack.c.h.b16 %v1364
        %v1454 = vunpack.c.l.b16 %v1365
        %v1455 = vunpack.c.h.b16 %v1365
        %v1456 = vunpack.c.l.b16 %v1366
        %v1457 = vunpack.c.h.b16 %v1366
        %v1458 = vunpack.c.l.b16 %v1367
        %v1459 = vunpack.c.h.b16 %v1367
        %v1460 = vunpack.c.l.b16 %v1368
        %v1461 = vunpack.c.h.b16 %v1368
        %v1462 = vunpack.c.l.b16 %v1369
        %v1463 = vunpack.c.h.b16 %v1369
        %v1464 = vunpack.c.l.b16 %v1370
        %v1465 = vunpack.c.h.b16 %v1370
        %v1466 = vunpack.c.l.b16 %v1371
        %v1467 = vunpack.c.h.b16 %v1371
        %v1468 = vunpack.c.l.b16 %v1372
        %v1469 = vunpack.c.h.b16 %v1372
        %v1470 = vunpack.c.l.b16 %v1373
        %v1471 = vunpack.c.h.b16 %v1373
        %v1472 = vunpack.c.l.b16 %v1374
        %v1473 = vunpack.c.h.b16 %v1374
        %v1474 = vunpack.c.l.b16 %v1375
        %v1475 = vunpack.c.h.b16 %v1375
        %v1476 = vunpack.c.l.b16 %v1376
        %v1477 = vunpack.c.h.b16 %v1376
        %v1478 = vunpack.c.l.b16 %v1377
        %v1479 = vunpack.c.h.b16 %v1377
        %v1480 = vunpack.c.l.b16 %v1378
        %v1481 = vunpack.c.h.b16 %v1378
        %v1482 = vunpack.c.l.b16 %v1379
        %v1483 = vunpack.c.h.b16 %v1379
        %v1484 = vunpack.c.l.b16 %v1380
        %v1485 = vunpack.c.h.b16 %v1380
        %v1486 = vunpack.c.l.b16 %v1381
        %v1487 = vunpack.c.h.b16 %v1381
        %v1488 = vunpack.c.l.b16 %v1382
        %v1489 = vunpack.c.h.b16 %v1382
        %v1490 = vunpack.c.l.b16 %v1383
        %v1491 = vunpack.c.h.b16 %v1383
        %v1492 = vunpack.c.l.b16 %v1384
        %v1493 = vunpack.c.h.b16 %v1384
        %v1494 = vunpack.c.l.b16 %v1385
        %v1495 = vunpack.c.h.b16 %v1385
        %v1496 = vunpack.c.l.b16 %v1386
        %v1497 = vunpack.c.h.b16 %v1386
        %v1498 = vunpack.c.l.b16 %v1387
        %v1499 = vunpack.c.h.b16 %v1387
        %v1500 = vunpack.c.l.b16 %v1388
        %v1501 = vunpack.c.h.b16 %v1388
        %v1502 = vunpack.c.l.b16 %v1389
        %v1503 = vunpack.c.h.b16 %v1389
        %v1504 = vunpack.c.l.b16 %v1390
        %v1505 = vunpack.c.h.b16 %v1390
        %v1506 = vunpack.c.l.b16 %v1391
        %v1507 = vunpack.c.h.b16 %v1391
        %v1508 = vunpack.c.l.b16 %v1392
        %v1509 = vunpack.c.h.b16 %v1392
        %v1510 = vunpack.c.l.b16 %v1393
        %v1511 = vunpack.c.h.b16 %v1393
        %v1512 = vpack.c.b16 %v1452, %v1448
        %v1513 = vpack.c.b16 %v1453, %v1449
        %v1514 = vpack.c.b16 %v1454, %v1450
        %v1515 = vpack.c.b16 %v1455, %v1451
        %v1516 = vpack.c.b16 %v1460, %v1456
        %v1517 = vpack.c.b16 %v1461, %v1457
        %v1518 = vpack.c.b16 %v1462, %v1458
        %v1519 = vpack.c.b16 %v1463, %v1459
        %v1520 = vpack.c.b16 %v1468, %v1464
        %v1521 = vpack.c.b16 %v1469, %v1465
        %v1522 = vpack.c.b16 %v1470, %v1466
        %v1523 = vpack.c.b16 %v1471, %v1467
        %v1524 = vpack.c.b16 %v1476, %v1472
        %v1525 = vpack.c.b16 %v1477, %v1473
        %v1526 = vpack.c.b16 %v1478, %v1474
        %v1527 = vpack.c.b16 %v1479, %v1475
        %v1528 = vpack.c.b16 %v1484, %v1480
        %v1529 = vpack.c.b16 %v1485, %v1481
        %v1530 = vpack.c.b16 %v1486, %v1482
        %v1531 = vpack.c.b16 %v1487, %v1483
        %v1532 = vpack.c.b16 %v1492, %v1488
        %v1533 = vpack.c.b16 %v1493, %v1489
        %v1534 = vpack.c.b16 %v1494, %v1490
        %v1535 = vpack.c.b16 %v1495, %v1491
        %v1536 = vpack.c.b16 %v1500, %v1496
        %v1537 = vpack.c.b16 %v1501, %v1497
        %v1538 = vpack.c.b16 %v1502, %v1498
        %v1539 = vpack.c.b16 %v1503, %v1499
        %v1540 = vpack.c.b16 %v1508, %v1504
        %v1541 = vpack.c.b16 %v1509, %v1505
        %v1542 = vpack.c.b16 %v1510, %v1506
        %v1543 = vpack.c.b16 %v1511, %v1507
        %1576 = vmatprep.subr.bf16.mxu0 %v1541
        %1577 = vmatpush1.bf16.msra.mxu0 %v1540
        %1578 = vmatprep.subr.bf16.mxu0 %v1537
        %1579 = vmatpush1.bf16.msra.mxu0 %v1536
        %1580 = vmatprep.subr.bf16.mxu0 %v1533
        %1581 = vmatpush1.bf16.msra.mxu0 %v1532
        %1582 = vmatprep.subr.bf16.mxu0 %v1529
        %1583 = vmatpush1.bf16.msra.mxu0 %v1528
        %1584 = vmatprep.subr.bf16.mxu0 %v1525
        %1585 = vmatpush1.bf16.msra.mxu0 %v1524
        %1586 = vmatprep.subr.bf16.mxu0 %v1521
        %1587 = vmatpush1.bf16.msra.mxu0 %v1520
        %1588 = vmatprep.subr.bf16.mxu0 %v1517
        %1589 = vmatpush1.bf16.msra.mxu0 %v1516
        %1590 = vmatprep.subr.bf16.mxu0 %v1513
        %1591 = vmatpush1.bf16.msra.mxu0 %v1512
        %1592 = vmatprep.subr.bf16.mxu0 0
        %1593 = vmatpush2.bf16.msra.mxu0 0
        %1594 = vmatprep.subr.bf16.mxu0 0
        %1595 = vmatpush2.bf16.msra.mxu0 0
        %1596 = vmatprep.subr.bf16.mxu0 0
        %1597 = vmatpush2.bf16.msra.mxu0 0
        %1598 = vmatprep.subr.bf16.mxu0 0
        %1599 = vmatpush2.bf16.msra.mxu0 0
        %1600 = vmatprep.subr.bf16.mxu0 0
        %1601 = vmatpush2.bf16.msra.mxu0 0
        %1602 = vmatprep.subr.bf16.mxu0 0
        %1603 = vmatpush2.bf16.msra.mxu0 0
        %1604 = vmatprep.subr.bf16.mxu0 0
        %1605 = vmatpush2.bf16.msra.mxu0 0
        %1606 = vmatprep.subr.bf16.mxu0 0
        %1607 = vmatpush2.bf16.msra.mxu0 0
        %1608 = vmatprep.mubr.bf16.mxu0 0
        %1609 = vmatmul.mubr.bf16.gmra.mxu0 %v1361
        %v1610 = vpop.f32.mrf.mxu0
        %v1611 = vadd.f32 %v1399, %v1610
        %v1612 = vpop.f32.mrf.mxu0
        %v1613 = vadd.f32 %v1403, %v1612
        %v1614 = vpop.f32.mrf.mxu0
        %v1615 = vpop.f32.mrf.mxu0
        %1616 = vdwg.mxu0
        %1617 = vmatprep.subr.bf16.mxu0 %v1543
        %1618 = vmatpush1.bf16.msra.mxu0 %v1542
        %1619 = vmatprep.subr.bf16.mxu0 %v1539
        %1620 = vmatpush1.bf16.msra.mxu0 %v1538
        %1621 = vmatprep.subr.bf16.mxu0 %v1535
        %1622 = vmatpush1.bf16.msra.mxu0 %v1534
        %1623 = vmatprep.subr.bf16.mxu0 %v1531
        %1624 = vmatpush1.bf16.msra.mxu0 %v1530
        %1625 = vmatprep.subr.bf16.mxu0 %v1527
        %1626 = vmatpush1.bf16.msra.mxu0 %v1526
        %1627 = vmatprep.subr.bf16.mxu0 %v1523
        %1628 = vmatpush1.bf16.msra.mxu0 %v1522
        %1629 = vmatprep.subr.bf16.mxu0 %v1519
        %1630 = vmatpush1.bf16.msra.mxu0 %v1518
        %1631 = vmatprep.subr.bf16.mxu0 %v1515
        %1632 = vmatpush1.bf16.msra.mxu0 %v1514
        %1633 = vmatprep.subr.bf16.mxu0 0
        %1634 = vmatpush2.bf16.msra.mxu0 0
        %1635 = vmatprep.subr.bf16.mxu0 0
        %1636 = vmatpush2.bf16.msra.mxu0 0
        %1637 = vmatprep.subr.bf16.mxu0 0
        %1638 = vmatpush2.bf16.msra.mxu0 0
        %1639 = vmatprep.subr.bf16.mxu0 0
        %1640 = vmatpush2.bf16.msra.mxu0 0
        %1641 = vmatprep.subr.bf16.mxu0 0
        %1642 = vmatpush2.bf16.msra.mxu0 0
        %1643 = vmatprep.subr.bf16.mxu0 0
        %1644 = vmatpush2.bf16.msra.mxu0 0
        %1645 = vmatprep.subr.bf16.mxu0 0
        %1646 = vmatpush2.bf16.msra.mxu0 0
        %1647 = vmatprep.subr.bf16.mxu0 0
        %1648 = vmatpush2.bf16.msra.mxu0 0
        %1649 = vmatprep.mubr.bf16.mxu0 0
        %1650 = vmatmul.mubr.bf16.gmra.mxu0 %v1361
        %v1651 = vpop.f32.mrf.mxu0
        %v1652 = vadd.f32 %v1407, %v1651
        %v1653 = vpop.f32.mrf.mxu0
        %v1654 = vadd.f32 %v1411, %v1653
        %v1655 = vpop.f32.mrf.mxu0
        %v1656 = vpop.f32.mrf.mxu0
        %1657 = vdwg.mxu0
        %v1658 = vmul.f32 %v1611, 1.702
        %v1659 = vmul.f32 %v1613, 1.702
        %v1660 = vmul.f32 %v1652, 1.702
        %v1661 = vmul.f32 %v1654, 1.702
        %v1662 = vxor.u32 %v1658, 2147483648
        %v1663 = vxor.u32 %v1659, 2147483648
        %v1664 = vxor.u32 %v1660, 2147483648
        %v1665 = vxor.u32 %v1661, 2147483648
        %v1666 = vmul.f32 %v1662, 1.442695
        %v1667 = vpow.pop %v1666
        %v1668 = vmul.f32 %v1663, 1.442695
        %v1669 = vpow.pop %v1668
        %v1670 = vmul.f32 %v1664, 1.442695
        %v1671 = vpow.pop %v1670
        %v1672 = vmul.f32 %v1665, 1.442695
        %v1673 = vpow.pop %v1672
        %v1674 = vadd.f32 %v1667, 1.0
        %v1675 = vadd.f32 %v1669, 1.0
        %v1676 = vadd.f32 %v1671, 1.0
        %v1677 = vadd.f32 %v1673, 1.0
        %v1678 = vrcp.pop %v1674
        %v1679 = vmul.f32 1.0, %v1678
        %v1680 = vrcp.pop %v1675
        %v1681 = vmul.f32 1.0, %v1680
        %v1682 = vrcp.pop %v1676
        %v1683 = vmul.f32 1.0, %v1682
        %v1684 = vrcp.pop %v1677
        %v1685 = vmul.f32 1.0, %v1684
        %v1686 = vmul.f32 %v1611, %v1679
        %v1687 = vmul.f32 %v1613, %v1681
        %v1688 = vmul.f32 %v1652, %v1683
        %v1689 = vmul.f32 %v1654, %v1685
        %v1690 = vpack.c.bf16 %v1686, %v1686
        %v1691 = vpack.c.bf16 %v1687, %v1687
        %v1692 = vpack.c.bf16 %v1688, %v1688
        %v1693 = vpack.c.bf16 %v1689, %v1689
        %v1694 = vld [vmem:[#allocation6] sm:$0xf]
        %v1695 = vld [vmem:[#allocation6 + $0x4] sm:$0xf]
        %v1696 = vld [vmem:[#allocation6 + $0x8] sm:$0xf]
        %v1697 = vld [vmem:[#allocation6 + $0xc] sm:$0xf]
        %v1698 = vld [vmem:[#allocation6 + $0x10] sm:$0xf]
        %v1699 = vld [vmem:[#allocation6 + $0x14] sm:$0xf]
        %v1700 = vld [vmem:[#allocation6 + $0x18] sm:$0xf]
        %v1701 = vld [vmem:[#allocation6 + $0x1c] sm:$0xf]
        %v1702 = vld [vmem:[#allocation6 + $0x20] sm:$0xf]
        %v1703 = vld [vmem:[#allocation6 + $0x24] sm:$0xf]
        %v1704 = vld [vmem:[#allocation6 + $0x28] sm:$0xf]
        %v1705 = vld [vmem:[#allocation6 + $0x2c] sm:$0xf]
        %v1706 = vld [vmem:[#allocation6 + $0x30] sm:$0xf]
        %v1707 = vld [vmem:[#allocation6 + $0x34] sm:$0xf]
        %v1708 = vld [vmem:[#allocation6 + $0x38] sm:$0xf]
        %v1709 = vld [vmem:[#allocation6 + $0x3c] sm:$0xf]
        %v1710 = vld [vmem:[#allocation6 + $0x40] sm:$0xf]
        %v1711 = vld [vmem:[#allocation6 + $0x44] sm:$0xf]
        %v1712 = vld [vmem:[#allocation6 + $0x48] sm:$0xf]
        %v1713 = vld [vmem:[#allocation6 + $0x4c] sm:$0xf]
        %v1714 = vld [vmem:[#allocation6 + $0x50] sm:$0xf]
        %v1715 = vld [vmem:[#allocation6 + $0x54] sm:$0xf]
        %v1716 = vld [vmem:[#allocation6 + $0x58] sm:$0xf]
        %v1717 = vld [vmem:[#allocation6 + $0x5c] sm:$0xf]
        %v1718 = vld [vmem:[#allocation6 + $0x60] sm:$0xf]
        %v1719 = vld [vmem:[#allocation6 + $0x64] sm:$0xf]
        %v1720 = vld [vmem:[#allocation6 + $0x68] sm:$0xf]
        %v1721 = vld [vmem:[#allocation6 + $0x6c] sm:$0xf]
        %v1722 = vld [vmem:[#allocation6 + $0x70] sm:$0xf]
        %v1723 = vld [vmem:[#allocation6 + $0x74] sm:$0xf]
        %v1724 = vld [vmem:[#allocation6 + $0x78] sm:$0xf]
        %v1725 = vld [vmem:[#allocation6 + $0x7c] sm:$0xf]
        %v1726 = vld [vmem:[#allocation6 + $0x80] sm:$0xf]
        %v1727 = vld [vmem:[#allocation6 + $0x84] sm:$0xf]
        %v1728 = vld [vmem:[#allocation6 + $0x88] sm:$0xf]
        %v1729 = vld [vmem:[#allocation6 + $0x8c] sm:$0xf]
        %v1730 = vld [vmem:[#allocation6 + $0x90] sm:$0xf]
        %v1731 = vld [vmem:[#allocation6 + $0x94] sm:$0xf]
        %v1732 = vld [vmem:[#allocation6 + $0x98] sm:$0xf]
        %v1733 = vld [vmem:[#allocation6 + $0x9c] sm:$0xf]
        %v1734 = vld [vmem:[#allocation6 + $0xa0] sm:$0xf]
        %v1735 = vld [vmem:[#allocation6 + $0xa4] sm:$0xf]
        %v1736 = vld [vmem:[#allocation6 + $0xa8] sm:$0xf]
        %v1737 = vld [vmem:[#allocation6 + $0xac] sm:$0xf]
        %v1738 = vld [vmem:[#allocation6 + $0xb0] sm:$0xf]
        %v1739 = vld [vmem:[#allocation6 + $0xb4] sm:$0xf]
        %v1740 = vld [vmem:[#allocation6 + $0xb8] sm:$0xf]
        %v1741 = vld [vmem:[#allocation6 + $0xbc] sm:$0xf]
        %v1742 = vld [vmem:[#allocation6 + $0xc0] sm:$0xf]
        %v1743 = vld [vmem:[#allocation6 + $0xc4] sm:$0xf]
        %v1744 = vld [vmem:[#allocation6 + $0xc8] sm:$0xf]
        %v1745 = vld [vmem:[#allocation6 + $0xcc] sm:$0xf]
        %v1746 = vld [vmem:[#allocation6 + $0xd0] sm:$0xf]
        %v1747 = vld [vmem:[#allocation6 + $0xd4] sm:$0xf]
        %v1748 = vld [vmem:[#allocation6 + $0xd8] sm:$0xf]
        %v1749 = vld [vmem:[#allocation6 + $0xdc] sm:$0xf]
        %v1750 = vld [vmem:[#allocation6 + $0xe0] sm:$0xf]
        %v1751 = vld [vmem:[#allocation6 + $0xe4] sm:$0xf]
        %v1752 = vld [vmem:[#allocation6 + $0xe8] sm:$0xf]
        %v1753 = vld [vmem:[#allocation6 + $0xec] sm:$0xf]
        %v1754 = vld [vmem:[#allocation6 + $0xf0] sm:$0xf]
        %v1755 = vld [vmem:[#allocation6 + $0xf4] sm:$0xf]
        %v1756 = vld [vmem:[#allocation6 + $0xf8] sm:$0xf]
        %v1757 = vld [vmem:[#allocation6 + $0xfc] sm:$0xf]
        %v1822 = vunpack.c.l.b16 %v1694
        %v1823 = vunpack.c.l.b16 %v1695
        %v1824 = vunpack.c.l.b16 %v1696
        %v1825 = vunpack.c.l.b16 %v1697
        %v1826 = vunpack.c.l.b16 %v1698
        %v1827 = vunpack.c.l.b16 %v1699
        %v1828 = vunpack.c.l.b16 %v1700
        %v1829 = vunpack.c.l.b16 %v1701
        %v1830 = vunpack.c.l.b16 %v1702
        %v1831 = vunpack.c.l.b16 %v1703
        %v1832 = vunpack.c.l.b16 %v1704
        %v1833 = vunpack.c.l.b16 %v1705
        %v1834 = vunpack.c.l.b16 %v1706
        %v1835 = vunpack.c.l.b16 %v1707
        %v1836 = vunpack.c.l.b16 %v1708
        %v1837 = vunpack.c.l.b16 %v1709
        %v1838 = vunpack.c.l.b16 %v1710
        %v1839 = vunpack.c.l.b16 %v1711
        %v1840 = vunpack.c.l.b16 %v1712
        %v1841 = vunpack.c.l.b16 %v1713
        %v1842 = vunpack.c.l.b16 %v1714
        %v1843 = vunpack.c.l.b16 %v1715
        %v1844 = vunpack.c.l.b16 %v1716
        %v1845 = vunpack.c.l.b16 %v1717
        %v1846 = vunpack.c.l.b16 %v1718
        %v1847 = vunpack.c.l.b16 %v1719
        %v1848 = vunpack.c.l.b16 %v1720
        %v1849 = vunpack.c.l.b16 %v1721
        %v1850 = vunpack.c.l.b16 %v1722
        %v1851 = vunpack.c.l.b16 %v1723
        %v1852 = vunpack.c.l.b16 %v1724
        %v1853 = vunpack.c.l.b16 %v1725
        %v1854 = vunpack.c.l.b16 %v1726
        %v1855 = vunpack.c.l.b16 %v1727
        %v1856 = vunpack.c.l.b16 %v1728
        %v1857 = vunpack.c.l.b16 %v1729
        %v1858 = vunpack.c.l.b16 %v1730
        %v1859 = vunpack.c.l.b16 %v1731
        %v1860 = vunpack.c.l.b16 %v1732
        %v1861 = vunpack.c.l.b16 %v1733
        %v1862 = vunpack.c.l.b16 %v1734
        %v1863 = vunpack.c.l.b16 %v1735
        %v1864 = vunpack.c.l.b16 %v1736
        %v1865 = vunpack.c.l.b16 %v1737
        %v1866 = vunpack.c.l.b16 %v1738
        %v1867 = vunpack.c.l.b16 %v1739
        %v1868 = vunpack.c.l.b16 %v1740
        %v1869 = vunpack.c.l.b16 %v1741
        %v1870 = vunpack.c.l.b16 %v1742
        %v1871 = vunpack.c.l.b16 %v1743
        %v1872 = vunpack.c.l.b16 %v1744
        %v1873 = vunpack.c.l.b16 %v1745
        %v1874 = vunpack.c.l.b16 %v1746
        %v1875 = vunpack.c.l.b16 %v1747
        %v1876 = vunpack.c.l.b16 %v1748
        %v1877 = vunpack.c.l.b16 %v1749
        %v1878 = vunpack.c.l.b16 %v1750
        %v1879 = vunpack.c.l.b16 %v1751
        %v1880 = vunpack.c.l.b16 %v1752
        %v1881 = vunpack.c.l.b16 %v1753
        %v1882 = vunpack.c.l.b16 %v1754
        %v1883 = vunpack.c.l.b16 %v1755
        %v1884 = vunpack.c.l.b16 %v1756
        %v1885 = vunpack.c.l.b16 %v1757
        %v1886 = vpack.c.b16 %v1823, %v1822
        %v1887 = vpack.c.b16 %v1825, %v1824
        %v1888 = vpack.c.b16 %v1827, %v1826
        %v1889 = vpack.c.b16 %v1829, %v1828
        %v1890 = vpack.c.b16 %v1831, %v1830
        %v1891 = vpack.c.b16 %v1833, %v1832
        %v1892 = vpack.c.b16 %v1835, %v1834
        %v1893 = vpack.c.b16 %v1837, %v1836
        %v1894 = vpack.c.b16 %v1839, %v1838
        %v1895 = vpack.c.b16 %v1841, %v1840
        %v1896 = vpack.c.b16 %v1843, %v1842
        %v1897 = vpack.c.b16 %v1845, %v1844
        %v1898 = vpack.c.b16 %v1847, %v1846
        %v1899 = vpack.c.b16 %v1849, %v1848
        %v1900 = vpack.c.b16 %v1851, %v1850
        %v1901 = vpack.c.b16 %v1853, %v1852
        %v1902 = vpack.c.b16 %v1855, %v1854
        %v1903 = vpack.c.b16 %v1857, %v1856
        %v1904 = vpack.c.b16 %v1859, %v1858
        %v1905 = vpack.c.b16 %v1861, %v1860
        %v1906 = vpack.c.b16 %v1863, %v1862
        %v1907 = vpack.c.b16 %v1865, %v1864
        %v1908 = vpack.c.b16 %v1867, %v1866
        %v1909 = vpack.c.b16 %v1869, %v1868
        %v1910 = vpack.c.b16 %v1871, %v1870
        %v1911 = vpack.c.b16 %v1873, %v1872
        %v1912 = vpack.c.b16 %v1875, %v1874
        %v1913 = vpack.c.b16 %v1877, %v1876
        %v1914 = vpack.c.b16 %v1879, %v1878
        %v1915 = vpack.c.b16 %v1881, %v1880
        %v1916 = vpack.c.b16 %v1883, %v1882
        %v1917 = vpack.c.b16 %v1885, %v1884
        %1950 = vmatprep.subr.bf16.mxu0 0
        %1951 = vmatpush1.bf16.msra.mxu0 %v1893
        %1952 = vmatprep.subr.bf16.mxu0 0
        %1953 = vmatpush1.bf16.msra.mxu0 %v1892
        %1954 = vmatprep.subr.bf16.mxu0 0
        %1955 = vmatpush1.bf16.msra.mxu0 %v1891
        %1956 = vmatprep.subr.bf16.mxu0 0
        %1957 = vmatpush1.bf16.msra.mxu0 %v1890
        %1958 = vmatprep.subr.bf16.mxu0 0
        %1959 = vmatpush1.bf16.msra.mxu0 %v1889
        %1960 = vmatprep.subr.bf16.mxu0 0
        %1961 = vmatpush1.bf16.msra.mxu0 %v1888
        %1962 = vmatprep.subr.bf16.mxu0 0
        %1963 = vmatpush1.bf16.msra.mxu0 %v1887
        %1964 = vmatprep.subr.bf16.mxu0 0
        %1965 = vmatpush1.bf16.msra.mxu0 %v1886
        %1966 = vmatprep.subr.bf16.mxu0 0
        %1967 = vmatpush2.bf16.msra.mxu0 %v1901
        %1968 = vmatprep.subr.bf16.mxu0 0
        %1969 = vmatpush2.bf16.msra.mxu0 %v1900
        %1970 = vmatprep.subr.bf16.mxu0 0
        %1971 = vmatpush2.bf16.msra.mxu0 %v1899
        %1972 = vmatprep.subr.bf16.mxu0 0
        %1973 = vmatpush2.bf16.msra.mxu0 %v1898
        %1974 = vmatprep.subr.bf16.mxu0 0
        %1975 = vmatpush2.bf16.msra.mxu0 %v1897
        %1976 = vmatprep.subr.bf16.mxu0 0
        %1977 = vmatpush2.bf16.msra.mxu0 %v1896
        %1978 = vmatprep.subr.bf16.mxu0 0
        %1979 = vmatpush2.bf16.msra.mxu0 %v1895
        %1980 = vmatprep.subr.bf16.mxu0 0
        %1981 = vmatpush2.bf16.msra.mxu0 %v1894
        %1982 = vmatprep.mubr.bf16.mxu0 %v1691
        %1983 = vmatmul.mubr.bf16.gmra.mxu0 %v1690
        %v1984 = vpop.f32.mrf.mxu0
        %v1985 = vadd.f32 0.0, %v1984
        %v1986 = vpop.f32.mrf.mxu0
        %v1987 = vpop.f32.mrf.mxu0
        %v1988 = vpop.f32.mrf.mxu0
        %1989 = vdwg.mxu0
        %1990 = vmatprep.subr.bf16.mxu0 0
        %1991 = vmatpush1.bf16.msra.mxu0 %v1909
        %1992 = vmatprep.subr.bf16.mxu0 0
        %1993 = vmatpush1.bf16.msra.mxu0 %v1908
        %1994 = vmatprep.subr.bf16.mxu0 0
        %1995 = vmatpush1.bf16.msra.mxu0 %v1907
        %1996 = vmatprep.subr.bf16.mxu0 0
        %1997 = vmatpush1.bf16.msra.mxu0 %v1906
        %1998 = vmatprep.subr.bf16.mxu0 0
        %1999 = vmatpush1.bf16.msra.mxu0 %v1905
        %2000 = vmatprep.subr.bf16.mxu0 0
        %2001 = vmatpush1.bf16.msra.mxu0 %v1904
        %2002 = vmatprep.subr.bf16.mxu0 0
        %2003 = vmatpush1.bf16.msra.mxu0 %v1903
        %2004 = vmatprep.subr.bf16.mxu0 0
        %2005 = vmatpush1.bf16.msra.mxu0 %v1902
        %2006 = vmatprep.subr.bf16.mxu0 0
        %2007 = vmatpush2.bf16.msra.mxu0 %v1917
        %2008 = vmatprep.subr.bf16.mxu0 0
        %2009 = vmatpush2.bf16.msra.mxu0 %v1916
        %2010 = vmatprep.subr.bf16.mxu0 0
        %2011 = vmatpush2.bf16.msra.mxu0 %v1915
        %2012 = vmatprep.subr.bf16.mxu0 0
        %2013 = vmatpush2.bf16.msra.mxu0 %v1914
        %2014 = vmatprep.subr.bf16.mxu0 0
        %2015 = vmatpush2.bf16.msra.mxu0 %v1913
        %2016 = vmatprep.subr.bf16.mxu0 0
        %2017 = vmatpush2.bf16.msra.mxu0 %v1912
        %2018 = vmatprep.subr.bf16.mxu0 0
        %2019 = vmatpush2.bf16.msra.mxu0 %v1911
        %2020 = vmatprep.subr.bf16.mxu0 0
        %2021 = vmatpush2.bf16.msra.mxu0 %v1910
        %2022 = vmatprep.mubr.bf16.mxu0 %v1693
        %2023 = vmatmul.mubr.bf16.gmra.mxu0 %v1692
        %v2024 = vpop.f32.mrf.mxu0
        %v2025 = vadd.f32 %v1985, %v2024
        %v2026 = vpop.f32.mrf.mxu0
        %v2027 = vpop.f32.mrf.mxu0
        %v2028 = vpop.f32.mrf.mxu0
        %2029 = vdwg.mxu0
        %v2030 = vadd.f32 %v1349, %v2025
        %v2031 = vld [vmem:[%s8] sm:$0x1]
        %v2033 = vlaneseq
        %v2034 = vshrl.u32 %v2033, 7
        %v2035 = vsub.s32 0, %v2034
        %v2036 = vrot.slane %v2031, %v2035
        %v2038 = vadd.f32 %v2030, %v2036
        %v2039 = vpack.c.bf16 %v2038, %v2038
        %2040 = vst [vmem:[%s371] sm:$0xf] %v2039
        %p2041 = scmp.lt.s32.totalorder %s22, 1
        %s2042 = scalar_select %p2041, %s22, 1
        %s2043 = smul.addr %s2042, 4
        %s2044 = scalar_lea.vmem %s9, %s2043
        // Predicated region
        $region69: #{clip_text_forward.4} parent=55 // pred_check
          %p2045 = pneg %p234
        $region70: #{clip_text_forward.4} parent=55 // pred_check_branch
          %2047 = sbr.rel (%p2045) target = $region72
        $region71: #{clip_text_forward.4} parent=55 // pred_region
          _
        $region72: #{clip_text_forward.4} parent=55 // pred_fallthru
          _
      $region56: #{clip_text_forward.4} parent=5 // pred_fallthru
        _
      %p2048 = scmp.le.s32.totalorder 2, %s17
      // Predicated region
      $region73: #{clip_text_forward.4} parent=5 // pred_check
        %p2049 = pneg %p2048
      $region74: #{clip_text_forward.4} parent=5 // pred_check_branch
        %2051 = sbr.rel (%p2049) target = $region76
      $region75: #{clip_text_forward.4} parent=5 // pred_region
        %s2052 = ssub.s32 %s17, 2
        // Predicated region
        $region77: #{clip_text_forward.4} parent=75 // pred_check
          %p2053 = pneg %p240
        $region78: #{clip_text_forward.4} parent=75 // pred_check_branch
          %2055 = sbr.rel (%p2053) target = $region80
        $region79: #{clip_text_forward.4} parent=75 // pred_region
          %p2056 = scmp.lt.s32.totalorder %s23, 1
          %s2057 = scalar_select %p2056, %s23, 1
          %s2058 = smul.addr %s2057, 4
          %s2059 = scalar_lea.vmem %s9, %s2058
        $region80: #{clip_text_forward.4} parent=75 // pred_fallthru
          _
      $region76: #{clip_text_forward.4} parent=5 // pred_fallthru
        _
    $region6: #{clip_text_forward.4} parent=1 // loop_footer
      %s21 = sadd.s32 1, %s17
    $region7: #{clip_text_forward.4} parent=1 // loop_footer_branch
      %16 = sbr.rel target = $region3
    $region8: #{clip_text_forward.4} parent=1 // loop_exit
      _
    %2060 = vsyncpa [#allocation3], 1
    %s2061 = scalar_lea.sflag [#allocation3], 1
    %2062 = vsyncpa %s2061, 1
    %2063 = vsyncpa [#allocation5], 1

</llo_original>
